<compile_context>
chip_gen: v7x
topology: tpu7x:2x2x1
jax: 0.10.0
libtpu: 0.0.40
codegen_flags: <defaults>
</compile_context>

<pallas_src>
import functools
import warnings

import jax
import jax.numpy as jnp
from jax.experimental import pallas as pl
from jax.experimental.pallas import tpu as pltpu


_SQRT_2_OVER_PI = 0.7978845608028654


def _gelu_tanh(x):
    # tanh-approximate GELU (EUP-friendly); same formula used in the reference.
    return 0.5 * x * (1.0 + jnp.tanh(_SQRT_2_OVER_PI * (x + 0.044715 * x * x * x)))


def _ffn_kernel(noise_ref, rgb_ref,
                w1n_ref, b1n_ref, w2n_ref, b2n_ref,
                w1r_ref, b1r_ref, w2r_ref, b2r_ref,
                out_n_ref, out_r_ref, *, compute_dtype, elementwise_dtype):
    """Fused Linear -> GELU -> Linear for both streams on one row tile."""

    def mlp(x_ref, w1_ref, b1_ref, w2_ref, b2_ref, out_ref):
        x = x_ref[...]                                           # (tm, D)
        # First matmul: low-precision operands, f32 accumulation on the MXU.
        h = jnp.dot(x.astype(compute_dtype), w1_ref[...],
                    preferred_element_type=jnp.float32)          # (tm, H) f32
        # Bias + GELU in elementwise_dtype: bf16 on v6e/v7x (packed VALU/EUP,
        # halves the (tm,H) transient), f32 on v5e (no bf16 VPU/EUP there).
        h = h.astype(elementwise_dtype) + b1_ref[...]
        g = _gelu_tanh(h)
        y = jnp.dot(g.astype(compute_dtype), w2_ref[...],
                    preferred_element_type=jnp.float32)          # (tm, D) f32
        y = y + b2_ref[...]                                      # (1, D) f32
        out_ref[...] = y.astype(out_ref.dtype)

    mlp(noise_ref, w1n_ref, b1n_ref, w2n_ref, b2n_ref, out_n_ref)
    mlp(rgb_ref, w1r_ref, b1r_ref, w2r_ref, b2r_ref, out_r_ref)


def _device_kind():
    try:
        return jax.devices()[0].device_kind.lower()
    except Exception:
        return ""


def _vmem_capacity_bytes():
    try:
        return int(pltpu.get_tpu_info().vmem_capacity_bytes)
    except Exception:
        return 64 << 20  # conservative default = smallest per-core VMEM (v7x)


def _default_elementwise_dtype():
    kind = _device_kind()
    # v5e (and older) have no bf16 VPU/EUP -> keep elementwise math in f32.
    if any(tag in kind for tag in ("v2", "v3", "v4", "v5")):
        return jnp.float32
    return jnp.bfloat16


def _default_min_grid_steps():
    # v7x has 2 TensorCores/chip: keep >= 2x that many grid steps so the
    # "parallel" row axis actually shards.  Single-TC chips: no constraint.
    return 4 if "v7" in _device_kind() else 1


def _pick_tm(M, tm_target, min_grid_steps):
    tm = max(8, (int(tm_target) // 8) * 8)
    if min_grid_steps > 1:
        cap = max(8, pl.cdiv(pl.cdiv(M, min_grid_steps), 8) * 8)
        tm = min(tm, cap)
    if tm >= M:
        return M          # single full-extent block (always a legal block dim)
    return tm


def _vmem_limit_bytes(*, tm, D, H, act_bytes, out_bytes, w_bytes, ew_bytes,
                      nbuf_weights, capacity):
    act_io = 2 * 2 * tm * D * (act_bytes + out_bytes)   # 2 streams x 2 buffers
    weights = 2 * 2 * D * H * w_bytes * nbuf_weights    # 2 streams x (W1+W2)
    biases = 2 * (H + D) * 4 * 2
    hidden = 2 * tm * H * (4 + ew_bytes)                # f32 dot result + gelu
    est = act_io + weights + biases + hidden + (4 << 20)
    hi = int(0.8 * capacity)                            # generation-aware cap
    return int(min(max(int(1.25 * est), 16 << 20), hi))


def feedforward_forward(noise, rgb, params, *, tm=512,
                        compute_dtype=jnp.bfloat16,
                        elementwise_dtype=None,
                        single_buffer_weights=True,
                        min_grid_steps=None):
    """noise, rgb: (B, N, D).  params: w1_n (D,H), b1_n (H,), w2_n (H,D),
    b2_n (D,) and the *_r counterparts.  Output dtype == input dtype."""
    B, N, D = noise.shape
    assert rgb.shape == (B, N, D)
    H = params["w1_n"].shape[1]
    assert D % 128 == 0 and H % 128 == 0, (
        "pad dim/hidden_dim to multiples of 128 for lane-dense MXU tiles")

    if elementwise_dtype is None:
        elementwise_dtype = _default_elementwise_dtype()
    if min_grid_steps is None:
        min_grid_steps = _default_min_grid_steps()

    M = B * N
    tm = _pick_tm(M, tm, min_grid_steps)
    grid = (pl.cdiv(M, tm),)
    # No padding / output slicing: Pallas masks the partial last row tile and
    # rows are independent, so the garbage rows never reach HBM.

    noise2 = noise.reshape(M, D)
    rgb2 = rgb.reshape(M, D)

    # Pre-cast weights ONCE outside the kernel (no per-step .astype of
    # resident blocks).  First-layer biases in the elementwise dtype, second
    # biases in f32 (added to the f32 MXU accumulator).
    w1n = params["w1_n"].astype(compute_dtype)
    w2n = params["w2_n"].astype(compute_dtype)
    w1r = params["w1_r"].astype(compute_dtype)
    w2r = params["w2_r"].astype(compute_dtype)
    b1n = params["b1_n"].reshape(1, H).astype(elementwise_dtype)
    b1r = params["b1_r"].reshape(1, H).astype(elementwise_dtype)
    b2n = params["b2_n"].reshape(1, D).astype(jnp.float32)
    b2r = params["b2_r"].reshape(1, D).astype(jnp.float32)

    in_bytes_n = jnp.dtype(noise.dtype).itemsize
    in_bytes_r = jnp.dtype(rgb.dtype).itemsize
    w_bytes = jnp.dtype(compute_dtype).itemsize
    ew_bytes = jnp.dtype(elementwise_dtype).itemsize

    row_spec = pl.BlockSpec((tm, D), lambda i: (i, 0))

    flops = 8 * M * D * H                        # 2 streams x 2 matmuls
    transcendentals = 2 * M * H                  # tanh per hidden element
    bytes_accessed = (2 * M * D * (in_bytes_n + in_bytes_r)   # in + out
                      + 4 * D * H * w_bytes                   # 4 weight mats
                      + 2 * (H * ew_bytes + D * 4))           # biases

    def build(weight_mode, nbuf_weights):
        def const2d(shape):
            if weight_mode is None:
                return pl.BlockSpec(shape, lambda i: (0, 0))
            return pl.BlockSpec(shape, lambda i: (0, 0),
                                pipeline_mode=weight_mode)

        w_in, w_out = const2d((D, H)), const2d((H, D))
        b_in = pl.BlockSpec((1, H), lambda i: (0, 0))
        b_out = pl.BlockSpec((1, D), lambda i: (0, 0))
        vmem_limit = _vmem_limit_bytes(
            tm=tm, D=D, H=H,
            act_bytes=max(in_bytes_n, in_bytes_r),
            out_bytes=max(in_bytes_n, in_bytes_r),
            w_bytes=w_bytes, ew_bytes=ew_bytes,
            nbuf_weights=nbuf_weights,
            capacity=_vmem_capacity_bytes())
        return pl.pallas_call(
            functools.partial(_ffn_kernel, compute_dtype=compute_dtype,
                              elementwise_dtype=elementwise_dtype),
            out_shape=(jax.ShapeDtypeStruct((M, D), noise.dtype),
                       jax.ShapeDtypeStruct((M, D), rgb.dtype)),
            grid_spec=pltpu.PrefetchScalarGridSpec(
                num_scalar_prefetch=0,
                grid=grid,
                in_specs=[row_spec, row_spec,
                          w_in, b_in, w_out, b_out,
                          w_in, b_in, w_out, b_out],
                out_specs=[row_spec, row_spec],
            ),
            compiler_params=pltpu.CompilerParams(
                dimension_semantics=("parallel",),
                vmem_limit_bytes=vmem_limit),
            cost_estimate=pl.CostEstimate(
                flops=int(flops),
                transcendentals=int(transcendentals),
                bytes_accessed=int(bytes_accessed)),
        )

    args = (noise2, rgb2, w1n, b1n, w2n, b2n, w1r, b1r, w2r, b2r)
    if single_buffer_weights:
        try:
            out_n, out_r = build(pl.Buffered(1), nbuf_weights=1)(*args)
        except Exception as e:
            # Do NOT silently fall back: log and re-derive the VMEM budget
            # for double-buffered weights.
            warnings.warn(
                "FeedForward Pallas kernel: single-buffered weight specs were "
                f"rejected ({type(e).__name__}: {e}); falling back to "
                "double-buffered weights with a re-derived VMEM budget.")
            out_n, out_r = build(None, nbuf_weights=2)(*args)
    else:
        out_n, out_r = build(None, nbuf_weights=2)(*args)

    return out_n.reshape(B, N, D), out_r.reshape(B, N, D)


def feedforward_reference(noise, rgb, params, *, compute_dtype=jnp.bfloat16,
                          elementwise_dtype=None):
    """Pure-JAX reference using the same mixed-precision path as the kernel."""
    if elementwise_dtype is None:
        elementwise_dtype = _default_elementwise_dtype()

    def mlp(x, w1, b1, w2, b2):
        h = jnp.dot(x.astype(compute_dtype), w1.astype(compute_dtype),
                    preferred_element_type=jnp.float32)
        h = h.astype(elementwise_dtype) + b1.astype(elementwise_dtype)
        g = _gelu_tanh(h)
        y = jnp.dot(g.astype(compute_dtype), w2.astype(compute_dtype),
                    preferred_element_type=jnp.float32)
        y = y + b2.astype(jnp.float32)
        return y.astype(x.dtype)

    n = mlp(noise, params["w1_n"], params["b1_n"],
            params["w2_n"], params["b2_n"])
    r = mlp(rgb, params["w1_r"], params["b1_r"],
            params["w2_r"], params["b2_r"])
    return n, r


if __name__ == "__main__":
    # dim=128, hidden_dim=256 (lane-dense).  M = B*N = 144 is deliberately NOT
    # a multiple of the row tile so the no-pad partial-last-tile path runs.
    B, N, D, H = 2, 72, 128, 256
    key = jax.random.PRNGKey(0)
    ks = jax.random.split(key, 10)

    s1 = 1.0 / (D ** 0.5)
    s2 = 1.0 / (H ** 0.5)
    params = {
        "w1_n": jax.random.normal(ks[2], (D, H), jnp.float32) * s1,
        "b1_n": jax.random.normal(ks[3], (H,), jnp.float32) * 0.01,
        "w2_n": jax.random.normal(ks[4], (H, D), jnp.float32) * s2,
        "b2_n": jax.random.normal(ks[5], (D,), jnp.float32) * 0.01,
        "w1_r": jax.random.normal(ks[6], (D, H), jnp.float32) * s1,
        "b1_r": jax.random.normal(ks[7], (H,), jnp.float32) * 0.01,
        "w2_r": jax.random.normal(ks[8], (H, D), jnp.float32) * s2,
        "b2_r": jax.random.normal(ks[9], (D,), jnp.float32) * 0.01,
    }

    # --- Check 1: f32 activations (PyTorch module's default dtype), f32
    #     elementwise path, small explicit tile -> multi-step grid with a
    #     masked partial last tile (no jnp.pad / no output slice). ---
    noise32 = jax.random.normal(ks[0], (B, N, D), dtype=jnp.float32)
    rgb32 = jax.random.normal(ks[1], (B, N, D), dtype=jnp.float32)
    out_n, out_r = feedforward_forward(noise32, rgb32, params, tm=64,
                                       elementwise_dtype=jnp.float32)
    jax.block_until_ready((out_n, out_r))
    ref_n, ref_r = feedforward_reference(noise32, rgb32, params,
                                         elementwise_dtype=jnp.float32)
    assert out_n.shape == (B, N, D) and out_r.shape == (B, N, D)
    err_n = float(jnp.max(jnp.abs(out_n - ref_n)))
    err_r = float(jnp.max(jnp.abs(out_r - ref_r)))
    assert jnp.allclose(out_n, ref_n, atol=2e-3, rtol=2e-3), err_n
    assert jnp.allclose(out_r, ref_r, atol=2e-3, rtol=2e-3), err_r

    # --- Check 2: bf16 activations end-to-end (recommended mem-bound path),
    #     default tile, auto elementwise dtype (bf16 on v6e/v7x, f32 on v5e).
    noise16 = noise32.astype(jnp.bfloat16)
    rgb16 = rgb32.astype(jnp.bfloat16)
    out_n16, out_r16 = feedforward_forward(noise16, rgb16, params)
    jax.block_until_ready((out_n16, out_r16))
    ref_n16, ref_r16 = feedforward_reference(noise16, rgb16, params)
    assert out_n16.dtype == jnp.bfloat16 and out_r16.dtype == jnp.bfloat16
    e_n = float(jnp.max(jnp.abs(out_n16.astype(jnp.float32)
                                - ref_n16.astype(jnp.float32))))
    e_r = float(jnp.max(jnp.abs(out_r16.astype(jnp.float32)
                                - ref_r16.astype(jnp.float32))))
    assert e_n < 6e-2 and e_r < 6e-2, (e_n, e_r)

    print("KERNEL_OK")
</pallas_src>

<mosaic_0001>
module attributes {stable_mosaic.version = 11 : i64} {
  func.func @_ffn_kernel(%arg0: i32, %arg1: memref<64x128xf32, #tpu.memory_space<vmem>>, %arg2: memref<64x128xf32, #tpu.memory_space<vmem>>, %arg3: memref<128x256xbf16, #tpu.memory_space<vmem>>, %arg4: memref<1x256xf32, #tpu.memory_space<vmem>>, %arg5: memref<256x128xbf16, #tpu.memory_space<vmem>>, %arg6: memref<1x128xf32, #tpu.memory_space<vmem>>, %arg7: memref<128x256xbf16, #tpu.memory_space<vmem>>, %arg8: memref<1x256xf32, #tpu.memory_space<vmem>>, %arg9: memref<256x128xbf16, #tpu.memory_space<vmem>>, %arg10: memref<1x128xf32, #tpu.memory_space<vmem>>, %arg11: memref<64x128xf32, #tpu.memory_space<vmem>>, %arg12: memref<64x128xf32, #tpu.memory_space<vmem>>) attributes {dimension_semantics = [#tpu.dimension_semantics<parallel>], iteration_bounds = array<i64: 3>, scalar_prefetch = 0 : i64, scratch_operands = 0 : i64, tpu.core_type = #tpu.core_type<tc>, window_params = [{transform_indices = @transform_0, window_bounds = array<i64: 64, 128>}, {transform_indices = @transform_1, window_bounds = array<i64: 64, 128>}, {pipeline_mode = #tpu.pipeline_mode<synchronous>, transform_indices = @transform_2, window_bounds = array<i64: 128, 256>}, {pipeline_mode = #tpu.pipeline_mode<synchronous>, transform_indices = @transform_3, window_bounds = array<i64: 1, 256>}, {pipeline_mode = #tpu.pipeline_mode<synchronous>, transform_indices = @transform_4, window_bounds = array<i64: 256, 128>}, {pipeline_mode = #tpu.pipeline_mode<synchronous>, transform_indices = @transform_5, window_bounds = array<i64: 1, 128>}, {pipeline_mode = #tpu.pipeline_mode<synchronous>, transform_indices = @transform_6, window_bounds = array<i64: 128, 256>}, {pipeline_mode = #tpu.pipeline_mode<synchronous>, transform_indices = @transform_7, window_bounds = array<i64: 1, 256>}, {pipeline_mode = #tpu.pipeline_mode<synchronous>, transform_indices = @transform_8, window_bounds = array<i64: 256, 128>}, {pipeline_mode = #tpu.pipeline_mode<synchronous>, transform_indices = @transform_9, window_bounds = array<i64: 1, 128>}, {transform_indices = @transform_10, window_bounds = array<i64: 64, 128>}, {transform_indices = @transform_11, window_bounds = array<i64: 64, 128>}]} {
    %c0 = arith.constant 0 : index
    %c0_0 = arith.constant 0 : index
    %0 = vector.load %arg1[%c0, %c0_0] : memref<64x128xf32, #tpu.memory_space<vmem>>, vector<64x128xf32>
    %1 = arith.truncf %0 : vector<64x128xf32> to vector<64x128xbf16>
    %c0_1 = arith.constant 0 : index
    %c0_2 = arith.constant 0 : index
    %2 = vector.load %arg3[%c0_1, %c0_2] : memref<128x256xbf16, #tpu.memory_space<vmem>>, vector<128x256xbf16>
    %cst = arith.constant dense<0.000000e+00> : vector<64x256xf32>
    %3 = tpu.matmul %1, %2, %cst {dimension_numbers = #tpu.dot_dimension_numbers<[1], [0], [0], [1], [0, 0, 1, 1], [], []>} : vector<64x128xbf16>, vector<128x256xbf16>, vector<64x256xf32> -> vector<64x256xf32>
    %c0_3 = arith.constant 0 : index
    %c0_4 = arith.constant 0 : index
    %4 = vector.load %arg4[%c0_3, %c0_4] : memref<1x256xf32, #tpu.memory_space<vmem>>, vector<1x256xf32>
    %5 = vector.broadcast %4 : vector<1x256xf32> to vector<64x256xf32>
    %6 = arith.addf %3, %5 : vector<64x256xf32>
    %cst_5 = arith.constant 5.000000e-01 : f32
    %7 = vector.broadcast %cst_5 : f32 to vector<64x256xf32>
    %8 = arith.mulf %7, %6 : vector<64x256xf32>
    %cst_6 = arith.constant 4.471500e-02 : f32
    %9 = vector.broadcast %cst_6 : f32 to vector<64x256xf32>
    %10 = arith.mulf %9, %6 : vector<64x256xf32>
    %11 = arith.mulf %10, %6 : vector<64x256xf32>
    %12 = arith.mulf %11, %6 : vector<64x256xf32>
    %13 = arith.addf %6, %12 : vector<64x256xf32>
    %cst_7 = arith.constant 0.797884583 : f32
    %14 = vector.broadcast %cst_7 : f32 to vector<64x256xf32>
    %15 = arith.mulf %14, %13 : vector<64x256xf32>
    %16 = math.tanh %15 : vector<64x256xf32>
    %cst_8 = arith.constant 1.000000e+00 : f32
    %17 = vector.broadcast %cst_8 : f32 to vector<64x256xf32>
    %18 = arith.addf %17, %16 : vector<64x256xf32>
    %19 = arith.mulf %8, %18 : vector<64x256xf32>
    %20 = arith.truncf %19 : vector<64x256xf32> to vector<64x256xbf16>
    %c0_9 = arith.constant 0 : index
    %c0_10 = arith.constant 0 : index
    %21 = vector.load %arg5[%c0_9, %c0_10] : memref<256x128xbf16, #tpu.memory_space<vmem>>, vector<256x128xbf16>
    %cst_11 = arith.constant dense<0.000000e+00> : vector<64x128xf32>
    %22 = tpu.matmul %20, %21, %cst_11 {dimension_numbers = #tpu.dot_dimension_numbers<[1], [0], [0], [1], [0, 0, 1, 1], [], []>} : vector<64x256xbf16>, vector<256x128xbf16>, vector<64x128xf32> -> vector<64x128xf32>
    %c0_12 = arith.constant 0 : index
    %c0_13 = arith.constant 0 : index
    %23 = vector.load %arg6[%c0_12, %c0_13] : memref<1x128xf32, #tpu.memory_space<vmem>>, vector<1x128xf32>
    %24 = vector.broadcast %23 : vector<1x128xf32> to vector<64x128xf32>
    %25 = arith.addf %22, %24 : vector<64x128xf32>
    %c0_14 = arith.constant 0 : index
    %c0_15 = arith.constant 0 : index
    %26 = vector.load %arg11[%c0_14, %c0_15] : memref<64x128xf32, #tpu.memory_space<vmem>>, vector<64x128xf32>
    tpu.vector_store %arg11[%c0_14, %c0_15], %25 {strides = array<i32>} : memref<64x128xf32, #tpu.memory_space<vmem>>, vector<64x128xf32>,
    %c0_16 = arith.constant 0 : index
    %c0_17 = arith.constant 0 : index
    %27 = vector.load %arg2[%c0_16, %c0_17] : memref<64x128xf32, #tpu.memory_space<vmem>>, vector<64x128xf32>
    %28 = arith.truncf %27 : vector<64x128xf32> to vector<64x128xbf16>
    %c0_18 = arith.constant 0 : index
    %c0_19 = arith.constant 0 : index
    %29 = vector.load %arg7[%c0_18, %c0_19] : memref<128x256xbf16, #tpu.memory_space<vmem>>, vector<128x256xbf16>
    %cst_20 = arith.constant dense<0.000000e+00> : vector<64x256xf32>
    %30 = tpu.matmul %28, %29, %cst_20 {dimension_numbers = #tpu.dot_dimension_numbers<[1], [0], [0], [1], [0, 0, 1, 1], [], []>} : vector<64x128xbf16>, vector<128x256xbf16>, vector<64x256xf32> -> vector<64x256xf32>
    %c0_21 = arith.constant 0 : index
    %c0_22 = arith.constant 0 : index
    %31 = vector.load %arg8[%c0_21, %c0_22] : memref<1x256xf32, #tpu.memory_space<vmem>>, vector<1x256xf32>
    %32 = vector.broadcast %31 : vector<1x256xf32> to vector<64x256xf32>
    %33 = arith.addf %30, %32 : vector<64x256xf32>
    %cst_23 = arith.constant 5.000000e-01 : f32
    %34 = vector.broadcast %cst_23 : f32 to vector<64x256xf32>
    %35 = arith.mulf %34, %33 : vector<64x256xf32>
    %cst_24 = arith.constant 4.471500e-02 : f32
    %36 = vector.broadcast %cst_24 : f32 to vector<64x256xf32>
    %37 = arith.mulf %36, %33 : vector<64x256xf32>
    %38 = arith.mulf %37, %33 : vector<64x256xf32>
    %39 = arith.mulf %38, %33 : vector<64x256xf32>
    %40 = arith.addf %33, %39 : vector<64x256xf32>
    %cst_25 = arith.constant 0.797884583 : f32
    %41 = vector.broadcast %cst_25 : f32 to vector<64x256xf32>
    %42 = arith.mulf %41, %40 : vector<64x256xf32>
    %43 = math.tanh %42 : vector<64x256xf32>
    %cst_26 = arith.constant 1.000000e+00 : f32
    %44 = vector.broadcast %cst_26 : f32 to vector<64x256xf32>
    %45 = arith.addf %44, %43 : vector<64x256xf32>
    %46 = arith.mulf %35, %45 : vector<64x256xf32>
    %47 = arith.truncf %46 : vector<64x256xf32> to vector<64x256xbf16>
    %c0_27 = arith.constant 0 : index
    %c0_28 = arith.constant 0 : index
    %48 = vector.load %arg9[%c0_27, %c0_28] : memref<256x128xbf16, #tpu.memory_space<vmem>>, vector<256x128xbf16>
    %cst_29 = arith.constant dense<0.000000e+00> : vector<64x128xf32>
    %49 = tpu.matmul %47, %48, %cst_29 {dimension_numbers = #tpu.dot_dimension_numbers<[1], [0], [0], [1], [0, 0, 1, 1], [], []>} : vector<64x256xbf16>, vector<256x128xbf16>, vector<64x128xf32> -> vector<64x128xf32>
    %c0_30 = arith.constant 0 : index
    %c0_31 = arith.constant 0 : index
    %50 = vector.load %arg10[%c0_30, %c0_31] : memref<1x128xf32, #tpu.memory_space<vmem>>, vector<1x128xf32>
    %51 = vector.broadcast %50 : vector<1x128xf32> to vector<64x128xf32>
    %52 = arith.addf %49, %51 : vector<64x128xf32>
    %c0_32 = arith.constant 0 : index
    %c0_33 = arith.constant 0 : index
    %53 = vector.load %arg12[%c0_32, %c0_33] : memref<64x128xf32, #tpu.memory_space<vmem>>, vector<64x128xf32>
    tpu.vector_store %arg12[%c0_32, %c0_33], %52 {strides = array<i32>} : memref<64x128xf32, #tpu.memory_space<vmem>>, vector<64x128xf32>,
    return
  }
  func.func @transform_0(%arg0: i32) -> (i32, i32) {
    %c0_i32 = arith.constant 0 : i32
    %c0_i32_0 = arith.constant 0 : i32
    return %arg0, %c0_i32 : i32, i32
  }
  func.func @transform_1(%arg0: i32) -> (i32, i32) {
    %c0_i32 = arith.constant 0 : i32
    %c0_i32_0 = arith.constant 0 : i32
    return %arg0, %c0_i32 : i32, i32
  }
  func.func @transform_2(%arg0: i32) -> (i32, i32) {
    %c0_i32 = arith.constant 0 : i32
    %c0_i32_0 = arith.constant 0 : i32
    %c0_i32_1 = arith.constant 0 : i32
    return %c0_i32, %c0_i32_0 : i32, i32
  }
  func.func @transform_3(%arg0: i32) -> (i32, i32) {
    %c0_i32 = arith.constant 0 : i32
    %c0_i32_0 = arith.constant 0 : i32
    %c0_i32_1 = arith.constant 0 : i32
    return %c0_i32, %c0_i32_0 : i32, i32
  }
  func.func @transform_4(%arg0: i32) -> (i32, i32) {
    %c0_i32 = arith.constant 0 : i32
    %c0_i32_0 = arith.constant 0 : i32
    %c0_i32_1 = arith.constant 0 : i32
    return %c0_i32, %c0_i32_0 : i32, i32
  }
  func.func @transform_5(%arg0: i32) -> (i32, i32) {
    %c0_i32 = arith.constant 0 : i32
    %c0_i32_0 = arith.constant 0 : i32
    %c0_i32_1 = arith.constant 0 : i32
    return %c0_i32, %c0_i32_0 : i32, i32
  }
  func.func @transform_6(%arg0: i32) -> (i32, i32) {
    %c0_i32 = arith.constant 0 : i32
    %c0_i32_0 = arith.constant 0 : i32
    %c0_i32_1 = arith.constant 0 : i32
    return %c0_i32, %c0_i32_0 : i32, i32
  }
  func.func @transform_7(%arg0: i32) -> (i32, i32) {
    %c0_i32 = arith.constant 0 : i32
    %c0_i32_0 = arith.constant 0 : i32
    %c0_i32_1 = arith.constant 0 : i32
    return %c0_i32, %c0_i32_0 : i32, i32
  }
  func.func @transform_8(%arg0: i32) -> (i32, i32) {
    %c0_i32 = arith.constant 0 : i32
    %c0_i32_0 = arith.constant 0 : i32
    %c0_i32_1 = arith.constant 0 : i32
    return %c0_i32, %c0_i32_0 : i32, i32
  }
  func.func @transform_9(%arg0: i32) -> (i32, i32) {
    %c0_i32 = arith.constant 0 : i32
    %c0_i32_0 = arith.constant 0 : i32
    %c0_i32_1 = arith.constant 0 : i32
    return %c0_i32, %c0_i32_0 : i32, i32
  }
  func.func @transform_10(%arg0: i32) -> (i32, i32) {
    %c0_i32 = arith.constant 0 : i32
    %c0_i32_0 = arith.constant 0 : i32
    return %arg0, %c0_i32 : i32, i32
  }
  func.func @transform_11(%arg0: i32) -> (i32, i32) {
    %c0_i32 = arith.constant 0 : i32
    %c0_i32_0 = arith.constant 0 : i32
    return %arg0, %c0_i32 : i32, i32
  }
}

module attributes {stable_mosaic.version = 11 : i64} {
  func.func @_ffn_kernel(%arg0: i32, %arg1: memref<64x128xf32, #tpu.memory_space<vmem>>, %arg2: memref<64x128xf32, #tpu.memory_space<vmem>>, %arg3: memref<128x256xbf16, #tpu.memory_space<vmem>>, %arg4: memref<1x256xf32, #tpu.memory_space<vmem>>, %arg5: memref<256x128xbf16, #tpu.memory_space<vmem>>, %arg6: memref<1x128xf32, #tpu.memory_space<vmem>>, %arg7: memref<128x256xbf16, #tpu.memory_space<vmem>>, %arg8: memref<1x256xf32, #tpu.memory_space<vmem>>, %arg9: memref<256x128xbf16, #tpu.memory_space<vmem>>, %arg10: memref<1x128xf32, #tpu.memory_space<vmem>>, %arg11: memref<64x128xf32, #tpu.memory_space<vmem>>, %arg12: memref<64x128xf32, #tpu.memory_space<vmem>>) attributes {dimension_semantics = [#tpu.dimension_semantics<parallel>], iteration_bounds = array<i64: 3>, scalar_prefetch = 0 : i64, scratch_operands = 0 : i64, tpu.core_type = #tpu.core_type<tc>, window_params = [{transform_indices = @transform_0, window_bounds = array<i64: 64, 128>}, {transform_indices = @transform_1, window_bounds = array<i64: 64, 128>}, {pipeline_mode = #tpu.pipeline_mode<synchronous>, transform_indices = @transform_2, window_bounds = array<i64: 128, 256>}, {pipeline_mode = #tpu.pipeline_mode<synchronous>, transform_indices = @transform_3, window_bounds = array<i64: 1, 256>}, {pipeline_mode = #tpu.pipeline_mode<synchronous>, transform_indices = @transform_4, window_bounds = array<i64: 256, 128>}, {pipeline_mode = #tpu.pipeline_mode<synchronous>, transform_indices = @transform_5, window_bounds = array<i64: 1, 128>}, {pipeline_mode = #tpu.pipeline_mode<synchronous>, transform_indices = @transform_6, window_bounds = array<i64: 128, 256>}, {pipeline_mode = #tpu.pipeline_mode<synchronous>, transform_indices = @transform_7, window_bounds = array<i64: 1, 256>}, {pipeline_mode = #tpu.pipeline_mode<synchronous>, transform_indices = @transform_8, window_bounds = array<i64: 256, 128>}, {pipeline_mode = #tpu.pipeline_mode<synchronous>, transform_indices = @transform_9, window_bounds = array<i64: 1, 128>}, {transform_indices = @transform_10, window_bounds = array<i64: 64, 128>}, {transform_indices = @transform_11, window_bounds = array<i64: 64, 128>}]} {
    %c0 = arith.constant 0 : index
    %c0_0 = arith.constant 0 : index
    %0 = vector.load %arg1[%c0, %c0_0] : memref<64x128xf32, #tpu.memory_space<vmem>>, vector<64x128xf32>
    %1 = arith.truncf %0 : vector<64x128xf32> to vector<64x128xbf16>
    %c0_1 = arith.constant 0 : index
    %c0_2 = arith.constant 0 : index
    %2 = vector.load %arg3[%c0_1, %c0_2] : memref<128x256xbf16, #tpu.memory_space<vmem>>, vector<128x256xbf16>
    %cst = arith.constant dense<0.000000e+00> : vector<64x256xf32>
    %3 = tpu.matmul %1, %2, %cst {dimension_numbers = #tpu.dot_dimension_numbers<[1], [0], [0], [1], [0, 0, 1, 1], [], []>} : vector<64x128xbf16>, vector<128x256xbf16>, vector<64x256xf32> -> vector<64x256xf32>
    %c0_3 = arith.constant 0 : index
    %c0_4 = arith.constant 0 : index
    %4 = vector.load %arg4[%c0_3, %c0_4] : memref<1x256xf32, #tpu.memory_space<vmem>>, vector<1x256xf32>
    %5 = vector.broadcast %4 : vector<1x256xf32> to vector<64x256xf32>
    %6 = arith.addf %3, %5 : vector<64x256xf32>
    %cst_5 = arith.constant 5.000000e-01 : f32
    %7 = vector.broadcast %cst_5 : f32 to vector<64x256xf32>
    %8 = arith.mulf %7, %6 : vector<64x256xf32>
    %cst_6 = arith.constant 4.471500e-02 : f32
    %9 = vector.broadcast %cst_6 : f32 to vector<64x256xf32>
    %10 = arith.mulf %9, %6 : vector<64x256xf32>
    %11 = arith.mulf %10, %6 : vector<64x256xf32>
    %12 = arith.mulf %11, %6 : vector<64x256xf32>
    %13 = arith.addf %6, %12 : vector<64x256xf32>
    %cst_7 = arith.constant 0.797884583 : f32
    %14 = vector.broadcast %cst_7 : f32 to vector<64x256xf32>
    %15 = arith.mulf %14, %13 : vector<64x256xf32>
    %16 = math.tanh %15 : vector<64x256xf32>
    %cst_8 = arith.constant 1.000000e+00 : f32
    %17 = vector.broadcast %cst_8 : f32 to vector<64x256xf32>
    %18 = arith.addf %17, %16 : vector<64x256xf32>
    %19 = arith.mulf %8, %18 : vector<64x256xf32>
    %20 = arith.truncf %19 : vector<64x256xf32> to vector<64x256xbf16>
    %c0_9 = arith.constant 0 : index
    %c0_10 = arith.constant 0 : index
    %21 = vector.load %arg5[%c0_9, %c0_10] : memref<256x128xbf16, #tpu.memory_space<vmem>>, vector<256x128xbf16>
    %cst_11 = arith.constant dense<0.000000e+00> : vector<64x128xf32>
    %22 = tpu.matmul %20, %21, %cst_11 {dimension_numbers = #tpu.dot_dimension_numbers<[1], [0], [0], [1], [0, 0, 1, 1], [], []>} : vector<64x256xbf16>, vector<256x128xbf16>, vector<64x128xf32> -> vector<64x128xf32>
    %c0_12 = arith.constant 0 : index
    %c0_13 = arith.constant 0 : index
    %23 = vector.load %arg6[%c0_12, %c0_13] : memref<1x128xf32, #tpu.memory_space<vmem>>, vector<1x128xf32>
    %24 = vector.broadcast %23 : vector<1x128xf32> to vector<64x128xf32>
    %25 = arith.addf %22, %24 : vector<64x128xf32>
    %c0_14 = arith.constant 0 : index
    %c0_15 = arith.constant 0 : index
    %26 = vector.load %arg11[%c0_14, %c0_15] : memref<64x128xf32, #tpu.memory_space<vmem>>, vector<64x128xf32>
    tpu.vector_store %arg11[%c0_14, %c0_15], %25 {strides = array<i32>} : memref<64x128xf32, #tpu.memory_space<vmem>>, vector<64x128xf32>,
    %c0_16 = arith.constant 0 : index
    %c0_17 = arith.constant 0 : index
    %27 = vector.load %arg2[%c0_16, %c0_17] : memref<64x128xf32, #tpu.memory_space<vmem>>, vector<64x128xf32>
    %28 = arith.truncf %27 : vector<64x128xf32> to vector<64x128xbf16>
    %c0_18 = arith.constant 0 : index
    %c0_19 = arith.constant 0 : index
    %29 = vector.load %arg7[%c0_18, %c0_19] : memref<128x256xbf16, #tpu.memory_space<vmem>>, vector<128x256xbf16>
    %cst_20 = arith.constant dense<0.000000e+00> : vector<64x256xf32>
    %30 = tpu.matmul %28, %29, %cst_20 {dimension_numbers = #tpu.dot_dimension_numbers<[1], [0], [0], [1], [0, 0, 1, 1], [], []>} : vector<64x128xbf16>, vector<128x256xbf16>, vector<64x256xf32> -> vector<64x256xf32>
    %c0_21 = arith.constant 0 : index
    %c0_22 = arith.constant 0 : index
    %31 = vector.load %arg8[%c0_21, %c0_22] : memref<1x256xf32, #tpu.memory_space<vmem>>, vector<1x256xf32>
    %32 = vector.broadcast %31 : vector<1x256xf32> to vector<64x256xf32>
    %33 = arith.addf %30, %32 : vector<64x256xf32>
    %cst_23 = arith.constant 5.000000e-01 : f32
    %34 = vector.broadcast %cst_23 : f32 to vector<64x256xf32>
    %35 = arith.mulf %34, %33 : vector<64x256xf32>
    %cst_24 = arith.constant 4.471500e-02 : f32
    %36 = vector.broadcast %cst_24 : f32 to vector<64x256xf32>
    %37 = arith.mulf %36, %33 : vector<64x256xf32>
    %38 = arith.mulf %37, %33 : vector<64x256xf32>
    %39 = arith.mulf %38, %33 : vector<64x256xf32>
    %40 = arith.addf %33, %39 : vector<64x256xf32>
    %cst_25 = arith.constant 0.797884583 : f32
    %41 = vector.broadcast %cst_25 : f32 to vector<64x256xf32>
    %42 = arith.mulf %41, %40 : vector<64x256xf32>
    %43 = math.tanh %42 : vector<64x256xf32>
    %cst_26 = arith.constant 1.000000e+00 : f32
    %44 = vector.broadcast %cst_26 : f32 to vector<64x256xf32>
    %45 = arith.addf %44, %43 : vector<64x256xf32>
    %46 = arith.mulf %35, %45 : vector<64x256xf32>
    %47 = arith.truncf %46 : vector<64x256xf32> to vector<64x256xbf16>
    %c0_27 = arith.constant 0 : index
    %c0_28 = arith.constant 0 : index
    %48 = vector.load %arg9[%c0_27, %c0_28] : memref<256x128xbf16, #tpu.memory_space<vmem>>, vector<256x128xbf16>
    %cst_29 = arith.constant dense<0.000000e+00> : vector<64x128xf32>
    %49 = tpu.matmul %47, %48, %cst_29 {dimension_numbers = #tpu.dot_dimension_numbers<[1], [0], [0], [1], [0, 0, 1, 1], [], []>} : vector<64x256xbf16>, vector<256x128xbf16>, vector<64x128xf32> -> vector<64x128xf32>
    %c0_30 = arith.constant 0 : index
    %c0_31 = arith.constant 0 : index
    %50 = vector.load %arg10[%c0_30, %c0_31] : memref<1x128xf32, #tpu.memory_space<vmem>>, vector<1x128xf32>
    %51 = vector.broadcast %50 : vector<1x128xf32> to vector<64x128xf32>
    %52 = arith.addf %49, %51 : vector<64x128xf32>
    %c0_32 = arith.constant 0 : index
    %c0_33 = arith.constant 0 : index
    %53 = vector.load %arg12[%c0_32, %c0_33] : memref<64x128xf32, #tpu.memory_space<vmem>>, vector<64x128xf32>
    tpu.vector_store %arg12[%c0_32, %c0_33], %52 {strides = array<i32>} : memref<64x128xf32, #tpu.memory_space<vmem>>, vector<64x128xf32>,
    return
  }
  func.func @transform_0(%arg0: i32) -> (i32, i32) {
    %c0_i32 = arith.constant 0 : i32
    %c0_i32_0 = arith.constant 0 : i32
    return %arg0, %c0_i32 : i32, i32
  }
  func.func @transform_1(%arg0: i32) -> (i32, i32) {
    %c0_i32 = arith.constant 0 : i32
    %c0_i32_0 = arith.constant 0 : i32
    return %arg0, %c0_i32 : i32, i32
  }
  func.func @transform_2(%arg0: i32) -> (i32, i32) {
    %c0_i32 = arith.constant 0 : i32
    %c0_i32_0 = arith.constant 0 : i32
    %c0_i32_1 = arith.constant 0 : i32
    return %c0_i32, %c0_i32_0 : i32, i32
  }
  func.func @transform_3(%arg0: i32) -> (i32, i32) {
    %c0_i32 = arith.constant 0 : i32
    %c0_i32_0 = arith.constant 0 : i32
    %c0_i32_1 = arith.constant 0 : i32
    return %c0_i32, %c0_i32_0 : i32, i32
  }
  func.func @transform_4(%arg0: i32) -> (i32, i32) {
    %c0_i32 = arith.constant 0 : i32
    %c0_i32_0 = arith.constant 0 : i32
    %c0_i32_1 = arith.constant 0 : i32
    return %c0_i32, %c0_i32_0 : i32, i32
  }
  func.func @transform_5(%arg0: i32) -> (i32, i32) {
    %c0_i32 = arith.constant 0 : i32
    %c0_i32_0 = arith.constant 0 : i32
    %c0_i32_1 = arith.constant 0 : i32
    return %c0_i32, %c0_i32_0 : i32, i32
  }
  func.func @transform_6(%arg0: i32) -> (i32, i32) {
    %c0_i32 = arith.constant 0 : i32
    %c0_i32_0 = arith.constant 0 : i32
    %c0_i32_1 = arith.constant 0 : i32
    return %c0_i32, %c0_i32_0 : i32, i32
  }
  func.func @transform_7(%arg0: i32) -> (i32, i32) {
    %c0_i32 = arith.constant 0 : i32
    %c0_i32_0 = arith.constant 0 : i32
    %c0_i32_1 = arith.constant 0 : i32
    return %c0_i32, %c0_i32_0 : i32, i32
  }
  func.func @transform_8(%arg0: i32) -> (i32, i32) {
    %c0_i32 = arith.constant 0 : i32
    %c0_i32_0 = arith.constant 0 : i32
    %c0_i32_1 = arith.constant 0 : i32
    return %c0_i32, %c0_i32_0 : i32, i32
  }
  func.func @transform_9(%arg0: i32) -> (i32, i32) {
    %c0_i32 = arith.constant 0 : i32
    %c0_i32_0 = arith.constant 0 : i32
    %c0_i32_1 = arith.constant 0 : i32
    return %c0_i32, %c0_i32_0 : i32, i32
  }
  func.func @transform_10(%arg0: i32) -> (i32, i32) {
    %c0_i32 = arith.constant 0 : i32
    %c0_i32_0 = arith.constant 0 : i32
    return %arg0, %c0_i32 : i32, i32
  }
  func.func @transform_11(%arg0: i32) -> (i32, i32) {
    %c0_i32 = arith.constant 0 : i32
    %c0_i32_0 = arith.constant 0 : i32
    return %arg0, %c0_i32 : i32, i32
  }
}

</mosaic_0001>

<llo_original>
// kernel: tpu_custom_call.1
$region0: #{tpu_custom_call.1}
  #allocation0 [shape = 'u32[]', space=smem, size = 0x4, offset = 0x4, fixed_abs, tag = 'smem constant byte address 0x4 - core index']
  #allocation1 [shape = 'u32[144,128]{1,0:T(1,128)}', space=vmem, size = 0x12000, scoped, tag = 'internal scratch']
  %s0 = inlined_call_operand.hbm [shape: f32[144,128], index: 0, kind: input, shape index: {}]
  %s1 = inlined_call_operand.hbm [shape: f32[144,128], index: 1, kind: input, shape index: {}]
  %s2 = inlined_call_operand.hbm [shape: bf16[128,256], index: 2, kind: input, shape index: {}]
  %s3 = inlined_call_operand.vmem [shape: f32[1,256], index: 3, kind: input, shape index: {}]
  %s4 = inlined_call_operand.hbm [shape: bf16[256,128], index: 4, kind: input, shape index: {}]
  %s5 = inlined_call_operand.vmem [shape: f32[1,128], index: 5, kind: input, shape index: {}]
  %s6 = inlined_call_operand.hbm [shape: bf16[128,256], index: 6, kind: input, shape index: {}]
  %s7 = inlined_call_operand.vmem [shape: f32[1,256], index: 7, kind: input, shape index: {}]
  %s8 = inlined_call_operand.hbm [shape: bf16[256,128], index: 8, kind: input, shape index: {}]
  %s9 = inlined_call_operand.vmem [shape: f32[1,128], index: 9, kind: input, shape index: {}]
  %s10 = inlined_call_operand.hbm [shape: f32[144,128], index: 10, kind: output, shape index: {0}]
  %s11 = inlined_call_operand.hbm [shape: f32[144,128], index: 11, kind: output, shape index: {1}]
  %12 = xla_tuple %s10, %s11
  %s13 = sld [smem:[#allocation0]]
  $region105: #{tpu_custom_call.1} parent=0
    _
  %s15 = ssub.s32 1, %s13
  %s16 = scalar_select 0, %s15, %s13
  $region1: #{tpu_custom_call.1} parent=0
    #allocation2 [shape = 'u8[65536]{0}', space=vmem, size = 0x10000, scoped, tag = 'input window, operand 0']
    #allocation3 [shape = 's32[2]{0}', space=sflag, size = 0x8, scoped, tag = 'scoped memory for tpu_custom_call.1']
    #allocation4 [shape = 's32[2]{0}', space=sflag, size = 0x8, scoped, tag = 'scoped memory for tpu_custom_call.1']
    #allocation5 [shape = 'u8[65536]{0}', space=vmem, size = 0x10000, scoped, tag = 'input window, operand 1']
    #allocation6 [shape = 's32[2]{0}', space=sflag, size = 0x8, scoped, tag = 'scoped memory for tpu_custom_call.1']
    #allocation7 [shape = 'u8[65536]{0}', space=vmem, size = 0x10000, scoped, tag = 'input window, operand 2, single buffered']
    #allocation8 [shape = 'u8[65536]{0}', space=vmem, size = 0x10000, scoped, tag = 'input window, operand 4, single buffered']
    #allocation9 [shape = 's32[1]{0}', space=sflag, size = 0x4, scoped, tag = 'scoped memory for tpu_custom_call.1']
    #allocation10 [shape = 'u8[65536]{0}', space=vmem, size = 0x10000, scoped, tag = 'input window, operand 6, single buffered']
    #allocation11 [shape = 'u8[65536]{0}', space=vmem, size = 0x10000, scoped, tag = 'input window, operand 8, single buffered']
    #allocation12 [shape = 's32[1]{0}', space=sflag, size = 0x4, scoped, tag = 'scoped memory for tpu_custom_call.1']
    #allocation13 [shape = 'u8[65536]{0}', space=vmem, size = 0x10000, scoped, tag = 'output window, operand 0']
    #allocation14 [shape = 'u8[65536]{0}', space=vmem, size = 0x10000, scoped, tag = 'output window, operand 1']
    #allocation15 [shape = 's32[2]{0}', space=sflag, size = 0x8, scoped, tag = 'scoped memory for tpu_custom_call.1']
    %17 = vsyncpa [#allocation3], 0
    %s18 = scalar_lea.sflag [#allocation3], 1
    %19 = vsyncpa %s18, 0
    %20 = vsyncpa [#allocation6], 0
    %s21 = scalar_lea.sflag [#allocation6], 1
    %22 = vsyncpa %s21, 0
    %23 = vsyncpa [#allocation9], 0
    %24 = vsyncpa [#allocation12], 0
    %25 = vsyncpa [#allocation4], 0
    %s26 = scalar_lea.sflag [#allocation4], 1
    %27 = vsyncpa %s26, 0
    %28 = vsyncpa [#allocation15], 0
    %s29 = scalar_lea.sflag [#allocation15], 1
    %30 = vsyncpa %s29, 0
    loop: start=0, step=1, limit=5
    $region2: #{tpu_custom_call.1} parent=1 // loop_pre_header
      _
    $region3: #{tpu_custom_call.1} parent=1 // loop_header
      %s32 = sphi 0, %s36
      %p33 = scmp.ge.s32.totalorder %s32, 5
      %s42 = sphi 0, %s44
      %s45 = sphi 0, %s42
      %s46 = sphi 0, %s45
      %s62 = sphi 0, %s46
      %s68 = sphi 0, %s70
      %s71 = sphi 0, %s68
      %s72 = sphi 0, %s71
      %s88 = sphi 0, %s72
      %s92 = sphi 0, %s92
      %s94 = sphi 0, %s92
      %s95 = sphi 0, %s94
      %s109 = sphi 0, %s95
      %s113 = sphi 0, %s113
      %s115 = sphi 0, %s113
      %s116 = sphi 0, %s115
      %s130 = sphi 0, %s116
      %s134 = sphi 0, %s134
      %s136 = sphi 0, %s134
      %s137 = sphi 0, %s136
      %s151 = sphi 0, %s137
      %s155 = sphi 0, %s155
      %s157 = sphi 0, %s155
      %s158 = sphi 0, %s157
      %s172 = sphi 0, %s158
      %s176 = sphi 0, %s176
      %s178 = sphi 0, %s176
      %s179 = sphi 0, %s178
      %s193 = sphi 0, %s179
      %s197 = sphi 0, %s197
      %s199 = sphi 0, %s197
      %s200 = sphi 0, %s199
      %s214 = sphi 0, %s200
      %s218 = sphi 0, %s218
      %s220 = sphi 0, %s218
      %s221 = sphi 0, %s220
      %s235 = sphi 0, %s221
      %s239 = sphi 0, %s239
      %s241 = sphi 0, %s239
      %s242 = sphi 0, %s241
      %s256 = sphi 0, %s242
      %s262 = sphi 0, %s264
      %s265 = sphi 0, %s262
      %s266 = sphi 0, %s265
      %s282 = sphi 0, %s266
      %s288 = sphi 0, %s290
      %s291 = sphi 0, %s288
      %s292 = sphi 0, %s291
      %s308 = sphi 0, %s292
    $region4: #{tpu_custom_call.1} parent=1 // loop_header_branch
      %35 = sbr.rel (%p33) target = $region8
    $region5: #{tpu_custom_call.1} parent=1 // loop_body
      %s37 = ssub.s32 %s32, 1
      %s38 = ssub.s32 %s32, 2
      %s39 = sadd.s32 %s32, 1
      %s40 = ssub.s32 %s32, %s39
      %p41 = scmp.eq.s32.totalorder %s40, 0
      %s43 = sadd.s32 %s42, 1
      %s44 = scalar_select %p41, %s42, %s43
      %p47 = pneg %p41
      %p48 = scmp.eq.s32.totalorder %s32, 2
      %p49 = por %p47, %p48
      %p50 = scmp.ne.s32.totalorder %s42, %s45
      %p51 = scmp.eq.s32.totalorder %s32, 0
      %p52 = por %p50, %p51
      %p53 = scmp.ne.s32.totalorder %s42, %s45
      %p54 = scmp.eq.s32.totalorder %s37, 2
      %p55 = por %p53, %p54
      %p56 = scmp.ne.s32.totalorder %s45, %s46
      %p57 = scmp.eq.s32.totalorder %s37, 0
      %p58 = por %p56, %p57
      %p59 = scmp.ne.s32.totalorder %s45, %s46
      %p60 = scmp.eq.s32.totalorder %s38, 2
      %p61 = por %p59, %p60
      %p63 = scmp.ne.s32.totalorder %s46, %s62
      %p64 = scmp.eq.s32.totalorder %s38, 0
      %p65 = por %p63, %p64
      %s66 = ssub.s32 %s32, %s39
      %p67 = scmp.eq.s32.totalorder %s66, 0
      %s69 = sadd.s32 %s68, 1
      %s70 = scalar_select %p67, %s68, %s69
      %p73 = pneg %p67
      %p74 = scmp.eq.s32.totalorder %s32, 2
      %p75 = por %p73, %p74
      %p76 = scmp.ne.s32.totalorder %s68, %s71
      %p77 = scmp.eq.s32.totalorder %s32, 0
      %p78 = por %p76, %p77
      %p79 = scmp.ne.s32.totalorder %s68, %s71
      %p80 = scmp.eq.s32.totalorder %s37, 2
      %p81 = por %p79, %p80
      %p82 = scmp.ne.s32.totalorder %s71, %s72
      %p83 = scmp.eq.s32.totalorder %s37, 0
      %p84 = por %p82, %p83
      %p85 = scmp.ne.s32.totalorder %s71, %s72
      %p86 = scmp.eq.s32.totalorder %s38, 2
      %p87 = por %p85, %p86
      %p89 = scmp.ne.s32.totalorder %s72, %s88
      %p90 = scmp.eq.s32.totalorder %s38, 0
      %p91 = por %p89, %p90
      %s93 = sadd.s32 %s92, 1
      %p96 = scmp.eq.s32.totalorder %s32, 2
      %p97 = scmp.ne.s32.totalorder %s92, %s94
      %p98 = scmp.eq.s32.totalorder %s32, 0
      %p99 = por %p97, %p98
      %p100 = scmp.ne.s32.totalorder %s92, %s94
      %p101 = scmp.eq.s32.totalorder %s37, 2
      %p102 = por %p100, %p101
      %p103 = scmp.ne.s32.totalorder %s94, %s95
      %p104 = scmp.eq.s32.totalorder %s37, 0
      %p105 = por %p103, %p104
      %p106 = scmp.ne.s32.totalorder %s94, %s95
      %p107 = scmp.eq.s32.totalorder %s38, 2
      %p108 = por %p106, %p107
      %p110 = scmp.ne.s32.totalorder %s95, %s109
      %p111 = scmp.eq.s32.totalorder %s38, 0
      %p112 = por %p110, %p111
      %s114 = sadd.s32 %s113, 1
      %p117 = scmp.eq.s32.totalorder %s32, 2
      %p118 = scmp.ne.s32.totalorder %s113, %s115
      %p119 = scmp.eq.s32.totalorder %s32, 0
      %p120 = por %p118, %p119
      %p121 = scmp.ne.s32.totalorder %s113, %s115
      %p122 = scmp.eq.s32.totalorder %s37, 2
      %p123 = por %p121, %p122
      %p124 = scmp.ne.s32.totalorder %s115, %s116
      %p125 = scmp.eq.s32.totalorder %s37, 0
      %p126 = por %p124, %p125
      %p127 = scmp.ne.s32.totalorder %s115, %s116
      %p128 = scmp.eq.s32.totalorder %s38, 2
      %p129 = por %p127, %p128
      %p131 = scmp.ne.s32.totalorder %s116, %s130
      %p132 = scmp.eq.s32.totalorder %s38, 0
      %p133 = por %p131, %p132
      %s135 = sadd.s32 %s134, 1
      %p138 = scmp.eq.s32.totalorder %s32, 2
      %p139 = scmp.ne.s32.totalorder %s134, %s136
      %p140 = scmp.eq.s32.totalorder %s32, 0
      %p141 = por %p139, %p140
      %p142 = scmp.ne.s32.totalorder %s134, %s136
      %p143 = scmp.eq.s32.totalorder %s37, 2
      %p144 = por %p142, %p143
      %p145 = scmp.ne.s32.totalorder %s136, %s137
      %p146 = scmp.eq.s32.totalorder %s37, 0
      %p147 = por %p145, %p146
      %p148 = scmp.ne.s32.totalorder %s136, %s137
      %p149 = scmp.eq.s32.totalorder %s38, 2
      %p150 = por %p148, %p149
      %p152 = scmp.ne.s32.totalorder %s137, %s151
      %p153 = scmp.eq.s32.totalorder %s38, 0
      %p154 = por %p152, %p153
      %s156 = sadd.s32 %s155, 1
      %p159 = scmp.eq.s32.totalorder %s32, 2
      %p160 = scmp.ne.s32.totalorder %s155, %s157
      %p161 = scmp.eq.s32.totalorder %s32, 0
      %p162 = por %p160, %p161
      %p163 = scmp.ne.s32.totalorder %s155, %s157
      %p164 = scmp.eq.s32.totalorder %s37, 2
      %p165 = por %p163, %p164
      %p166 = scmp.ne.s32.totalorder %s157, %s158
      %p167 = scmp.eq.s32.totalorder %s37, 0
      %p168 = por %p166, %p167
      %p169 = scmp.ne.s32.totalorder %s157, %s158
      %p170 = scmp.eq.s32.totalorder %s38, 2
      %p171 = por %p169, %p170
      %p173 = scmp.ne.s32.totalorder %s158, %s172
      %p174 = scmp.eq.s32.totalorder %s38, 0
      %p175 = por %p173, %p174
      %s177 = sadd.s32 %s176, 1
      %p180 = scmp.eq.s32.totalorder %s32, 2
      %p181 = scmp.ne.s32.totalorder %s176, %s178
      %p182 = scmp.eq.s32.totalorder %s32, 0
      %p183 = por %p181, %p182
      %p184 = scmp.ne.s32.totalorder %s176, %s178
      %p185 = scmp.eq.s32.totalorder %s37, 2
      %p186 = por %p184, %p185
      %p187 = scmp.ne.s32.totalorder %s178, %s179
      %p188 = scmp.eq.s32.totalorder %s37, 0
      %p189 = por %p187, %p188
      %p190 = scmp.ne.s32.totalorder %s178, %s179
      %p191 = scmp.eq.s32.totalorder %s38, 2
      %p192 = por %p190, %p191
      %p194 = scmp.ne.s32.totalorder %s179, %s193
      %p195 = scmp.eq.s32.totalorder %s38, 0
      %p196 = por %p194, %p195
      %s198 = sadd.s32 %s197, 1
      %p201 = scmp.eq.s32.totalorder %s32, 2
      %p202 = scmp.ne.s32.totalorder %s197, %s199
      %p203 = scmp.eq.s32.totalorder %s32, 0
      %p204 = por %p202, %p203
      %p205 = scmp.ne.s32.totalorder %s197, %s199
      %p206 = scmp.eq.s32.totalorder %s37, 2
      %p207 = por %p205, %p206
      %p208 = scmp.ne.s32.totalorder %s199, %s200
      %p209 = scmp.eq.s32.totalorder %s37, 0
      %p210 = por %p208, %p209
      %p211 = scmp.ne.s32.totalorder %s199, %s200
      %p212 = scmp.eq.s32.totalorder %s38, 2
      %p213 = por %p211, %p212
      %p215 = scmp.ne.s32.totalorder %s200, %s214
      %p216 = scmp.eq.s32.totalorder %s38, 0
      %p217 = por %p215, %p216
      %s219 = sadd.s32 %s218, 1
      %p222 = scmp.eq.s32.totalorder %s32, 2
      %p223 = scmp.ne.s32.totalorder %s218, %s220
      %p224 = scmp.eq.s32.totalorder %s32, 0
      %p225 = por %p223, %p224
      %p226 = scmp.ne.s32.totalorder %s218, %s220
      %p227 = scmp.eq.s32.totalorder %s37, 2
      %p228 = por %p226, %p227
      %p229 = scmp.ne.s32.totalorder %s220, %s221
      %p230 = scmp.eq.s32.totalorder %s37, 0
      %p231 = por %p229, %p230
      %p232 = scmp.ne.s32.totalorder %s220, %s221
      %p233 = scmp.eq.s32.totalorder %s38, 2
      %p234 = por %p232, %p233
      %p236 = scmp.ne.s32.totalorder %s221, %s235
      %p237 = scmp.eq.s32.totalorder %s38, 0
      %p238 = por %p236, %p237
      %s240 = sadd.s32 %s239, 1
      %p243 = scmp.eq.s32.totalorder %s32, 2
      %p244 = scmp.ne.s32.totalorder %s239, %s241
      %p245 = scmp.eq.s32.totalorder %s32, 0
      %p246 = por %p244, %p245
      %p247 = scmp.ne.s32.totalorder %s239, %s241
      %p248 = scmp.eq.s32.totalorder %s37, 2
      %p249 = por %p247, %p248
      %p250 = scmp.ne.s32.totalorder %s241, %s242
      %p251 = scmp.eq.s32.totalorder %s37, 0
      %p252 = por %p250, %p251
      %p253 = scmp.ne.s32.totalorder %s241, %s242
      %p254 = scmp.eq.s32.totalorder %s38, 2
      %p255 = por %p253, %p254
      %p257 = scmp.ne.s32.totalorder %s242, %s256
      %p258 = scmp.eq.s32.totalorder %s38, 0
      %p259 = por %p257, %p258
      %s260 = ssub.s32 %s32, %s39
      %p261 = scmp.eq.s32.totalorder %s260, 0
      %s263 = sadd.s32 %s262, 1
      %s264 = scalar_select %p261, %s262, %s263
      %p267 = pneg %p261
      %p268 = scmp.eq.s32.totalorder %s32, 2
      %p269 = por %p267, %p268
      %p270 = scmp.ne.s32.totalorder %s262, %s265
      %p271 = scmp.eq.s32.totalorder %s32, 0
      %p272 = por %p270, %p271
      %p273 = scmp.ne.s32.totalorder %s262, %s265
      %p274 = scmp.eq.s32.totalorder %s37, 2
      %p275 = por %p273, %p274
      %p276 = scmp.ne.s32.totalorder %s265, %s266
      %p277 = scmp.eq.s32.totalorder %s37, 0
      %p278 = por %p276, %p277
      %p279 = scmp.ne.s32.totalorder %s265, %s266
      %p280 = scmp.eq.s32.totalorder %s38, 2
      %p281 = por %p279, %p280
      %p283 = scmp.ne.s32.totalorder %s266, %s282
      %p284 = scmp.eq.s32.totalorder %s38, 0
      %p285 = por %p283, %p284
      %s286 = ssub.s32 %s32, %s39
      %p287 = scmp.eq.s32.totalorder %s286, 0
      %s289 = sadd.s32 %s288, 1
      %s290 = scalar_select %p287, %s288, %s289
      %p293 = pneg %p287
      %p294 = scmp.eq.s32.totalorder %s32, 2
      %p295 = por %p293, %p294
      %p296 = scmp.ne.s32.totalorder %s288, %s291
      %p297 = scmp.eq.s32.totalorder %s32, 0
      %p298 = por %p296, %p297
      %p299 = scmp.ne.s32.totalorder %s288, %s291
      %p300 = scmp.eq.s32.totalorder %s37, 2
      %p301 = por %p299, %p300
      %p302 = scmp.ne.s32.totalorder %s291, %s292
      %p303 = scmp.eq.s32.totalorder %s37, 0
      %p304 = por %p302, %p303
      %p305 = scmp.ne.s32.totalorder %s291, %s292
      %p306 = scmp.eq.s32.totalorder %s38, 2
      %p307 = por %p305, %p306
      %p309 = scmp.ne.s32.totalorder %s292, %s308
      %p310 = scmp.eq.s32.totalorder %s38, 0
      %p311 = por %p309, %p310
      %p312 = scmp.le.s32.totalorder 1, %s32
      %p313 = scmp.lt.s32.totalorder %s32, 4
      %p314 = pnand %p312, %p313
      %p315 = pneg %p314
      // Predicated region
      $region9: #{tpu_custom_call.1} parent=5 // pred_check
        _
      $region10: #{tpu_custom_call.1} parent=5 // pred_check_branch
        %317 = sbr.rel (%p314) target = $region12
      $region11: #{tpu_custom_call.1} parent=5 // pred_region
        %s318 = ssub.s32 %s32, 1
        // Predicated region
        $region13: #{tpu_custom_call.1} parent=11 // pred_check
          %p319 = pneg %p105
        $region14: #{tpu_custom_call.1} parent=11 // pred_check_branch
          %321 = sbr.rel (%p319) target = $region16
        $region15: #{tpu_custom_call.1} parent=11 // pred_region
          %s323 = ssub.s32 2048, 2048
          %324 = vsyncadd [#allocation6], %s323
          %s325 = sshll.u32 [#allocation7], 4
          %s326 = int_to_ptr.vmem [resolvable:$true] %s325
          %331 = dma.hbm_to_vmem [thread:$0]  %s2, 2048, %s326, [#allocation6], 128, 128, 8
        $region16: #{tpu_custom_call.1} parent=11 // pred_fallthru
          _
        // Predicated region
        $region17: #{tpu_custom_call.1} parent=11 // pred_check
          %p332 = pneg %p126
        $region18: #{tpu_custom_call.1} parent=11 // pred_check_branch
          %334 = sbr.rel (%p332) target = $region20
        $region19: #{tpu_custom_call.1} parent=11 // pred_region
          _
        $region20: #{tpu_custom_call.1} parent=11 // pred_fallthru
          _
        // Predicated region
        $region21: #{tpu_custom_call.1} parent=11 // pred_check
          %p335 = pneg %p147
        $region22: #{tpu_custom_call.1} parent=11 // pred_check_branch
          %337 = sbr.rel (%p335) target = $region24
        $region23: #{tpu_custom_call.1} parent=11 // pred_region
          %s339 = ssub.s32 2048, 2048
          %340 = vsyncadd [#allocation9], %s339
          %s341 = sshll.u32 [#allocation8], 4
          %s342 = int_to_ptr.vmem [resolvable:$true] %s341
          %347 = dma.hbm_to_vmem [thread:$0]  %s4, 2048, %s342, [#allocation9], 64, 64, 4
        $region24: #{tpu_custom_call.1} parent=11 // pred_fallthru
          _
        // Predicated region
        $region25: #{tpu_custom_call.1} parent=11 // pred_check
          %p348 = pneg %p168
        $region26: #{tpu_custom_call.1} parent=11 // pred_check_branch
          %350 = sbr.rel (%p348) target = $region28
        $region27: #{tpu_custom_call.1} parent=11 // pred_region
          _
        $region28: #{tpu_custom_call.1} parent=11 // pred_fallthru
          _
        // Predicated region
        $region29: #{tpu_custom_call.1} parent=11 // pred_check
          %p351 = pneg %p189
        $region30: #{tpu_custom_call.1} parent=11 // pred_check_branch
          %353 = sbr.rel (%p351) target = $region32
        $region31: #{tpu_custom_call.1} parent=11 // pred_region
          %s355 = ssub.s32 2048, 2048
          %356 = vsyncadd [#allocation9], %s355
          %s357 = sshll.u32 [#allocation10], 4
          %s358 = int_to_ptr.vmem [resolvable:$true] %s357
          %363 = dma.hbm_to_vmem [thread:$0]  %s6, 2048, %s358, [#allocation9], 128, 128, 8
        $region32: #{tpu_custom_call.1} parent=11 // pred_fallthru
          _
        // Predicated region
        $region33: #{tpu_custom_call.1} parent=11 // pred_check
          %p364 = pneg %p210
        $region34: #{tpu_custom_call.1} parent=11 // pred_check_branch
          %366 = sbr.rel (%p364) target = $region36
        $region35: #{tpu_custom_call.1} parent=11 // pred_region
          _
        $region36: #{tpu_custom_call.1} parent=11 // pred_fallthru
          _
        // Predicated region
        $region37: #{tpu_custom_call.1} parent=11 // pred_check
          %p367 = pneg %p231
        $region38: #{tpu_custom_call.1} parent=11 // pred_check_branch
          %369 = sbr.rel (%p367) target = $region40
        $region39: #{tpu_custom_call.1} parent=11 // pred_region
          %s371 = ssub.s32 2048, 2048
          %372 = vsyncadd [#allocation12], %s371
          %s373 = sshll.u32 [#allocation11], 4
          %s374 = int_to_ptr.vmem [resolvable:$true] %s373
          %379 = dma.hbm_to_vmem [thread:$0]  %s8, 2048, %s374, [#allocation12], 64, 64, 4
        $region40: #{tpu_custom_call.1} parent=11 // pred_fallthru
          _
        // Predicated region
        $region41: #{tpu_custom_call.1} parent=11 // pred_check
          %p380 = pneg %p252
        $region42: #{tpu_custom_call.1} parent=11 // pred_check_branch
          %382 = sbr.rel (%p380) target = $region44
        $region43: #{tpu_custom_call.1} parent=11 // pred_region
          _
        $region44: #{tpu_custom_call.1} parent=11 // pred_fallthru
          _
      $region12: #{tpu_custom_call.1} parent=5 // pred_fallthru
        _
      %p383 = scmp.lt.s32.totalorder %s32, 3
      // Predicated region
      $region45: #{tpu_custom_call.1} parent=5 // pred_check
        %p384 = pneg %p383
      $region46: #{tpu_custom_call.1} parent=5 // pred_check_branch
        %386 = sbr.rel (%p384) target = $region48
      $region47: #{tpu_custom_call.1} parent=5 // pred_region
        // Predicated region
        $region49: #{tpu_custom_call.1} parent=47 // pred_check
          %p387 = pneg %p52
        $region50: #{tpu_custom_call.1} parent=47 // pred_check_branch
          %389 = sbr.rel (%p387) target = $region52
        $region51: #{tpu_custom_call.1} parent=47 // pred_region
          %s390 = sand.u32 %s42, 1
          %s391 = scalar_lea.sflag [#allocation3], %s390
          %s392 = sand.u32 %s42, 1
          %s393 = smul.addr %s392, 64
          %s394 = scalar_lea.vmem [#allocation2], %s393
          %s395 = smul.u32 8, %s32
          %s396 = ssub.s32 18, %s395
          %p397 = scmp.lt.s32.totalorder %s396, 8
          %s398 = scalar_select %p397, %s396, 8
          %s399 = smul.u32 128, %s398
          %s401 = ssub.s32 1024, %s399
          %402 = vsyncadd %s391, %s401
          %p403 = scmp.ne.s32.totalorder 0, %s399
          %s404 = smul.addr %s395, 128
          %s405 = scalar_lea.hbm %s0, %s404
          %s406 = smul.u32 8, %s398
          %s407 = sshll.u32 %s394, 4
          %s408 = int_to_ptr.vmem [resolvable:$true] %s407
          %s409 = sshll.u32 %s406, 4
          %413 = dma.hbm_to_vmem [thread:$0]  (%p403), %s405, %s409, %s408, %s391, 128, 128, 8
        $region52: #{tpu_custom_call.1} parent=47 // pred_fallthru
          _
        // Predicated region
        $region53: #{tpu_custom_call.1} parent=47 // pred_check
          %p414 = pneg %p78
        $region54: #{tpu_custom_call.1} parent=47 // pred_check_branch
          %416 = sbr.rel (%p414) target = $region56
        $region55: #{tpu_custom_call.1} parent=47 // pred_region
          %s417 = sand.u32 %s32, 1
          %s418 = scalar_lea.sflag [#allocation6], %s417
          %s419 = sand.u32 %s68, 1
          %s420 = smul.addr %s419, 64
          %s421 = scalar_lea.vmem [#allocation5], %s420
          %s422 = smul.u32 8, %s32
          %s423 = ssub.s32 18, %s422
          %p424 = scmp.lt.s32.totalorder %s423, 8
          %s425 = scalar_select %p424, %s423, 8
          %s426 = smul.u32 128, %s425
          %s428 = ssub.s32 1024, %s426
          %429 = vsyncadd %s418, %s428
          %p430 = scmp.ne.s32.totalorder 0, %s426
          %s431 = smul.addr %s422, 128
          %s432 = scalar_lea.hbm %s1, %s431
          %s433 = smul.u32 8, %s425
          %s434 = sshll.u32 %s421, 4
          %s435 = int_to_ptr.vmem [resolvable:$true] %s434
          %s436 = sshll.u32 %s433, 4
          %440 = dma.hbm_to_vmem [thread:$0]  (%p430), %s432, %s436, %s435, %s418, 128, 128, 8
        $region56: #{tpu_custom_call.1} parent=47 // pred_fallthru
          _
      $region48: #{tpu_custom_call.1} parent=5 // pred_fallthru
        _
      %p441 = scmp.le.s32.totalorder 1, %s32
      %p442 = scmp.lt.s32.totalorder %s32, 4
      %p443 = pnand %p441, %p442
      %p444 = pneg %p443
      // Predicated region
      $region57: #{tpu_custom_call.1} parent=5 // pred_check
        _
      $region58: #{tpu_custom_call.1} parent=5 // pred_check_branch
        %446 = sbr.rel (%p443) target = $region60
      $region59: #{tpu_custom_call.1} parent=5 // pred_region
        %s447 = ssub.s32 %s32, 1
        %s448 = sand.u32 %s45, 1
        %s449 = scalar_lea.sflag [#allocation3], %s448
        %s450 = sand.u32 %s45, 1
        %s451 = smul.addr %s450, 64
        %s452 = scalar_lea.vmem [#allocation2], %s451
        // Predicated region
        $region61: #{tpu_custom_call.1} parent=59 // pred_check
          %p453 = pneg %p58
        $region62: #{tpu_custom_call.1} parent=59 // pred_check_branch
          %455 = sbr.rel (%p453) target = $region64
        $region63: #{tpu_custom_call.1} parent=59 // pred_region
          %456 = dma.done %s449, 1024
        $region64: #{tpu_custom_call.1} parent=59 // pred_fallthru
          _
        %s457 = sand.u32 %s37, 1
        %s458 = scalar_lea.sflag [#allocation6], %s457
        %s459 = sand.u32 %s71, 1
        %s460 = smul.addr %s459, 64
        %s461 = scalar_lea.vmem [#allocation5], %s460
        // Predicated region
        $region65: #{tpu_custom_call.1} parent=59 // pred_check
          %p462 = pneg %p84
        $region66: #{tpu_custom_call.1} parent=59 // pred_check_branch
          %464 = sbr.rel (%p462) target = $region68
        $region67: #{tpu_custom_call.1} parent=59 // pred_region
          %465 = dma.done %s458, 1024
        $region68: #{tpu_custom_call.1} parent=59 // pred_fallthru
          _
        // Predicated region
        $region69: #{tpu_custom_call.1} parent=59 // pred_check
          %p466 = pneg %p105
        $region70: #{tpu_custom_call.1} parent=59 // pred_check_branch
          %468 = sbr.rel (%p466) target = $region72
        $region71: #{tpu_custom_call.1} parent=59 // pred_region
          %469 = dma.done [#allocation6], 2048
        $region72: #{tpu_custom_call.1} parent=59 // pred_fallthru
          _
        // Predicated region
        $region73: #{tpu_custom_call.1} parent=59 // pred_check
          %p470 = pneg %p147
        $region74: #{tpu_custom_call.1} parent=59 // pred_check_branch
          %472 = sbr.rel (%p470) target = $region76
        $region75: #{tpu_custom_call.1} parent=59 // pred_region
          %473 = dma.done [#allocation9], 2048
        $region76: #{tpu_custom_call.1} parent=59 // pred_fallthru
          _
        // Predicated region
        $region77: #{tpu_custom_call.1} parent=59 // pred_check
          %p474 = pneg %p189
        $region78: #{tpu_custom_call.1} parent=59 // pred_check_branch
          %476 = sbr.rel (%p474) target = $region80
        $region79: #{tpu_custom_call.1} parent=59 // pred_region
          %477 = dma.done [#allocation9], 2048
        $region80: #{tpu_custom_call.1} parent=59 // pred_fallthru
          _
        // Predicated region
        $region81: #{tpu_custom_call.1} parent=59 // pred_check
          %p478 = pneg %p231
        $region82: #{tpu_custom_call.1} parent=59 // pred_check_branch
          %480 = sbr.rel (%p478) target = $region84
        $region83: #{tpu_custom_call.1} parent=59 // pred_region
          %481 = dma.done [#allocation12], 2048
        $region84: #{tpu_custom_call.1} parent=59 // pred_fallthru
          _
        %s482 = sand.u32 %s45, 1
        %s483 = scalar_lea.sflag [#allocation3], %s482
        %s484 = sand.u32 %s45, 1
        %s485 = smul.addr %s484, 64
        %s486 = scalar_lea.vmem [#allocation2], %s485
        %p487 = pneg %p58
        %p488 = pneg %p55
        %s489 = sand.u32 %s37, 1
        %s490 = scalar_lea.sflag [#allocation6], %s489
        %s491 = sand.u32 %s71, 1
        %s492 = smul.addr %s491, 64
        %s493 = scalar_lea.vmem [#allocation5], %s492
        %p494 = pneg %p84
        %p495 = pneg %p81
        %p496 = pneg %p105
        %p497 = pneg %p102
        %p498 = pneg %p126
        %p499 = pneg %p123
        %p500 = pneg %p147
        %p501 = pneg %p144
        %p502 = pneg %p168
        %p503 = pneg %p165
        %p504 = pneg %p189
        %p505 = pneg %p186
        %p506 = pneg %p210
        %p507 = pneg %p207
        %p508 = pneg %p231
        %p509 = pneg %p228
        %p510 = pneg %p252
        %p511 = pneg %p249
        %p512 = pneg %p278
        %p513 = pneg %p275
        %s514 = sand.u32 %s265, 1
        %s515 = scalar_lea.sflag [#allocation4], %s514
        %s516 = sand.u32 %s265, 1
        %s517 = smul.addr %s516, 64
        %s518 = scalar_lea.vmem [#allocation13], %s517
        %p519 = pneg %p304
        %p520 = pneg %p301
        %s521 = sand.u32 %s291, 1
        %s522 = scalar_lea.sflag [#allocation15], %s521
        %s523 = sand.u32 %s291, 1
        %s524 = smul.addr %s523, 64
        %s525 = scalar_lea.vmem [#allocation14], %s524
        %s526 = smul.u32 8, %s37
        %s527 = ssub.s32 18, %s526
        %p528 = scmp.lt.s32.totalorder %s527, 8
        %s529 = scalar_select %p528, %s527, 8
        %s530 = smul.u32 128, %s529
        %s531 = smul.u32 8, %s37
        %s532 = ssub.s32 18, %s531
        %p533 = scmp.lt.s32.totalorder %s532, 8
        %s534 = scalar_select %p533, %s532, 8
        %s535 = smul.u32 128, %s534
        %s536 = smul.u32 8, %s37
        %s537 = ssub.s32 18, %s536
        %p538 = scmp.lt.s32.totalorder %s537, 8
        %s539 = scalar_select %p538, %s537, 8
        %s540 = smul.u32 128, %s539
        %s541 = smul.u32 8, %s37
        %s542 = ssub.s32 18, %s541
        %p543 = scmp.lt.s32.totalorder %s542, 8
        %s544 = scalar_select %p543, %s542, 8
        %s545 = smul.u32 128, %s544
        %v547 = vld [vmem:[%s452] sm:$0xff]
        %v548 = vld [vmem:[%s452 + $0x8] sm:$0xff]
        %v549 = vld [vmem:[%s452 + $0x10] sm:$0xff]
        %v550 = vld [vmem:[%s452 + $0x18] sm:$0xff]
        %v551 = vld [vmem:[%s452 + $0x20] sm:$0xff]
        %v552 = vld [vmem:[%s452 + $0x28] sm:$0xff]
        %v553 = vld [vmem:[%s452 + $0x30] sm:$0xff]
        %v554 = vld [vmem:[%s452 + $0x38] sm:$0xff]
        %v555 = vpack.c.bf16 %v548, %v547
        %v556 = vpack.c.bf16 %v550, %v549
        %v557 = vpack.c.bf16 %v552, %v551
        %v558 = vpack.c.bf16 %v554, %v553
        %v559 = vld [vmem:[#allocation7] sm:$0xff]
        %v560 = vld [vmem:[#allocation7 + $0x8] sm:$0xff]
        %v561 = vld [vmem:[#allocation7 + $0x10] sm:$0xff]
        %v562 = vld [vmem:[#allocation7 + $0x18] sm:$0xff]
        %v563 = vld [vmem:[#allocation7 + $0x20] sm:$0xff]
        %v564 = vld [vmem:[#allocation7 + $0x28] sm:$0xff]
        %v565 = vld [vmem:[#allocation7 + $0x30] sm:$0xff]
        %v566 = vld [vmem:[#allocation7 + $0x38] sm:$0xff]
        %v567 = vld [vmem:[#allocation7 + $0x40] sm:$0xff]
        %v568 = vld [vmem:[#allocation7 + $0x48] sm:$0xff]
        %v569 = vld [vmem:[#allocation7 + $0x50] sm:$0xff]
        %v570 = vld [vmem:[#allocation7 + $0x58] sm:$0xff]
        %v571 = vld [vmem:[#allocation7 + $0x60] sm:$0xff]
        %v572 = vld [vmem:[#allocation7 + $0x68] sm:$0xff]
        %v573 = vld [vmem:[#allocation7 + $0x70] sm:$0xff]
        %v574 = vld [vmem:[#allocation7 + $0x78] sm:$0xff]
        %v575 = vld [vmem:[%s3] sm:$0x3]
        %v577 = vlaneseq
        %v578 = vshrl.u32 %v577, 7
        %v579 = vsub.s32 0, %v578
        %v580 = vrot.slane %v575, %v579
        %v581 = vlaneseq
        %v582 = vshrl.u32 %v581, 7
        %v583 = vsub.s32 1, %v582
        %v584 = vrot.slane %v575, %v583
        %v603 = vunpack.c.l.b16 %v559
        %v604 = vunpack.c.h.b16 %v559
        %v605 = vunpack.c.l.b16 %v560
        %v606 = vunpack.c.h.b16 %v560
        %v607 = vunpack.c.l.b16 %v561
        %v608 = vunpack.c.h.b16 %v561
        %v609 = vunpack.c.l.b16 %v562
        %v610 = vunpack.c.h.b16 %v562
        %v611 = vunpack.c.l.b16 %v563
        %v612 = vunpack.c.h.b16 %v563
        %v613 = vunpack.c.l.b16 %v564
        %v614 = vunpack.c.h.b16 %v564
        %v615 = vunpack.c.l.b16 %v565
        %v616 = vunpack.c.h.b16 %v565
        %v617 = vunpack.c.l.b16 %v566
        %v618 = vunpack.c.h.b16 %v566
        %v619 = vunpack.c.l.b16 %v567
        %v620 = vunpack.c.h.b16 %v567
        %v621 = vunpack.c.l.b16 %v568
        %v622 = vunpack.c.h.b16 %v568
        %v623 = vunpack.c.l.b16 %v569
        %v624 = vunpack.c.h.b16 %v569
        %v625 = vunpack.c.l.b16 %v570
        %v626 = vunpack.c.h.b16 %v570
        %v627 = vunpack.c.l.b16 %v571
        %v628 = vunpack.c.h.b16 %v571
        %v629 = vunpack.c.l.b16 %v572
        %v630 = vunpack.c.h.b16 %v572
        %v631 = vunpack.c.l.b16 %v573
        %v632 = vunpack.c.h.b16 %v573
        %v633 = vunpack.c.l.b16 %v574
        %v634 = vunpack.c.h.b16 %v574
        %v635 = vpack.c.b16 %v605, %v603
        %v636 = vpack.c.b16 %v606, %v604
        %v637 = vpack.c.b16 %v609, %v607
        %v638 = vpack.c.b16 %v610, %v608
        %v639 = vpack.c.b16 %v613, %v611
        %v640 = vpack.c.b16 %v614, %v612
        %v641 = vpack.c.b16 %v617, %v615
        %v642 = vpack.c.b16 %v618, %v616
        %v643 = vpack.c.b16 %v621, %v619
        %v644 = vpack.c.b16 %v622, %v620
        %v645 = vpack.c.b16 %v625, %v623
        %v646 = vpack.c.b16 %v626, %v624
        %v647 = vpack.c.b16 %v629, %v627
        %v648 = vpack.c.b16 %v630, %v628
        %v649 = vpack.c.b16 %v633, %v631
        %v650 = vpack.c.b16 %v634, %v632
        %667 = vmatprep.subr.bf16.mxu0 %v636
        %668 = vmatpush1.bf16.msra.mxu0 %v635
        %669 = vmatprep.subr.bf16.mxu0 %v638
        %670 = vmatpush1.bf16.msra.mxu0 %v637
        %671 = vmatprep.subr.bf16.mxu0 %v640
        %672 = vmatpush1.bf16.msra.mxu0 %v639
        %673 = vmatprep.subr.bf16.mxu0 %v642
        %674 = vmatpush1.bf16.msra.mxu0 %v641
        %675 = vmatprep.subr.bf16.mxu0 %v644
        %676 = vmatpush1.bf16.msra.mxu0 %v643
        %677 = vmatprep.subr.bf16.mxu0 %v646
        %678 = vmatpush1.bf16.msra.mxu0 %v645
        %679 = vmatprep.subr.bf16.mxu0 %v648
        %680 = vmatpush1.bf16.msra.mxu0 %v647
        %681 = vmatprep.subr.bf16.mxu0 %v650
        %682 = vmatpush1.bf16.msra.mxu0 %v649
        %683 = vmatprep.subr.bf16.mxu0 0
        %684 = vmatpush1.bf16.msra.mxu0 0
        %685 = vmatprep.subr.bf16.mxu0 0
        %686 = vmatpush1.bf16.msra.mxu0 0
        %687 = vmatprep.subr.bf16.mxu0 0
        %688 = vmatpush1.bf16.msra.mxu0 0
        %689 = vmatprep.subr.bf16.mxu0 0
        %690 = vmatpush1.bf16.msra.mxu0 0
        %691 = vmatprep.subr.bf16.mxu0 0
        %692 = vmatpush1.bf16.msra.mxu0 0
        %693 = vmatprep.subr.bf16.mxu0 0
        %694 = vmatpush1.bf16.msra.mxu0 0
        %695 = vmatprep.subr.bf16.mxu0 0
        %696 = vmatpush1.bf16.msra.mxu0 0
        %697 = vmatprep.subr.bf16.mxu0 0
        %698 = vmatpush1.bf16.msra.mxu0 0
        %699 = vmatprep.mubr.bf16.mxu0 0
        %700 = vmatmul.mubr.bf16.gmra.mrb[0].mxu0 %v555
        %v701 = vpop.f32.mrb[0].mxu0
        %v702 = vadd.f32 %v580, %v701
        %v703 = vpop.f32.mrb[0].mxu0
        %v704 = vadd.f32 %v584, %v703
        %v705 = vpop.f32.mrb[0].mxu0
        %v706 = vadd.f32 %v580, %v705
        %v707 = vpop.f32.mrb[0].mxu0
        %v708 = vadd.f32 %v584, %v707
        %709 = vmatprep.mubr.bf16.mxu0 0
        %710 = vmatmul.mubr.bf16.gmra.mrb[0].mxu0 %v556
        %v711 = vpop.f32.mrb[0].mxu0
        %v712 = vadd.f32 %v580, %v711
        %v713 = vpop.f32.mrb[0].mxu0
        %v714 = vadd.f32 %v584, %v713
        %v715 = vpop.f32.mrb[0].mxu0
        %v716 = vadd.f32 %v580, %v715
        %v717 = vpop.f32.mrb[0].mxu0
        %v718 = vadd.f32 %v584, %v717
        %719 = vmatprep.mubr.bf16.mxu0 0
        %720 = vmatmul.mubr.bf16.gmra.mrb[0].mxu0 %v557
        %v721 = vpop.f32.mrb[0].mxu0
        %v722 = vadd.f32 %v580, %v721
        %v723 = vpop.f32.mrb[0].mxu0
        %v724 = vadd.f32 %v584, %v723
        %v725 = vpop.f32.mrb[0].mxu0
        %v726 = vadd.f32 %v580, %v725
        %v727 = vpop.f32.mrb[0].mxu0
        %v728 = vadd.f32 %v584, %v727
        %729 = vmatprep.mubr.bf16.mxu0 0
        %730 = vmatmul.mubr.bf16.gmra.mrb[0].mxu0 %v558
        %v731 = vpop.f32.mrb[0].mxu0
        %v732 = vadd.f32 %v580, %v731
        %v733 = vpop.f32.mrb[0].mxu0
        %v734 = vadd.f32 %v584, %v733
        %v735 = vpop.f32.mrb[0].mxu0
        %v736 = vadd.f32 %v580, %v735
        %v737 = vpop.f32.mrb[0].mxu0
        %v738 = vadd.f32 %v584, %v737
        %739 = vdwg.mxu0
        %v740 = vmul.f32 %v702, 0.5
        %v741 = vmul.f32 %v704, 0.5
        %v742 = vmul.f32 %v706, 0.5
        %v743 = vmul.f32 %v708, 0.5
        %v744 = vmul.f32 %v712, 0.5
        %v745 = vmul.f32 %v714, 0.5
        %v746 = vmul.f32 %v716, 0.5
        %v747 = vmul.f32 %v718, 0.5
        %v748 = vmul.f32 %v722, 0.5
        %v749 = vmul.f32 %v724, 0.5
        %v750 = vmul.f32 %v726, 0.5
        %v751 = vmul.f32 %v728, 0.5
        %v752 = vmul.f32 %v732, 0.5
        %v753 = vmul.f32 %v734, 0.5
        %v754 = vmul.f32 %v736, 0.5
        %v755 = vmul.f32 %v738, 0.5
        %v756 = vmul.f32 %v702, 0.044715
        %v757 = vmul.f32 %v704, 0.044715
        %v758 = vmul.f32 %v706, 0.044715
        %v759 = vmul.f32 %v708, 0.044715
        %v760 = vmul.f32 %v712, 0.044715
        %v761 = vmul.f32 %v714, 0.044715
        %v762 = vmul.f32 %v716, 0.044715
        %v763 = vmul.f32 %v718, 0.044715
        %v764 = vmul.f32 %v722, 0.044715
        %v765 = vmul.f32 %v724, 0.044715
        %v766 = vmul.f32 %v726, 0.044715
        %v767 = vmul.f32 %v728, 0.044715
        %v768 = vmul.f32 %v732, 0.044715
        %v769 = vmul.f32 %v734, 0.044715
        %v770 = vmul.f32 %v736, 0.044715
        %v771 = vmul.f32 %v738, 0.044715
        %v772 = vmul.f32 %v756, %v702
        %v773 = vmul.f32 %v757, %v704
        %v774 = vmul.f32 %v758, %v706
        %v775 = vmul.f32 %v759, %v708
        %v776 = vmul.f32 %v760, %v712
        %v777 = vmul.f32 %v761, %v714
        %v778 = vmul.f32 %v762, %v716
        %v779 = vmul.f32 %v763, %v718
        %v780 = vmul.f32 %v764, %v722
        %v781 = vmul.f32 %v765, %v724
        %v782 = vmul.f32 %v766, %v726
        %v783 = vmul.f32 %v767, %v728
        %v784 = vmul.f32 %v768, %v732
        %v785 = vmul.f32 %v769, %v734
        %v786 = vmul.f32 %v770, %v736
        %v787 = vmul.f32 %v771, %v738
        %v788 = vmul.f32 %v772, %v702
        %v789 = vmul.f32 %v773, %v704
        %v790 = vmul.f32 %v774, %v706
        %v791 = vmul.f32 %v775, %v708
        %v792 = vmul.f32 %v776, %v712
        %v793 = vmul.f32 %v777, %v714
        %v794 = vmul.f32 %v778, %v716
        %v795 = vmul.f32 %v779, %v718
        %v796 = vmul.f32 %v780, %v722
        %v797 = vmul.f32 %v781, %v724
        %v798 = vmul.f32 %v782, %v726
        %v799 = vmul.f32 %v783, %v728
        %v800 = vmul.f32 %v784, %v732
        %v801 = vmul.f32 %v785, %v734
        %v802 = vmul.f32 %v786, %v736
        %v803 = vmul.f32 %v787, %v738
        %v804 = vadd.f32 %v702, %v788
        %v805 = vadd.f32 %v704, %v789
        %v806 = vadd.f32 %v706, %v790
        %v807 = vadd.f32 %v708, %v791
        %v808 = vadd.f32 %v712, %v792
        %v809 = vadd.f32 %v714, %v793
        %v810 = vadd.f32 %v716, %v794
        %v811 = vadd.f32 %v718, %v795
        %v812 = vadd.f32 %v722, %v796
        %v813 = vadd.f32 %v724, %v797
        %v814 = vadd.f32 %v726, %v798
        %v815 = vadd.f32 %v728, %v799
        %v816 = vadd.f32 %v732, %v800
        %v817 = vadd.f32 %v734, %v801
        %v818 = vadd.f32 %v736, %v802
        %v819 = vadd.f32 %v738, %v803
        %v820 = vmul.f32 %v804, 0.7978846
        %v821 = vmul.f32 %v805, 0.7978846
        %v822 = vmul.f32 %v806, 0.7978846
        %v823 = vmul.f32 %v807, 0.7978846
        %v824 = vmul.f32 %v808, 0.7978846
        %v825 = vmul.f32 %v809, 0.7978846
        %v826 = vmul.f32 %v810, 0.7978846
        %v827 = vmul.f32 %v811, 0.7978846
        %v828 = vmul.f32 %v812, 0.7978846
        %v829 = vmul.f32 %v813, 0.7978846
        %v830 = vmul.f32 %v814, 0.7978846
        %v831 = vmul.f32 %v815, 0.7978846
        %v832 = vmul.f32 %v816, 0.7978846
        %v833 = vmul.f32 %v817, 0.7978846
        %v834 = vmul.f32 %v818, 0.7978846
        %v835 = vmul.f32 %v819, 0.7978846
        %v836 = vtanh.pop %v820
        %v837 = vtanh.pop %v821
        %v838 = vtanh.pop %v822
        %v839 = vtanh.pop %v823
        %v840 = vtanh.pop %v824
        %v841 = vtanh.pop %v825
        %v842 = vtanh.pop %v826
        %v843 = vtanh.pop %v827
        %v844 = vtanh.pop %v828
        %v845 = vtanh.pop %v829
        %v846 = vtanh.pop %v830
        %v847 = vtanh.pop %v831
        %v848 = vtanh.pop %v832
        %v849 = vtanh.pop %v833
        %v850 = vtanh.pop %v834
        %v851 = vtanh.pop %v835
        %v852 = vadd.f32 %v836, 1.0
        %v853 = vadd.f32 %v837, 1.0
        %v854 = vadd.f32 %v838, 1.0
        %v855 = vadd.f32 %v839, 1.0
        %v856 = vadd.f32 %v840, 1.0
        %v857 = vadd.f32 %v841, 1.0
        %v858 = vadd.f32 %v842, 1.0
        %v859 = vadd.f32 %v843, 1.0
        %v860 = vadd.f32 %v844, 1.0
        %v861 = vadd.f32 %v845, 1.0
        %v862 = vadd.f32 %v846, 1.0
        %v863 = vadd.f32 %v847, 1.0
        %v864 = vadd.f32 %v848, 1.0
        %v865 = vadd.f32 %v849, 1.0
        %v866 = vadd.f32 %v850, 1.0
        %v867 = vadd.f32 %v851, 1.0
        %v868 = vmul.f32 %v740, %v852
        %v869 = vmul.f32 %v741, %v853
        %v870 = vmul.f32 %v742, %v854
        %v871 = vmul.f32 %v743, %v855
        %v872 = vmul.f32 %v744, %v856
        %v873 = vmul.f32 %v745, %v857
        %v874 = vmul.f32 %v746, %v858
        %v875 = vmul.f32 %v747, %v859
        %v876 = vmul.f32 %v748, %v860
        %v877 = vmul.f32 %v749, %v861
        %v878 = vmul.f32 %v750, %v862
        %v879 = vmul.f32 %v751, %v863
        %v880 = vmul.f32 %v752, %v864
        %v881 = vmul.f32 %v753, %v865
        %v882 = vmul.f32 %v754, %v866
        %v883 = vmul.f32 %v755, %v867
        %v884 = vpack.c.bf16 %v870, %v868
        %v885 = vpack.c.bf16 %v871, %v869
        %v886 = vpack.c.bf16 %v874, %v872
        %v887 = vpack.c.bf16 %v875, %v873
        %v888 = vpack.c.bf16 %v878, %v876
        %v889 = vpack.c.bf16 %v879, %v877
        %v890 = vpack.c.bf16 %v882, %v880
        %v891 = vpack.c.bf16 %v883, %v881
        %v892 = vld [vmem:[#allocation8] sm:$0xf]
        %v893 = vld [vmem:[#allocation8 + $0x4] sm:$0xf]
        %v894 = vld [vmem:[#allocation8 + $0x8] sm:$0xf]
        %v895 = vld [vmem:[#allocation8 + $0xc] sm:$0xf]
        %v896 = vld [vmem:[#allocation8 + $0x10] sm:$0xf]
        %v897 = vld [vmem:[#allocation8 + $0x14] sm:$0xf]
        %v898 = vld [vmem:[#allocation8 + $0x18] sm:$0xf]
        %v899 = vld [vmem:[#allocation8 + $0x1c] sm:$0xf]
        %v900 = vld [vmem:[#allocation8 + $0x20] sm:$0xf]
        %v901 = vld [vmem:[#allocation8 + $0x24] sm:$0xf]
        %v902 = vld [vmem:[#allocation8 + $0x28] sm:$0xf]
        %v903 = vld [vmem:[#allocation8 + $0x2c] sm:$0xf]
        %v904 = vld [vmem:[#allocation8 + $0x30] sm:$0xf]
        %v905 = vld [vmem:[#allocation8 + $0x34] sm:$0xf]
        %v906 = vld [vmem:[#allocation8 + $0x38] sm:$0xf]
        %v907 = vld [vmem:[#allocation8 + $0x3c] sm:$0xf]
        %v908 = vld [vmem:[#allocation8 + $0x40] sm:$0xf]
        %v909 = vld [vmem:[#allocation8 + $0x44] sm:$0xf]
        %v910 = vld [vmem:[#allocation8 + $0x48] sm:$0xf]
        %v911 = vld [vmem:[#allocation8 + $0x4c] sm:$0xf]
        %v912 = vld [vmem:[#allocation8 + $0x50] sm:$0xf]
        %v913 = vld [vmem:[#allocation8 + $0x54] sm:$0xf]
        %v914 = vld [vmem:[#allocation8 + $0x58] sm:$0xf]
        %v915 = vld [vmem:[#allocation8 + $0x5c] sm:$0xf]
        %v916 = vld [vmem:[#allocation8 + $0x60] sm:$0xf]
        %v917 = vld [vmem:[#allocation8 + $0x64] sm:$0xf]
        %v918 = vld [vmem:[#allocation8 + $0x68] sm:$0xf]
        %v919 = vld [vmem:[#allocation8 + $0x6c] sm:$0xf]
        %v920 = vld [vmem:[#allocation8 + $0x70] sm:$0xf]
        %v921 = vld [vmem:[#allocation8 + $0x74] sm:$0xf]
        %v922 = vld [vmem:[#allocation8 + $0x78] sm:$0xf]
        %v923 = vld [vmem:[#allocation8 + $0x7c] sm:$0xf]
        %v924 = vld [vmem:[%s5] sm:$0x1]
        %v926 = vlaneseq
        %v927 = vshrl.u32 %v926, 7
        %v928 = vsub.s32 0, %v927
        %v929 = vrot.slane %v924, %v928
        %v963 = vunpack.c.l.b16 %v892
        %v964 = vunpack.c.l.b16 %v893
        %v965 = vunpack.c.l.b16 %v894
        %v966 = vunpack.c.l.b16 %v895
        %v967 = vunpack.c.l.b16 %v896
        %v968 = vunpack.c.l.b16 %v897
        %v969 = vunpack.c.l.b16 %v898
        %v970 = vunpack.c.l.b16 %v899
        %v971 = vunpack.c.l.b16 %v900
        %v972 = vunpack.c.l.b16 %v901
        %v973 = vunpack.c.l.b16 %v902
        %v974 = vunpack.c.l.b16 %v903
        %v975 = vunpack.c.l.b16 %v904
        %v976 = vunpack.c.l.b16 %v905
        %v977 = vunpack.c.l.b16 %v906
        %v978 = vunpack.c.l.b16 %v907
        %v979 = vunpack.c.l.b16 %v908
        %v980 = vunpack.c.l.b16 %v909
        %v981 = vunpack.c.l.b16 %v910
        %v982 = vunpack.c.l.b16 %v911
        %v983 = vunpack.c.l.b16 %v912
        %v984 = vunpack.c.l.b16 %v913
        %v985 = vunpack.c.l.b16 %v914
        %v986 = vunpack.c.l.b16 %v915
        %v987 = vunpack.c.l.b16 %v916
        %v988 = vunpack.c.l.b16 %v917
        %v989 = vunpack.c.l.b16 %v918
        %v990 = vunpack.c.l.b16 %v919
        %v991 = vunpack.c.l.b16 %v920
        %v992 = vunpack.c.l.b16 %v921
        %v993 = vunpack.c.l.b16 %v922
        %v994 = vunpack.c.l.b16 %v923
        %v995 = vpack.c.b16 %v964, %v963
        %v996 = vpack.c.b16 %v966, %v965
        %v997 = vpack.c.b16 %v968, %v967
        %v998 = vpack.c.b16 %v970, %v969
        %v999 = vpack.c.b16 %v972, %v971
        %v1000 = vpack.c.b16 %v974, %v973
        %v1001 = vpack.c.b16 %v976, %v975
        %v1002 = vpack.c.b16 %v978, %v977
        %v1003 = vpack.c.b16 %v980, %v979
        %v1004 = vpack.c.b16 %v982, %v981
        %v1005 = vpack.c.b16 %v984, %v983
        %v1006 = vpack.c.b16 %v986, %v985
        %v1007 = vpack.c.b16 %v988, %v987
        %v1008 = vpack.c.b16 %v990, %v989
        %v1009 = vpack.c.b16 %v992, %v991
        %v1010 = vpack.c.b16 %v994, %v993
        %1027 = vmatprep.subr.bf16.mxu0 0
        %1028 = vmatpush1.bf16.msra.mxu0 %v995
        %1029 = vmatprep.subr.bf16.mxu0 0
        %1030 = vmatpush1.bf16.msra.mxu0 %v996
        %1031 = vmatprep.subr.bf16.mxu0 0
        %1032 = vmatpush1.bf16.msra.mxu0 %v997
        %1033 = vmatprep.subr.bf16.mxu0 0
        %1034 = vmatpush1.bf16.msra.mxu0 %v998
        %1035 = vmatprep.subr.bf16.mxu0 0
        %1036 = vmatpush1.bf16.msra.mxu0 %v999
        %1037 = vmatprep.subr.bf16.mxu0 0
        %1038 = vmatpush1.bf16.msra.mxu0 %v1000
        %1039 = vmatprep.subr.bf16.mxu0 0
        %1040 = vmatpush1.bf16.msra.mxu0 %v1001
        %1041 = vmatprep.subr.bf16.mxu0 0
        %1042 = vmatpush1.bf16.msra.mxu0 %v1002
        %1043 = vmatprep.subr.bf16.mxu0 0
        %1044 = vmatpush1.bf16.msra.mxu0 %v1003
        %1045 = vmatprep.subr.bf16.mxu0 0
        %1046 = vmatpush1.bf16.msra.mxu0 %v1004
        %1047 = vmatprep.subr.bf16.mxu0 0
        %1048 = vmatpush1.bf16.msra.mxu0 %v1005
        %1049 = vmatprep.subr.bf16.mxu0 0
        %1050 = vmatpush1.bf16.msra.mxu0 %v1006
        %1051 = vmatprep.subr.bf16.mxu0 0
        %1052 = vmatpush1.bf16.msra.mxu0 %v1007
        %1053 = vmatprep.subr.bf16.mxu0 0
        %1054 = vmatpush1.bf16.msra.mxu0 %v1008
        %1055 = vmatprep.subr.bf16.mxu0 0
        %1056 = vmatpush1.bf16.msra.mxu0 %v1009
        %1057 = vmatprep.subr.bf16.mxu0 0
        %1058 = vmatpush1.bf16.msra.mxu0 %v1010
        %1059 = vmatprep.mubr.bf16.mxu0 %v885
        %1060 = vmatmul.mubr.bf16.gmra.mrb[0].mxu0 %v884
        %v1061 = vpop.f32.mrb[0].mxu0
        %v1062 = vadd.f32 %v929, %v1061
        %v1063 = vpop.f32.mrb[0].mxu0
        %v1064 = vpop.f32.mrb[0].mxu0
        %v1065 = vadd.f32 %v929, %v1064
        %v1066 = vpop.f32.mrb[0].mxu0
        %1067 = vmatprep.mubr.bf16.mxu0 %v887
        %1068 = vmatmul.mubr.bf16.gmra.mrb[0].mxu0 %v886
        %v1069 = vpop.f32.mrb[0].mxu0
        %v1070 = vadd.f32 %v929, %v1069
        %v1071 = vpop.f32.mrb[0].mxu0
        %v1072 = vpop.f32.mrb[0].mxu0
        %v1073 = vadd.f32 %v929, %v1072
        %v1074 = vpop.f32.mrb[0].mxu0
        %1075 = vmatprep.mubr.bf16.mxu0 %v889
        %1076 = vmatmul.mubr.bf16.gmra.mrb[0].mxu0 %v888
        %v1077 = vpop.f32.mrb[0].mxu0
        %v1078 = vadd.f32 %v929, %v1077
        %v1079 = vpop.f32.mrb[0].mxu0
        %v1080 = vpop.f32.mrb[0].mxu0
        %v1081 = vadd.f32 %v929, %v1080
        %v1082 = vpop.f32.mrb[0].mxu0
        %1083 = vmatprep.mubr.bf16.mxu0 %v891
        %1084 = vmatmul.mubr.bf16.gmra.mrb[0].mxu0 %v890
        %v1085 = vpop.f32.mrb[0].mxu0
        %v1086 = vadd.f32 %v929, %v1085
        %v1087 = vpop.f32.mrb[0].mxu0
        %v1088 = vpop.f32.mrb[0].mxu0
        %v1089 = vadd.f32 %v929, %v1088
        %v1090 = vpop.f32.mrb[0].mxu0
        %1091 = vdwg.mxu0
        %1092 = vst [vmem:[%s518] sm:$0xff] %v1062
        %1093 = vst [vmem:[%s518 + $0x8] sm:$0xff] %v1065
        %1094 = vst [vmem:[%s518 + $0x10] sm:$0xff] %v1070
        %1095 = vst [vmem:[%s518 + $0x18] sm:$0xff] %v1073
        %1096 = vst [vmem:[%s518 + $0x20] sm:$0xff] %v1078
        %1097 = vst [vmem:[%s518 + $0x28] sm:$0xff] %v1081
        %1098 = vst [vmem:[%s518 + $0x30] sm:$0xff] %v1086
        %1099 = vst [vmem:[%s518 + $0x38] sm:$0xff] %v1089
        %v1100 = vld [vmem:[%s461] sm:$0xff]
        %v1101 = vld [vmem:[%s461 + $0x8] sm:$0xff]
        %v1102 = vld [vmem:[%s461 + $0x10] sm:$0xff]
        %v1103 = vld [vmem:[%s461 + $0x18] sm:$0xff]
        %v1104 = vld [vmem:[%s461 + $0x20] sm:$0xff]
        %v1105 = vld [vmem:[%s461 + $0x28] sm:$0xff]
        %v1106 = vld [vmem:[%s461 + $0x30] sm:$0xff]
        %v1107 = vld [vmem:[%s461 + $0x38] sm:$0xff]
        %v1108 = vpack.c.bf16 %v1101, %v1100
        %v1109 = vpack.c.bf16 %v1103, %v1102
        %v1110 = vpack.c.bf16 %v1105, %v1104
        %v1111 = vpack.c.bf16 %v1107, %v1106
        %v1112 = vld [vmem:[#allocation10] sm:$0xff]
        %v1113 = vld [vmem:[#allocation10 + $0x8] sm:$0xff]
        %v1114 = vld [vmem:[#allocation10 + $0x10] sm:$0xff]
        %v1115 = vld [vmem:[#allocation10 + $0x18] sm:$0xff]
        %v1116 = vld [vmem:[#allocation10 + $0x20] sm:$0xff]
        %v1117 = vld [vmem:[#allocation10 + $0x28] sm:$0xff]
        %v1118 = vld [vmem:[#allocation10 + $0x30] sm:$0xff]
        %v1119 = vld [vmem:[#allocation10 + $0x38] sm:$0xff]
        %v1120 = vld [vmem:[#allocation10 + $0x40] sm:$0xff]
        %v1121 = vld [vmem:[#allocation10 + $0x48] sm:$0xff]
        %v1122 = vld [vmem:[#allocation10 + $0x50] sm:$0xff]
        %v1123 = vld [vmem:[#allocation10 + $0x58] sm:$0xff]
        %v1124 = vld [vmem:[#allocation10 + $0x60] sm:$0xff]
        %v1125 = vld [vmem:[#allocation10 + $0x68] sm:$0xff]
        %v1126 = vld [vmem:[#allocation10 + $0x70] sm:$0xff]
        %v1127 = vld [vmem:[#allocation10 + $0x78] sm:$0xff]
        %v1128 = vld [vmem:[%s7] sm:$0x3]
        %v1130 = vlaneseq
        %v1131 = vshrl.u32 %v1130, 7
        %v1132 = vsub.s32 0, %v1131
        %v1133 = vrot.slane %v1128, %v1132
        %v1134 = vlaneseq
        %v1135 = vshrl.u32 %v1134, 7
        %v1136 = vsub.s32 1, %v1135
        %v1137 = vrot.slane %v1128, %v1136
        %v1156 = vunpack.c.l.b16 %v1112
        %v1157 = vunpack.c.h.b16 %v1112
        %v1158 = vunpack.c.l.b16 %v1113
        %v1159 = vunpack.c.h.b16 %v1113
        %v1160 = vunpack.c.l.b16 %v1114
        %v1161 = vunpack.c.h.b16 %v1114
        %v1162 = vunpack.c.l.b16 %v1115
        %v1163 = vunpack.c.h.b16 %v1115
        %v1164 = vunpack.c.l.b16 %v1116
        %v1165 = vunpack.c.h.b16 %v1116
        %v1166 = vunpack.c.l.b16 %v1117
        %v1167 = vunpack.c.h.b16 %v1117
        %v1168 = vunpack.c.l.b16 %v1118
        %v1169 = vunpack.c.h.b16 %v1118
        %v1170 = vunpack.c.l.b16 %v1119
        %v1171 = vunpack.c.h.b16 %v1119
        %v1172 = vunpack.c.l.b16 %v1120
        %v1173 = vunpack.c.h.b16 %v1120
        %v1174 = vunpack.c.l.b16 %v1121
        %v1175 = vunpack.c.h.b16 %v1121
        %v1176 = vunpack.c.l.b16 %v1122
        %v1177 = vunpack.c.h.b16 %v1122
        %v1178 = vunpack.c.l.b16 %v1123
        %v1179 = vunpack.c.h.b16 %v1123
        %v1180 = vunpack.c.l.b16 %v1124
        %v1181 = vunpack.c.h.b16 %v1124
        %v1182 = vunpack.c.l.b16 %v1125
        %v1183 = vunpack.c.h.b16 %v1125
        %v1184 = vunpack.c.l.b16 %v1126
        %v1185 = vunpack.c.h.b16 %v1126
        %v1186 = vunpack.c.l.b16 %v1127
        %v1187 = vunpack.c.h.b16 %v1127
        %v1188 = vpack.c.b16 %v1158, %v1156
        %v1189 = vpack.c.b16 %v1159, %v1157
        %v1190 = vpack.c.b16 %v1162, %v1160
        %v1191 = vpack.c.b16 %v1163, %v1161
        %v1192 = vpack.c.b16 %v1166, %v1164
        %v1193 = vpack.c.b16 %v1167, %v1165
        %v1194 = vpack.c.b16 %v1170, %v1168
        %v1195 = vpack.c.b16 %v1171, %v1169
        %v1196 = vpack.c.b16 %v1174, %v1172
        %v1197 = vpack.c.b16 %v1175, %v1173
        %v1198 = vpack.c.b16 %v1178, %v1176
        %v1199 = vpack.c.b16 %v1179, %v1177
        %v1200 = vpack.c.b16 %v1182, %v1180
        %v1201 = vpack.c.b16 %v1183, %v1181
        %v1202 = vpack.c.b16 %v1186, %v1184
        %v1203 = vpack.c.b16 %v1187, %v1185
        %1220 = vmatprep.subr.bf16.mxu0 %v1189
        %1221 = vmatpush1.bf16.msra.mxu0 %v1188
        %1222 = vmatprep.subr.bf16.mxu0 %v1191
        %1223 = vmatpush1.bf16.msra.mxu0 %v1190
        %1224 = vmatprep.subr.bf16.mxu0 %v1193
        %1225 = vmatpush1.bf16.msra.mxu0 %v1192
        %1226 = vmatprep.subr.bf16.mxu0 %v1195
        %1227 = vmatpush1.bf16.msra.mxu0 %v1194
        %1228 = vmatprep.subr.bf16.mxu0 %v1197
        %1229 = vmatpush1.bf16.msra.mxu0 %v1196
        %1230 = vmatprep.subr.bf16.mxu0 %v1199
        %1231 = vmatpush1.bf16.msra.mxu0 %v1198
        %1232 = vmatprep.subr.bf16.mxu0 %v1201
        %1233 = vmatpush1.bf16.msra.mxu0 %v1200
        %1234 = vmatprep.subr.bf16.mxu0 %v1203
        %1235 = vmatpush1.bf16.msra.mxu0 %v1202
        %1236 = vmatprep.subr.bf16.mxu0 0
        %1237 = vmatpush1.bf16.msra.mxu0 0
        %1238 = vmatprep.subr.bf16.mxu0 0
        %1239 = vmatpush1.bf16.msra.mxu0 0
        %1240 = vmatprep.subr.bf16.mxu0 0
        %1241 = vmatpush1.bf16.msra.mxu0 0
        %1242 = vmatprep.subr.bf16.mxu0 0
        %1243 = vmatpush1.bf16.msra.mxu0 0
        %1244 = vmatprep.subr.bf16.mxu0 0
        %1245 = vmatpush1.bf16.msra.mxu0 0
        %1246 = vmatprep.subr.bf16.mxu0 0
        %1247 = vmatpush1.bf16.msra.mxu0 0
        %1248 = vmatprep.subr.bf16.mxu0 0
        %1249 = vmatpush1.bf16.msra.mxu0 0
        %1250 = vmatprep.subr.bf16.mxu0 0
        %1251 = vmatpush1.bf16.msra.mxu0 0
        %1252 = vmatprep.mubr.bf16.mxu0 0
        %1253 = vmatmul.mubr.bf16.gmra.mrb[0].mxu0 %v1108
        %v1254 = vpop.f32.mrb[0].mxu0
        %v1255 = vadd.f32 %v1133, %v1254
        %v1256 = vpop.f32.mrb[0].mxu0
        %v1257 = vadd.f32 %v1137, %v1256
        %v1258 = vpop.f32.mrb[0].mxu0
        %v1259 = vadd.f32 %v1133, %v1258
        %v1260 = vpop.f32.mrb[0].mxu0
        %v1261 = vadd.f32 %v1137, %v1260
        %1262 = vmatprep.mubr.bf16.mxu0 0
        %1263 = vmatmul.mubr.bf16.gmra.mrb[0].mxu0 %v1109
        %v1264 = vpop.f32.mrb[0].mxu0
        %v1265 = vadd.f32 %v1133, %v1264
        %v1266 = vpop.f32.mrb[0].mxu0
        %v1267 = vadd.f32 %v1137, %v1266
        %v1268 = vpop.f32.mrb[0].mxu0
        %v1269 = vadd.f32 %v1133, %v1268
        %v1270 = vpop.f32.mrb[0].mxu0
        %v1271 = vadd.f32 %v1137, %v1270
        %1272 = vmatprep.mubr.bf16.mxu0 0
        %1273 = vmatmul.mubr.bf16.gmra.mrb[0].mxu0 %v1110
        %v1274 = vpop.f32.mrb[0].mxu0
        %v1275 = vadd.f32 %v1133, %v1274
        %v1276 = vpop.f32.mrb[0].mxu0
        %v1277 = vadd.f32 %v1137, %v1276
        %v1278 = vpop.f32.mrb[0].mxu0
        %v1279 = vadd.f32 %v1133, %v1278
        %v1280 = vpop.f32.mrb[0].mxu0
        %v1281 = vadd.f32 %v1137, %v1280
        %1282 = vmatprep.mubr.bf16.mxu0 0
        %1283 = vmatmul.mubr.bf16.gmra.mrb[0].mxu0 %v1111
        %v1284 = vpop.f32.mrb[0].mxu0
        %v1285 = vadd.f32 %v1133, %v1284
        %v1286 = vpop.f32.mrb[0].mxu0
        %v1287 = vadd.f32 %v1137, %v1286
        %v1288 = vpop.f32.mrb[0].mxu0
        %v1289 = vadd.f32 %v1133, %v1288
        %v1290 = vpop.f32.mrb[0].mxu0
        %v1291 = vadd.f32 %v1137, %v1290
        %1292 = vdwg.mxu0
        %v1293 = vmul.f32 %v1255, 0.5
        %v1294 = vmul.f32 %v1257, 0.5
        %v1295 = vmul.f32 %v1259, 0.5
        %v1296 = vmul.f32 %v1261, 0.5
        %v1297 = vmul.f32 %v1265, 0.5
        %v1298 = vmul.f32 %v1267, 0.5
        %v1299 = vmul.f32 %v1269, 0.5
        %v1300 = vmul.f32 %v1271, 0.5
        %v1301 = vmul.f32 %v1275, 0.5
        %v1302 = vmul.f32 %v1277, 0.5
        %v1303 = vmul.f32 %v1279, 0.5
        %v1304 = vmul.f32 %v1281, 0.5
        %v1305 = vmul.f32 %v1285, 0.5
        %v1306 = vmul.f32 %v1287, 0.5
        %v1307 = vmul.f32 %v1289, 0.5
        %v1308 = vmul.f32 %v1291, 0.5
        %v1309 = vmul.f32 %v1255, 0.044715
        %v1310 = vmul.f32 %v1257, 0.044715
        %v1311 = vmul.f32 %v1259, 0.044715
        %v1312 = vmul.f32 %v1261, 0.044715
        %v1313 = vmul.f32 %v1265, 0.044715
        %v1314 = vmul.f32 %v1267, 0.044715
        %v1315 = vmul.f32 %v1269, 0.044715
        %v1316 = vmul.f32 %v1271, 0.044715
        %v1317 = vmul.f32 %v1275, 0.044715
        %v1318 = vmul.f32 %v1277, 0.044715
        %v1319 = vmul.f32 %v1279, 0.044715
        %v1320 = vmul.f32 %v1281, 0.044715
        %v1321 = vmul.f32 %v1285, 0.044715
        %v1322 = vmul.f32 %v1287, 0.044715
        %v1323 = vmul.f32 %v1289, 0.044715
        %v1324 = vmul.f32 %v1291, 0.044715
        %v1325 = vmul.f32 %v1309, %v1255
        %v1326 = vmul.f32 %v1310, %v1257
        %v1327 = vmul.f32 %v1311, %v1259
        %v1328 = vmul.f32 %v1312, %v1261
        %v1329 = vmul.f32 %v1313, %v1265
        %v1330 = vmul.f32 %v1314, %v1267
        %v1331 = vmul.f32 %v1315, %v1269
        %v1332 = vmul.f32 %v1316, %v1271
        %v1333 = vmul.f32 %v1317, %v1275
        %v1334 = vmul.f32 %v1318, %v1277
        %v1335 = vmul.f32 %v1319, %v1279
        %v1336 = vmul.f32 %v1320, %v1281
        %v1337 = vmul.f32 %v1321, %v1285
        %v1338 = vmul.f32 %v1322, %v1287
        %v1339 = vmul.f32 %v1323, %v1289
        %v1340 = vmul.f32 %v1324, %v1291
        %v1341 = vmul.f32 %v1325, %v1255
        %v1342 = vmul.f32 %v1326, %v1257
        %v1343 = vmul.f32 %v1327, %v1259
        %v1344 = vmul.f32 %v1328, %v1261
        %v1345 = vmul.f32 %v1329, %v1265
        %v1346 = vmul.f32 %v1330, %v1267
        %v1347 = vmul.f32 %v1331, %v1269
        %v1348 = vmul.f32 %v1332, %v1271
        %v1349 = vmul.f32 %v1333, %v1275
        %v1350 = vmul.f32 %v1334, %v1277
        %v1351 = vmul.f32 %v1335, %v1279
        %v1352 = vmul.f32 %v1336, %v1281
        %v1353 = vmul.f32 %v1337, %v1285
        %v1354 = vmul.f32 %v1338, %v1287
        %v1355 = vmul.f32 %v1339, %v1289
        %v1356 = vmul.f32 %v1340, %v1291
        %v1357 = vadd.f32 %v1255, %v1341
        %v1358 = vadd.f32 %v1257, %v1342
        %v1359 = vadd.f32 %v1259, %v1343
        %v1360 = vadd.f32 %v1261, %v1344
        %v1361 = vadd.f32 %v1265, %v1345
        %v1362 = vadd.f32 %v1267, %v1346
        %v1363 = vadd.f32 %v1269, %v1347
        %v1364 = vadd.f32 %v1271, %v1348
        %v1365 = vadd.f32 %v1275, %v1349
        %v1366 = vadd.f32 %v1277, %v1350
        %v1367 = vadd.f32 %v1279, %v1351
        %v1368 = vadd.f32 %v1281, %v1352
        %v1369 = vadd.f32 %v1285, %v1353
        %v1370 = vadd.f32 %v1287, %v1354
        %v1371 = vadd.f32 %v1289, %v1355
        %v1372 = vadd.f32 %v1291, %v1356
        %v1373 = vmul.f32 %v1357, 0.7978846
        %v1374 = vmul.f32 %v1358, 0.7978846
        %v1375 = vmul.f32 %v1359, 0.7978846
        %v1376 = vmul.f32 %v1360, 0.7978846
        %v1377 = vmul.f32 %v1361, 0.7978846
        %v1378 = vmul.f32 %v1362, 0.7978846
        %v1379 = vmul.f32 %v1363, 0.7978846
        %v1380 = vmul.f32 %v1364, 0.7978846
        %v1381 = vmul.f32 %v1365, 0.7978846
        %v1382 = vmul.f32 %v1366, 0.7978846
        %v1383 = vmul.f32 %v1367, 0.7978846
        %v1384 = vmul.f32 %v1368, 0.7978846
        %v1385 = vmul.f32 %v1369, 0.7978846
        %v1386 = vmul.f32 %v1370, 0.7978846
        %v1387 = vmul.f32 %v1371, 0.7978846
        %v1388 = vmul.f32 %v1372, 0.7978846
        %v1389 = vtanh.pop %v1373
        %v1390 = vtanh.pop %v1374
        %v1391 = vtanh.pop %v1375
        %v1392 = vtanh.pop %v1376
        %v1393 = vtanh.pop %v1377
        %v1394 = vtanh.pop %v1378
        %v1395 = vtanh.pop %v1379
        %v1396 = vtanh.pop %v1380
        %v1397 = vtanh.pop %v1381
        %v1398 = vtanh.pop %v1382
        %v1399 = vtanh.pop %v1383
        %v1400 = vtanh.pop %v1384
        %v1401 = vtanh.pop %v1385
        %v1402 = vtanh.pop %v1386
        %v1403 = vtanh.pop %v1387
        %v1404 = vtanh.pop %v1388
        %v1405 = vadd.f32 %v1389, 1.0
        %v1406 = vadd.f32 %v1390, 1.0
        %v1407 = vadd.f32 %v1391, 1.0
        %v1408 = vadd.f32 %v1392, 1.0
        %v1409 = vadd.f32 %v1393, 1.0
        %v1410 = vadd.f32 %v1394, 1.0
        %v1411 = vadd.f32 %v1395, 1.0
        %v1412 = vadd.f32 %v1396, 1.0
        %v1413 = vadd.f32 %v1397, 1.0
        %v1414 = vadd.f32 %v1398, 1.0
        %v1415 = vadd.f32 %v1399, 1.0
        %v1416 = vadd.f32 %v1400, 1.0
        %v1417 = vadd.f32 %v1401, 1.0
        %v1418 = vadd.f32 %v1402, 1.0
        %v1419 = vadd.f32 %v1403, 1.0
        %v1420 = vadd.f32 %v1404, 1.0
        %v1421 = vmul.f32 %v1293, %v1405
        %v1422 = vmul.f32 %v1294, %v1406
        %v1423 = vmul.f32 %v1295, %v1407
        %v1424 = vmul.f32 %v1296, %v1408
        %v1425 = vmul.f32 %v1297, %v1409
        %v1426 = vmul.f32 %v1298, %v1410
        %v1427 = vmul.f32 %v1299, %v1411
        %v1428 = vmul.f32 %v1300, %v1412
        %v1429 = vmul.f32 %v1301, %v1413
        %v1430 = vmul.f32 %v1302, %v1414
        %v1431 = vmul.f32 %v1303, %v1415
        %v1432 = vmul.f32 %v1304, %v1416
        %v1433 = vmul.f32 %v1305, %v1417
        %v1434 = vmul.f32 %v1306, %v1418
        %v1435 = vmul.f32 %v1307, %v1419
        %v1436 = vmul.f32 %v1308, %v1420
        %v1437 = vpack.c.bf16 %v1423, %v1421
        %v1438 = vpack.c.bf16 %v1424, %v1422
        %v1439 = vpack.c.bf16 %v1427, %v1425
        %v1440 = vpack.c.bf16 %v1428, %v1426
        %v1441 = vpack.c.bf16 %v1431, %v1429
        %v1442 = vpack.c.bf16 %v1432, %v1430
        %v1443 = vpack.c.bf16 %v1435, %v1433
        %v1444 = vpack.c.bf16 %v1436, %v1434
        %v1445 = vld [vmem:[#allocation11] sm:$0xf]
        %v1446 = vld [vmem:[#allocation11 + $0x4] sm:$0xf]
        %v1447 = vld [vmem:[#allocation11 + $0x8] sm:$0xf]
        %v1448 = vld [vmem:[#allocation11 + $0xc] sm:$0xf]
        %v1449 = vld [vmem:[#allocation11 + $0x10] sm:$0xf]
        %v1450 = vld [vmem:[#allocation11 + $0x14] sm:$0xf]
        %v1451 = vld [vmem:[#allocation11 + $0x18] sm:$0xf]
        %v1452 = vld [vmem:[#allocation11 + $0x1c] sm:$0xf]
        %v1453 = vld [vmem:[#allocation11 + $0x20] sm:$0xf]
        %v1454 = vld [vmem:[#allocation11 + $0x24] sm:$0xf]
        %v1455 = vld [vmem:[#allocation11 + $0x28] sm:$0xf]
        %v1456 = vld [vmem:[#allocation11 + $0x2c] sm:$0xf]
        %v1457 = vld [vmem:[#allocation11 + $0x30] sm:$0xf]
        %v1458 = vld [vmem:[#allocation11 + $0x34] sm:$0xf]
        %v1459 = vld [vmem:[#allocation11 + $0x38] sm:$0xf]
        %v1460 = vld [vmem:[#allocation11 + $0x3c] sm:$0xf]
        %v1461 = vld [vmem:[#allocation11 + $0x40] sm:$0xf]
        %v1462 = vld [vmem:[#allocation11 + $0x44] sm:$0xf]
        %v1463 = vld [vmem:[#allocation11 + $0x48] sm:$0xf]
        %v1464 = vld [vmem:[#allocation11 + $0x4c] sm:$0xf]
        %v1465 = vld [vmem:[#allocation11 + $0x50] sm:$0xf]
        %v1466 = vld [vmem:[#allocation11 + $0x54] sm:$0xf]
        %v1467 = vld [vmem:[#allocation11 + $0x58] sm:$0xf]
        %v1468 = vld [vmem:[#allocation11 + $0x5c] sm:$0xf]
        %v1469 = vld [vmem:[#allocation11 + $0x60] sm:$0xf]
        %v1470 = vld [vmem:[#allocation11 + $0x64] sm:$0xf]
        %v1471 = vld [vmem:[#allocation11 + $0x68] sm:$0xf]
        %v1472 = vld [vmem:[#allocation11 + $0x6c] sm:$0xf]
        %v1473 = vld [vmem:[#allocation11 + $0x70] sm:$0xf]
        %v1474 = vld [vmem:[#allocation11 + $0x74] sm:$0xf]
        %v1475 = vld [vmem:[#allocation11 + $0x78] sm:$0xf]
        %v1476 = vld [vmem:[#allocation11 + $0x7c] sm:$0xf]
        %v1477 = vld [vmem:[%s9] sm:$0x1]
        %v1479 = vlaneseq
        %v1480 = vshrl.u32 %v1479, 7
        %v1481 = vsub.s32 0, %v1480
        %v1482 = vrot.slane %v1477, %v1481
        %v1516 = vunpack.c.l.b16 %v1445
        %v1517 = vunpack.c.l.b16 %v1446
        %v1518 = vunpack.c.l.b16 %v1447
        %v1519 = vunpack.c.l.b16 %v1448
        %v1520 = vunpack.c.l.b16 %v1449
        %v1521 = vunpack.c.l.b16 %v1450
        %v1522 = vunpack.c.l.b16 %v1451
        %v1523 = vunpack.c.l.b16 %v1452
        %v1524 = vunpack.c.l.b16 %v1453
        %v1525 = vunpack.c.l.b16 %v1454
        %v1526 = vunpack.c.l.b16 %v1455
        %v1527 = vunpack.c.l.b16 %v1456
        %v1528 = vunpack.c.l.b16 %v1457
        %v1529 = vunpack.c.l.b16 %v1458
        %v1530 = vunpack.c.l.b16 %v1459
        %v1531 = vunpack.c.l.b16 %v1460
        %v1532 = vunpack.c.l.b16 %v1461
        %v1533 = vunpack.c.l.b16 %v1462
        %v1534 = vunpack.c.l.b16 %v1463
        %v1535 = vunpack.c.l.b16 %v1464
        %v1536 = vunpack.c.l.b16 %v1465
        %v1537 = vunpack.c.l.b16 %v1466
        %v1538 = vunpack.c.l.b16 %v1467
        %v1539 = vunpack.c.l.b16 %v1468
        %v1540 = vunpack.c.l.b16 %v1469
        %v1541 = vunpack.c.l.b16 %v1470
        %v1542 = vunpack.c.l.b16 %v1471
        %v1543 = vunpack.c.l.b16 %v1472
        %v1544 = vunpack.c.l.b16 %v1473
        %v1545 = vunpack.c.l.b16 %v1474
        %v1546 = vunpack.c.l.b16 %v1475
        %v1547 = vunpack.c.l.b16 %v1476
        %v1548 = vpack.c.b16 %v1517, %v1516
        %v1549 = vpack.c.b16 %v1519, %v1518
        %v1550 = vpack.c.b16 %v1521, %v1520
        %v1551 = vpack.c.b16 %v1523, %v1522
        %v1552 = vpack.c.b16 %v1525, %v1524
        %v1553 = vpack.c.b16 %v1527, %v1526
        %v1554 = vpack.c.b16 %v1529, %v1528
        %v1555 = vpack.c.b16 %v1531, %v1530
        %v1556 = vpack.c.b16 %v1533, %v1532
        %v1557 = vpack.c.b16 %v1535, %v1534
        %v1558 = vpack.c.b16 %v1537, %v1536
        %v1559 = vpack.c.b16 %v1539, %v1538
        %v1560 = vpack.c.b16 %v1541, %v1540
        %v1561 = vpack.c.b16 %v1543, %v1542
        %v1562 = vpack.c.b16 %v1545, %v1544
        %v1563 = vpack.c.b16 %v1547, %v1546
        %1580 = vmatprep.subr.bf16.mxu0 0
        %1581 = vmatpush1.bf16.msra.mxu0 %v1548
        %1582 = vmatprep.subr.bf16.mxu0 0
        %1583 = vmatpush1.bf16.msra.mxu0 %v1549
        %1584 = vmatprep.subr.bf16.mxu0 0
        %1585 = vmatpush1.bf16.msra.mxu0 %v1550
        %1586 = vmatprep.subr.bf16.mxu0 0
        %1587 = vmatpush1.bf16.msra.mxu0 %v1551
        %1588 = vmatprep.subr.bf16.mxu0 0
        %1589 = vmatpush1.bf16.msra.mxu0 %v1552
        %1590 = vmatprep.subr.bf16.mxu0 0
        %1591 = vmatpush1.bf16.msra.mxu0 %v1553
        %1592 = vmatprep.subr.bf16.mxu0 0
        %1593 = vmatpush1.bf16.msra.mxu0 %v1554
        %1594 = vmatprep.subr.bf16.mxu0 0
        %1595 = vmatpush1.bf16.msra.mxu0 %v1555
        %1596 = vmatprep.subr.bf16.mxu0 0
        %1597 = vmatpush1.bf16.msra.mxu0 %v1556
        %1598 = vmatprep.subr.bf16.mxu0 0
        %1599 = vmatpush1.bf16.msra.mxu0 %v1557
        %1600 = vmatprep.subr.bf16.mxu0 0
        %1601 = vmatpush1.bf16.msra.mxu0 %v1558
        %1602 = vmatprep.subr.bf16.mxu0 0
        %1603 = vmatpush1.bf16.msra.mxu0 %v1559
        %1604 = vmatprep.subr.bf16.mxu0 0
        %1605 = vmatpush1.bf16.msra.mxu0 %v1560
        %1606 = vmatprep.subr.bf16.mxu0 0
        %1607 = vmatpush1.bf16.msra.mxu0 %v1561
        %1608 = vmatprep.subr.bf16.mxu0 0
        %1609 = vmatpush1.bf16.msra.mxu0 %v1562
        %1610 = vmatprep.subr.bf16.mxu0 0
        %1611 = vmatpush1.bf16.msra.mxu0 %v1563
        %1612 = vmatprep.mubr.bf16.mxu0 %v1438
        %1613 = vmatmul.mubr.bf16.gmra.mrb[0].mxu0 %v1437
        %v1614 = vpop.f32.mrb[0].mxu0
        %v1615 = vadd.f32 %v1482, %v1614
        %v1616 = vpop.f32.mrb[0].mxu0
        %v1617 = vpop.f32.mrb[0].mxu0
        %v1618 = vadd.f32 %v1482, %v1617
        %v1619 = vpop.f32.mrb[0].mxu0
        %1620 = vmatprep.mubr.bf16.mxu0 %v1440
        %1621 = vmatmul.mubr.bf16.gmra.mrb[0].mxu0 %v1439
        %v1622 = vpop.f32.mrb[0].mxu0
        %v1623 = vadd.f32 %v1482, %v1622
        %v1624 = vpop.f32.mrb[0].mxu0
        %v1625 = vpop.f32.mrb[0].mxu0
        %v1626 = vadd.f32 %v1482, %v1625
        %v1627 = vpop.f32.mrb[0].mxu0
        %1628 = vmatprep.mubr.bf16.mxu0 %v1442
        %1629 = vmatmul.mubr.bf16.gmra.mrb[0].mxu0 %v1441
        %v1630 = vpop.f32.mrb[0].mxu0
        %v1631 = vadd.f32 %v1482, %v1630
        %v1632 = vpop.f32.mrb[0].mxu0
        %v1633 = vpop.f32.mrb[0].mxu0
        %v1634 = vadd.f32 %v1482, %v1633
        %v1635 = vpop.f32.mrb[0].mxu0
        %1636 = vmatprep.mubr.bf16.mxu0 %v1444
        %1637 = vmatmul.mubr.bf16.gmra.mrb[0].mxu0 %v1443
        %v1638 = vpop.f32.mrb[0].mxu0
        %v1639 = vadd.f32 %v1482, %v1638
        %v1640 = vpop.f32.mrb[0].mxu0
        %v1641 = vpop.f32.mrb[0].mxu0
        %v1642 = vadd.f32 %v1482, %v1641
        %v1643 = vpop.f32.mrb[0].mxu0
        %1644 = vdwg.mxu0
        %1645 = vst [vmem:[%s525] sm:$0xff] %v1615
        %1646 = vst [vmem:[%s525 + $0x8] sm:$0xff] %v1618
        %1647 = vst [vmem:[%s525 + $0x10] sm:$0xff] %v1623
        %1648 = vst [vmem:[%s525 + $0x18] sm:$0xff] %v1626
        %1649 = vst [vmem:[%s525 + $0x20] sm:$0xff] %v1631
        %1650 = vst [vmem:[%s525 + $0x28] sm:$0xff] %v1634
        %1651 = vst [vmem:[%s525 + $0x30] sm:$0xff] %v1639
        %1652 = vst [vmem:[%s525 + $0x38] sm:$0xff] %v1642
        %s1653 = sand.u32 %s265, 1
        %s1654 = scalar_lea.sflag [#allocation4], %s1653
        %s1655 = sand.u32 %s265, 1
        %s1656 = smul.addr %s1655, 64
        %s1657 = scalar_lea.vmem [#allocation13], %s1656
        %s1658 = sand.u32 %s291, 1
        %s1659 = scalar_lea.sflag [#allocation15], %s1658
        %s1660 = sand.u32 %s291, 1
        %s1661 = smul.addr %s1660, 64
        %s1662 = scalar_lea.vmem [#allocation14], %s1661
        // Predicated region
        $region85: #{tpu_custom_call.1} parent=59 // pred_check
          %p1663 = pneg %p275
        $region86: #{tpu_custom_call.1} parent=59 // pred_check_branch
          %1665 = sbr.rel (%p1663) target = $region88
        $region87: #{tpu_custom_call.1} parent=59 // pred_region
          %s1666 = smul.u32 8, %s37
          %s1667 = ssub.s32 18, %s1666
          %p1668 = scmp.lt.s32.totalorder %s1667, 8
          %s1669 = scalar_select %p1668, %s1667, 8
          %s1670 = smul.u32 128, %s1669
          %s1672 = ssub.s32 1024, %s1670
          %1673 = vsyncadd %s1654, %s1672
          %p1674 = scmp.ne.s32.totalorder 0, %s1670
          %s1675 = smul.addr %s1666, 128
          %s1676 = scalar_lea.hbm %s10, %s1675
          %s1677 = smul.u32 8, %s1669
          %s1678 = sshll.u32 %s1657, 4
          %s1679 = int_to_ptr.vmem [resolvable:$true] %s1678
          %s1680 = sshll.u32 %s1677, 4
          %1684 = dma.vmem_to_hbm [thread:$0]  (%p1674), %s1679, %s1680, %s1676, %s1654, 128, 128, 8
        $region88: #{tpu_custom_call.1} parent=59 // pred_fallthru
          _
        // Predicated region
        $region89: #{tpu_custom_call.1} parent=59 // pred_check
          %p1685 = pneg %p301
        $region90: #{tpu_custom_call.1} parent=59 // pred_check_branch
          %1687 = sbr.rel (%p1685) target = $region92
        $region91: #{tpu_custom_call.1} parent=59 // pred_region
          %s1688 = smul.u32 8, %s37
          %s1689 = ssub.s32 18, %s1688
          %p1690 = scmp.lt.s32.totalorder %s1689, 8
          %s1691 = scalar_select %p1690, %s1689, 8
          %s1692 = smul.u32 128, %s1691
          %s1694 = ssub.s32 1024, %s1692
          %1695 = vsyncadd %s1659, %s1694
          %p1696 = scmp.ne.s32.totalorder 0, %s1692
          %s1697 = smul.addr %s1688, 128
          %s1698 = scalar_lea.hbm %s11, %s1697
          %s1699 = smul.u32 8, %s1691
          %s1700 = sshll.u32 %s1662, 4
          %s1701 = int_to_ptr.vmem [resolvable:$true] %s1700
          %s1702 = sshll.u32 %s1699, 4
          %1706 = dma.vmem_to_hbm [thread:$0]  (%p1696), %s1701, %s1702, %s1698, %s1659, 128, 128, 8
        $region92: #{tpu_custom_call.1} parent=59 // pred_fallthru
          _
      $region60: #{tpu_custom_call.1} parent=5 // pred_fallthru
        _
      %p1707 = scmp.le.s32.totalorder 2, %s32
      // Predicated region
      $region93: #{tpu_custom_call.1} parent=5 // pred_check
        %p1708 = pneg %p1707
      $region94: #{tpu_custom_call.1} parent=5 // pred_check_branch
        %1710 = sbr.rel (%p1708) target = $region96
      $region95: #{tpu_custom_call.1} parent=5 // pred_region
        %s1711 = ssub.s32 %s32, 2
        // Predicated region
        $region97: #{tpu_custom_call.1} parent=95 // pred_check
          %p1712 = pneg %p281
        $region98: #{tpu_custom_call.1} parent=95 // pred_check_branch
          %1714 = sbr.rel (%p1712) target = $region100
        $region99: #{tpu_custom_call.1} parent=95 // pred_region
          %s1715 = sand.u32 %s266, 1
          %s1716 = scalar_lea.sflag [#allocation4], %s1715
          %s1717 = sand.u32 %s266, 1
          %s1718 = smul.addr %s1717, 64
          %s1719 = scalar_lea.vmem [#allocation13], %s1718
          %1720 = dma.done %s1716, 1024
        $region100: #{tpu_custom_call.1} parent=95 // pred_fallthru
          _
        // Predicated region
        $region101: #{tpu_custom_call.1} parent=95 // pred_check
          %p1721 = pneg %p307
        $region102: #{tpu_custom_call.1} parent=95 // pred_check_branch
          %1723 = sbr.rel (%p1721) target = $region104
        $region103: #{tpu_custom_call.1} parent=95 // pred_region
          %s1724 = sand.u32 %s292, 1
          %s1725 = scalar_lea.sflag [#allocation15], %s1724
          %s1726 = sand.u32 %s292, 1
          %s1727 = smul.addr %s1726, 64
          %s1728 = scalar_lea.vmem [#allocation14], %s1727
          %1729 = dma.done %s1725, 1024
        $region104: #{tpu_custom_call.1} parent=95 // pred_fallthru
          _
      $region96: #{tpu_custom_call.1} parent=5 // pred_fallthru
        _
    $region6: #{tpu_custom_call.1} parent=1 // loop_footer
      %s36 = sadd.s32 1, %s32
    $region7: #{tpu_custom_call.1} parent=1 // loop_footer_branch
      %31 = sbr.rel target = $region3
    $region8: #{tpu_custom_call.1} parent=1 // loop_exit
      _
    %1730 = vsyncpa [#allocation3], 1
    %s1731 = scalar_lea.sflag [#allocation3], 1
    %1732 = vsyncpa %s1731, 1
    %1733 = vsyncpa [#allocation6], 1
    %s1734 = scalar_lea.sflag [#allocation6], 1
    %1735 = vsyncpa %s1734, 1
    %1736 = vsyncpa [#allocation9], 1
    %1737 = vsyncpa [#allocation12], 1
    %1738 = vsyncpa [#allocation4], 1
    %s1739 = scalar_lea.sflag [#allocation4], 1
    %1740 = vsyncpa %s1739, 1
    %1741 = vsyncpa [#allocation15], 1
    %s1742 = scalar_lea.sflag [#allocation15], 1
    %1743 = vsyncpa %s1742, 1

// kernel: tpu_custom_call.1
$region0: #{tpu_custom_call.1}
  #allocation0 [shape = 'u32[]', space=smem, size = 0x4, offset = 0x4, fixed_abs, tag = 'smem constant byte address 0x4 - core index']
  #allocation1 [shape = 'u32[144,128]{1,0:T(1,128)}', space=vmem, size = 0x12000, scoped, tag = 'internal scratch']
  %s0 = inlined_call_operand.hbm [shape: f32[144,128], index: 0, kind: input, shape index: {}]
  %s1 = inlined_call_operand.hbm [shape: f32[144,128], index: 1, kind: input, shape index: {}]
  %s2 = inlined_call_operand.hbm [shape: bf16[128,256], index: 2, kind: input, shape index: {}]
  %s3 = inlined_call_operand.vmem [shape: f32[1,256], index: 3, kind: input, shape index: {}]
  %s4 = inlined_call_operand.hbm [shape: bf16[256,128], index: 4, kind: input, shape index: {}]
  %s5 = inlined_call_operand.vmem [shape: f32[1,128], index: 5, kind: input, shape index: {}]
  %s6 = inlined_call_operand.hbm [shape: bf16[128,256], index: 6, kind: input, shape index: {}]
  %s7 = inlined_call_operand.vmem [shape: f32[1,256], index: 7, kind: input, shape index: {}]
  %s8 = inlined_call_operand.hbm [shape: bf16[256,128], index: 8, kind: input, shape index: {}]
  %s9 = inlined_call_operand.vmem [shape: f32[1,128], index: 9, kind: input, shape index: {}]
  %s10 = inlined_call_operand.hbm [shape: f32[144,128], index: 10, kind: output, shape index: {0}]
  %s11 = inlined_call_operand.hbm [shape: f32[144,128], index: 11, kind: output, shape index: {1}]
  %12 = xla_tuple %s10, %s11
  %s13 = sld [smem:[#allocation0]]
  $region105: #{tpu_custom_call.1} parent=0
    _
  %s15 = ssub.s32 1, %s13
  %s16 = scalar_select 0, %s15, %s13
  $region1: #{tpu_custom_call.1} parent=0
    #allocation2 [shape = 'u8[65536]{0}', space=vmem, size = 0x10000, scoped, tag = 'input window, operand 0']
    #allocation3 [shape = 's32[2]{0}', space=sflag, size = 0x8, scoped, tag = 'scoped memory for tpu_custom_call.1']
    #allocation4 [shape = 's32[2]{0}', space=sflag, size = 0x8, scoped, tag = 'scoped memory for tpu_custom_call.1']
    #allocation5 [shape = 'u8[65536]{0}', space=vmem, size = 0x10000, scoped, tag = 'input window, operand 1']
    #allocation6 [shape = 's32[2]{0}', space=sflag, size = 0x8, scoped, tag = 'scoped memory for tpu_custom_call.1']
    #allocation7 [shape = 'u8[65536]{0}', space=vmem, size = 0x10000, scoped, tag = 'input window, operand 2, single buffered']
    #allocation8 [shape = 'u8[65536]{0}', space=vmem, size = 0x10000, scoped, tag = 'input window, operand 4, single buffered']
    #allocation9 [shape = 's32[1]{0}', space=sflag, size = 0x4, scoped, tag = 'scoped memory for tpu_custom_call.1']
    #allocation10 [shape = 'u8[65536]{0}', space=vmem, size = 0x10000, scoped, tag = 'input window, operand 6, single buffered']
    #allocation11 [shape = 'u8[65536]{0}', space=vmem, size = 0x10000, scoped, tag = 'input window, operand 8, single buffered']
    #allocation12 [shape = 's32[1]{0}', space=sflag, size = 0x4, scoped, tag = 'scoped memory for tpu_custom_call.1']
    #allocation13 [shape = 'u8[65536]{0}', space=vmem, size = 0x10000, scoped, tag = 'output window, operand 0']
    #allocation14 [shape = 'u8[65536]{0}', space=vmem, size = 0x10000, scoped, tag = 'output window, operand 1']
    #allocation15 [shape = 's32[2]{0}', space=sflag, size = 0x8, scoped, tag = 'scoped memory for tpu_custom_call.1']
    %17 = vsyncpa [#allocation3], 0
    %s18 = scalar_lea.sflag [#allocation3], 1
    %19 = vsyncpa %s18, 0
    %20 = vsyncpa [#allocation6], 0
    %s21 = scalar_lea.sflag [#allocation6], 1
    %22 = vsyncpa %s21, 0
    %23 = vsyncpa [#allocation9], 0
    %24 = vsyncpa [#allocation12], 0
    %25 = vsyncpa [#allocation4], 0
    %s26 = scalar_lea.sflag [#allocation4], 1
    %27 = vsyncpa %s26, 0
    %28 = vsyncpa [#allocation15], 0
    %s29 = scalar_lea.sflag [#allocation15], 1
    %30 = vsyncpa %s29, 0
    loop: start=0, step=1, limit=5
    $region2: #{tpu_custom_call.1} parent=1 // loop_pre_header
      _
    $region3: #{tpu_custom_call.1} parent=1 // loop_header
      %s32 = sphi 0, %s36
      %p33 = scmp.ge.s32.totalorder %s32, 5
      %s42 = sphi 0, %s44
      %s45 = sphi 0, %s42
      %s46 = sphi 0, %s45
      %s62 = sphi 0, %s46
      %s68 = sphi 0, %s70
      %s71 = sphi 0, %s68
      %s72 = sphi 0, %s71
      %s88 = sphi 0, %s72
      %s92 = sphi 0, %s92
      %s94 = sphi 0, %s92
      %s95 = sphi 0, %s94
      %s109 = sphi 0, %s95
      %s113 = sphi 0, %s113
      %s115 = sphi 0, %s113
      %s116 = sphi 0, %s115
      %s130 = sphi 0, %s116
      %s134 = sphi 0, %s134
      %s136 = sphi 0, %s134
      %s137 = sphi 0, %s136
      %s151 = sphi 0, %s137
      %s155 = sphi 0, %s155
      %s157 = sphi 0, %s155
      %s158 = sphi 0, %s157
      %s172 = sphi 0, %s158
      %s176 = sphi 0, %s176
      %s178 = sphi 0, %s176
      %s179 = sphi 0, %s178
      %s193 = sphi 0, %s179
      %s197 = sphi 0, %s197
      %s199 = sphi 0, %s197
      %s200 = sphi 0, %s199
      %s214 = sphi 0, %s200
      %s218 = sphi 0, %s218
      %s220 = sphi 0, %s218
      %s221 = sphi 0, %s220
      %s235 = sphi 0, %s221
      %s239 = sphi 0, %s239
      %s241 = sphi 0, %s239
      %s242 = sphi 0, %s241
      %s256 = sphi 0, %s242
      %s262 = sphi 0, %s264
      %s265 = sphi 0, %s262
      %s266 = sphi 0, %s265
      %s282 = sphi 0, %s266
      %s288 = sphi 0, %s290
      %s291 = sphi 0, %s288
      %s292 = sphi 0, %s291
      %s308 = sphi 0, %s292
    $region4: #{tpu_custom_call.1} parent=1 // loop_header_branch
      %35 = sbr.rel (%p33) target = $region8
    $region5: #{tpu_custom_call.1} parent=1 // loop_body
      %s37 = ssub.s32 %s32, 1
      %s38 = ssub.s32 %s32, 2
      %s39 = sadd.s32 %s32, 1
      %s40 = ssub.s32 %s32, %s39
      %p41 = scmp.eq.s32.totalorder %s40, 0
      %s43 = sadd.s32 %s42, 1
      %s44 = scalar_select %p41, %s42, %s43
      %p47 = pneg %p41
      %p48 = scmp.eq.s32.totalorder %s32, 2
      %p49 = por %p47, %p48
      %p50 = scmp.ne.s32.totalorder %s42, %s45
      %p51 = scmp.eq.s32.totalorder %s32, 0
      %p52 = por %p50, %p51
      %p53 = scmp.ne.s32.totalorder %s42, %s45
      %p54 = scmp.eq.s32.totalorder %s37, 2
      %p55 = por %p53, %p54
      %p56 = scmp.ne.s32.totalorder %s45, %s46
      %p57 = scmp.eq.s32.totalorder %s37, 0
      %p58 = por %p56, %p57
      %p59 = scmp.ne.s32.totalorder %s45, %s46
      %p60 = scmp.eq.s32.totalorder %s38, 2
      %p61 = por %p59, %p60
      %p63 = scmp.ne.s32.totalorder %s46, %s62
      %p64 = scmp.eq.s32.totalorder %s38, 0
      %p65 = por %p63, %p64
      %s66 = ssub.s32 %s32, %s39
      %p67 = scmp.eq.s32.totalorder %s66, 0
      %s69 = sadd.s32 %s68, 1
      %s70 = scalar_select %p67, %s68, %s69
      %p73 = pneg %p67
      %p74 = scmp.eq.s32.totalorder %s32, 2
      %p75 = por %p73, %p74
      %p76 = scmp.ne.s32.totalorder %s68, %s71
      %p77 = scmp.eq.s32.totalorder %s32, 0
      %p78 = por %p76, %p77
      %p79 = scmp.ne.s32.totalorder %s68, %s71
      %p80 = scmp.eq.s32.totalorder %s37, 2
      %p81 = por %p79, %p80
      %p82 = scmp.ne.s32.totalorder %s71, %s72
      %p83 = scmp.eq.s32.totalorder %s37, 0
      %p84 = por %p82, %p83
      %p85 = scmp.ne.s32.totalorder %s71, %s72
      %p86 = scmp.eq.s32.totalorder %s38, 2
      %p87 = por %p85, %p86
      %p89 = scmp.ne.s32.totalorder %s72, %s88
      %p90 = scmp.eq.s32.totalorder %s38, 0
      %p91 = por %p89, %p90
      %s93 = sadd.s32 %s92, 1
      %p96 = scmp.eq.s32.totalorder %s32, 2
      %p97 = scmp.ne.s32.totalorder %s92, %s94
      %p98 = scmp.eq.s32.totalorder %s32, 0
      %p99 = por %p97, %p98
      %p100 = scmp.ne.s32.totalorder %s92, %s94
      %p101 = scmp.eq.s32.totalorder %s37, 2
      %p102 = por %p100, %p101
      %p103 = scmp.ne.s32.totalorder %s94, %s95
      %p104 = scmp.eq.s32.totalorder %s37, 0
      %p105 = por %p103, %p104
      %p106 = scmp.ne.s32.totalorder %s94, %s95
      %p107 = scmp.eq.s32.totalorder %s38, 2
      %p108 = por %p106, %p107
      %p110 = scmp.ne.s32.totalorder %s95, %s109
      %p111 = scmp.eq.s32.totalorder %s38, 0
      %p112 = por %p110, %p111
      %s114 = sadd.s32 %s113, 1
      %p117 = scmp.eq.s32.totalorder %s32, 2
      %p118 = scmp.ne.s32.totalorder %s113, %s115
      %p119 = scmp.eq.s32.totalorder %s32, 0
      %p120 = por %p118, %p119
      %p121 = scmp.ne.s32.totalorder %s113, %s115
      %p122 = scmp.eq.s32.totalorder %s37, 2
      %p123 = por %p121, %p122
      %p124 = scmp.ne.s32.totalorder %s115, %s116
      %p125 = scmp.eq.s32.totalorder %s37, 0
      %p126 = por %p124, %p125
      %p127 = scmp.ne.s32.totalorder %s115, %s116
      %p128 = scmp.eq.s32.totalorder %s38, 2
      %p129 = por %p127, %p128
      %p131 = scmp.ne.s32.totalorder %s116, %s130
      %p132 = scmp.eq.s32.totalorder %s38, 0
      %p133 = por %p131, %p132
      %s135 = sadd.s32 %s134, 1
      %p138 = scmp.eq.s32.totalorder %s32, 2
      %p139 = scmp.ne.s32.totalorder %s134, %s136
      %p140 = scmp.eq.s32.totalorder %s32, 0
      %p141 = por %p139, %p140
      %p142 = scmp.ne.s32.totalorder %s134, %s136
      %p143 = scmp.eq.s32.totalorder %s37, 2
      %p144 = por %p142, %p143
      %p145 = scmp.ne.s32.totalorder %s136, %s137
      %p146 = scmp.eq.s32.totalorder %s37, 0
      %p147 = por %p145, %p146
      %p148 = scmp.ne.s32.totalorder %s136, %s137
      %p149 = scmp.eq.s32.totalorder %s38, 2
      %p150 = por %p148, %p149
      %p152 = scmp.ne.s32.totalorder %s137, %s151
      %p153 = scmp.eq.s32.totalorder %s38, 0
      %p154 = por %p152, %p153
      %s156 = sadd.s32 %s155, 1
      %p159 = scmp.eq.s32.totalorder %s32, 2
      %p160 = scmp.ne.s32.totalorder %s155, %s157
      %p161 = scmp.eq.s32.totalorder %s32, 0
      %p162 = por %p160, %p161
      %p163 = scmp.ne.s32.totalorder %s155, %s157
      %p164 = scmp.eq.s32.totalorder %s37, 2
      %p165 = por %p163, %p164
      %p166 = scmp.ne.s32.totalorder %s157, %s158
      %p167 = scmp.eq.s32.totalorder %s37, 0
      %p168 = por %p166, %p167
      %p169 = scmp.ne.s32.totalorder %s157, %s158
      %p170 = scmp.eq.s32.totalorder %s38, 2
      %p171 = por %p169, %p170
      %p173 = scmp.ne.s32.totalorder %s158, %s172
      %p174 = scmp.eq.s32.totalorder %s38, 0
      %p175 = por %p173, %p174
      %s177 = sadd.s32 %s176, 1
      %p180 = scmp.eq.s32.totalorder %s32, 2
      %p181 = scmp.ne.s32.totalorder %s176, %s178
      %p182 = scmp.eq.s32.totalorder %s32, 0
      %p183 = por %p181, %p182
      %p184 = scmp.ne.s32.totalorder %s176, %s178
      %p185 = scmp.eq.s32.totalorder %s37, 2
      %p186 = por %p184, %p185
      %p187 = scmp.ne.s32.totalorder %s178, %s179
      %p188 = scmp.eq.s32.totalorder %s37, 0
      %p189 = por %p187, %p188
      %p190 = scmp.ne.s32.totalorder %s178, %s179
      %p191 = scmp.eq.s32.totalorder %s38, 2
      %p192 = por %p190, %p191
      %p194 = scmp.ne.s32.totalorder %s179, %s193
      %p195 = scmp.eq.s32.totalorder %s38, 0
      %p196 = por %p194, %p195
      %s198 = sadd.s32 %s197, 1
      %p201 = scmp.eq.s32.totalorder %s32, 2
      %p202 = scmp.ne.s32.totalorder %s197, %s199
      %p203 = scmp.eq.s32.totalorder %s32, 0
      %p204 = por %p202, %p203
      %p205 = scmp.ne.s32.totalorder %s197, %s199
      %p206 = scmp.eq.s32.totalorder %s37, 2
      %p207 = por %p205, %p206
      %p208 = scmp.ne.s32.totalorder %s199, %s200
      %p209 = scmp.eq.s32.totalorder %s37, 0
      %p210 = por %p208, %p209
      %p211 = scmp.ne.s32.totalorder %s199, %s200
      %p212 = scmp.eq.s32.totalorder %s38, 2
      %p213 = por %p211, %p212
      %p215 = scmp.ne.s32.totalorder %s200, %s214
      %p216 = scmp.eq.s32.totalorder %s38, 0
      %p217 = por %p215, %p216
      %s219 = sadd.s32 %s218, 1
      %p222 = scmp.eq.s32.totalorder %s32, 2
      %p223 = scmp.ne.s32.totalorder %s218, %s220
      %p224 = scmp.eq.s32.totalorder %s32, 0
      %p225 = por %p223, %p224
      %p226 = scmp.ne.s32.totalorder %s218, %s220
      %p227 = scmp.eq.s32.totalorder %s37, 2
      %p228 = por %p226, %p227
      %p229 = scmp.ne.s32.totalorder %s220, %s221
      %p230 = scmp.eq.s32.totalorder %s37, 0
      %p231 = por %p229, %p230
      %p232 = scmp.ne.s32.totalorder %s220, %s221
      %p233 = scmp.eq.s32.totalorder %s38, 2
      %p234 = por %p232, %p233
      %p236 = scmp.ne.s32.totalorder %s221, %s235
      %p237 = scmp.eq.s32.totalorder %s38, 0
      %p238 = por %p236, %p237
      %s240 = sadd.s32 %s239, 1
      %p243 = scmp.eq.s32.totalorder %s32, 2
      %p244 = scmp.ne.s32.totalorder %s239, %s241
      %p245 = scmp.eq.s32.totalorder %s32, 0
      %p246 = por %p244, %p245
      %p247 = scmp.ne.s32.totalorder %s239, %s241
      %p248 = scmp.eq.s32.totalorder %s37, 2
      %p249 = por %p247, %p248
      %p250 = scmp.ne.s32.totalorder %s241, %s242
      %p251 = scmp.eq.s32.totalorder %s37, 0
      %p252 = por %p250, %p251
      %p253 = scmp.ne.s32.totalorder %s241, %s242
      %p254 = scmp.eq.s32.totalorder %s38, 2
      %p255 = por %p253, %p254
      %p257 = scmp.ne.s32.totalorder %s242, %s256
      %p258 = scmp.eq.s32.totalorder %s38, 0
      %p259 = por %p257, %p258
      %s260 = ssub.s32 %s32, %s39
      %p261 = scmp.eq.s32.totalorder %s260, 0
      %s263 = sadd.s32 %s262, 1
      %s264 = scalar_select %p261, %s262, %s263
      %p267 = pneg %p261
      %p268 = scmp.eq.s32.totalorder %s32, 2
      %p269 = por %p267, %p268
      %p270 = scmp.ne.s32.totalorder %s262, %s265
      %p271 = scmp.eq.s32.totalorder %s32, 0
      %p272 = por %p270, %p271
      %p273 = scmp.ne.s32.totalorder %s262, %s265
      %p274 = scmp.eq.s32.totalorder %s37, 2
      %p275 = por %p273, %p274
      %p276 = scmp.ne.s32.totalorder %s265, %s266
      %p277 = scmp.eq.s32.totalorder %s37, 0
      %p278 = por %p276, %p277
      %p279 = scmp.ne.s32.totalorder %s265, %s266
      %p280 = scmp.eq.s32.totalorder %s38, 2
      %p281 = por %p279, %p280
      %p283 = scmp.ne.s32.totalorder %s266, %s282
      %p284 = scmp.eq.s32.totalorder %s38, 0
      %p285 = por %p283, %p284
      %s286 = ssub.s32 %s32, %s39
      %p287 = scmp.eq.s32.totalorder %s286, 0
      %s289 = sadd.s32 %s288, 1
      %s290 = scalar_select %p287, %s288, %s289
      %p293 = pneg %p287
      %p294 = scmp.eq.s32.totalorder %s32, 2
      %p295 = por %p293, %p294
      %p296 = scmp.ne.s32.totalorder %s288, %s291
      %p297 = scmp.eq.s32.totalorder %s32, 0
      %p298 = por %p296, %p297
      %p299 = scmp.ne.s32.totalorder %s288, %s291
      %p300 = scmp.eq.s32.totalorder %s37, 2
      %p301 = por %p299, %p300
      %p302 = scmp.ne.s32.totalorder %s291, %s292
      %p303 = scmp.eq.s32.totalorder %s37, 0
      %p304 = por %p302, %p303
      %p305 = scmp.ne.s32.totalorder %s291, %s292
      %p306 = scmp.eq.s32.totalorder %s38, 2
      %p307 = por %p305, %p306
      %p309 = scmp.ne.s32.totalorder %s292, %s308
      %p310 = scmp.eq.s32.totalorder %s38, 0
      %p311 = por %p309, %p310
      %p312 = scmp.le.s32.totalorder 1, %s32
      %p313 = scmp.lt.s32.totalorder %s32, 4
      %p314 = pnand %p312, %p313
      %p315 = pneg %p314
      // Predicated region
      $region9: #{tpu_custom_call.1} parent=5 // pred_check
        _
      $region10: #{tpu_custom_call.1} parent=5 // pred_check_branch
        %317 = sbr.rel (%p314) target = $region12
      $region11: #{tpu_custom_call.1} parent=5 // pred_region
        %s318 = ssub.s32 %s32, 1
        // Predicated region
        $region13: #{tpu_custom_call.1} parent=11 // pred_check
          %p319 = pneg %p105
        $region14: #{tpu_custom_call.1} parent=11 // pred_check_branch
          %321 = sbr.rel (%p319) target = $region16
        $region15: #{tpu_custom_call.1} parent=11 // pred_region
          %s323 = ssub.s32 2048, 2048
          %324 = vsyncadd [#allocation6], %s323
          %s325 = sshll.u32 [#allocation7], 4
          %s326 = int_to_ptr.vmem [resolvable:$true] %s325
          %331 = dma.hbm_to_vmem [thread:$0]  %s2, 2048, %s326, [#allocation6], 128, 128, 8
        $region16: #{tpu_custom_call.1} parent=11 // pred_fallthru
          _
        // Predicated region
        $region17: #{tpu_custom_call.1} parent=11 // pred_check
          %p332 = pneg %p126
        $region18: #{tpu_custom_call.1} parent=11 // pred_check_branch
          %334 = sbr.rel (%p332) target = $region20
        $region19: #{tpu_custom_call.1} parent=11 // pred_region
          _
        $region20: #{tpu_custom_call.1} parent=11 // pred_fallthru
          _
        // Predicated region
        $region21: #{tpu_custom_call.1} parent=11 // pred_check
          %p335 = pneg %p147
        $region22: #{tpu_custom_call.1} parent=11 // pred_check_branch
          %337 = sbr.rel (%p335) target = $region24
        $region23: #{tpu_custom_call.1} parent=11 // pred_region
          %s339 = ssub.s32 2048, 2048
          %340 = vsyncadd [#allocation9], %s339
          %s341 = sshll.u32 [#allocation8], 4
          %s342 = int_to_ptr.vmem [resolvable:$true] %s341
          %347 = dma.hbm_to_vmem [thread:$0]  %s4, 2048, %s342, [#allocation9], 64, 64, 4
        $region24: #{tpu_custom_call.1} parent=11 // pred_fallthru
          _
        // Predicated region
        $region25: #{tpu_custom_call.1} parent=11 // pred_check
          %p348 = pneg %p168
        $region26: #{tpu_custom_call.1} parent=11 // pred_check_branch
          %350 = sbr.rel (%p348) target = $region28
        $region27: #{tpu_custom_call.1} parent=11 // pred_region
          _
        $region28: #{tpu_custom_call.1} parent=11 // pred_fallthru
          _
        // Predicated region
        $region29: #{tpu_custom_call.1} parent=11 // pred_check
          %p351 = pneg %p189
        $region30: #{tpu_custom_call.1} parent=11 // pred_check_branch
          %353 = sbr.rel (%p351) target = $region32
        $region31: #{tpu_custom_call.1} parent=11 // pred_region
          %s355 = ssub.s32 2048, 2048
          %356 = vsyncadd [#allocation9], %s355
          %s357 = sshll.u32 [#allocation10], 4
          %s358 = int_to_ptr.vmem [resolvable:$true] %s357
          %363 = dma.hbm_to_vmem [thread:$0]  %s6, 2048, %s358, [#allocation9], 128, 128, 8
        $region32: #{tpu_custom_call.1} parent=11 // pred_fallthru
          _
        // Predicated region
        $region33: #{tpu_custom_call.1} parent=11 // pred_check
          %p364 = pneg %p210
        $region34: #{tpu_custom_call.1} parent=11 // pred_check_branch
          %366 = sbr.rel (%p364) target = $region36
        $region35: #{tpu_custom_call.1} parent=11 // pred_region
          _
        $region36: #{tpu_custom_call.1} parent=11 // pred_fallthru
          _
        // Predicated region
        $region37: #{tpu_custom_call.1} parent=11 // pred_check
          %p367 = pneg %p231
        $region38: #{tpu_custom_call.1} parent=11 // pred_check_branch
          %369 = sbr.rel (%p367) target = $region40
        $region39: #{tpu_custom_call.1} parent=11 // pred_region
          %s371 = ssub.s32 2048, 2048
          %372 = vsyncadd [#allocation12], %s371
          %s373 = sshll.u32 [#allocation11], 4
          %s374 = int_to_ptr.vmem [resolvable:$true] %s373
          %379 = dma.hbm_to_vmem [thread:$0]  %s8, 2048, %s374, [#allocation12], 64, 64, 4
        $region40: #{tpu_custom_call.1} parent=11 // pred_fallthru
          _
        // Predicated region
        $region41: #{tpu_custom_call.1} parent=11 // pred_check
          %p380 = pneg %p252
        $region42: #{tpu_custom_call.1} parent=11 // pred_check_branch
          %382 = sbr.rel (%p380) target = $region44
        $region43: #{tpu_custom_call.1} parent=11 // pred_region
          _
        $region44: #{tpu_custom_call.1} parent=11 // pred_fallthru
          _
      $region12: #{tpu_custom_call.1} parent=5 // pred_fallthru
        _
      %p383 = scmp.lt.s32.totalorder %s32, 3
      // Predicated region
      $region45: #{tpu_custom_call.1} parent=5 // pred_check
        %p384 = pneg %p383
      $region46: #{tpu_custom_call.1} parent=5 // pred_check_branch
        %386 = sbr.rel (%p384) target = $region48
      $region47: #{tpu_custom_call.1} parent=5 // pred_region
        // Predicated region
        $region49: #{tpu_custom_call.1} parent=47 // pred_check
          %p387 = pneg %p52
        $region50: #{tpu_custom_call.1} parent=47 // pred_check_branch
          %389 = sbr.rel (%p387) target = $region52
        $region51: #{tpu_custom_call.1} parent=47 // pred_region
          %s390 = sand.u32 %s42, 1
          %s391 = scalar_lea.sflag [#allocation3], %s390
          %s392 = sand.u32 %s42, 1
          %s393 = smul.addr %s392, 64
          %s394 = scalar_lea.vmem [#allocation2], %s393
          %s395 = smul.u32 8, %s32
          %s396 = ssub.s32 18, %s395
          %p397 = scmp.lt.s32.totalorder %s396, 8
          %s398 = scalar_select %p397, %s396, 8
          %s399 = smul.u32 128, %s398
          %s401 = ssub.s32 1024, %s399
          %402 = vsyncadd %s391, %s401
          %p403 = scmp.ne.s32.totalorder 0, %s399
          %s404 = smul.addr %s395, 128
          %s405 = scalar_lea.hbm %s0, %s404
          %s406 = smul.u32 8, %s398
          %s407 = sshll.u32 %s394, 4
          %s408 = int_to_ptr.vmem [resolvable:$true] %s407
          %s409 = sshll.u32 %s406, 4
          %413 = dma.hbm_to_vmem [thread:$0]  (%p403), %s405, %s409, %s408, %s391, 128, 128, 8
        $region52: #{tpu_custom_call.1} parent=47 // pred_fallthru
          _
        // Predicated region
        $region53: #{tpu_custom_call.1} parent=47 // pred_check
          %p414 = pneg %p78
        $region54: #{tpu_custom_call.1} parent=47 // pred_check_branch
          %416 = sbr.rel (%p414) target = $region56
        $region55: #{tpu_custom_call.1} parent=47 // pred_region
          %s417 = sand.u32 %s32, 1
          %s418 = scalar_lea.sflag [#allocation6], %s417
          %s419 = sand.u32 %s68, 1
          %s420 = smul.addr %s419, 64
          %s421 = scalar_lea.vmem [#allocation5], %s420
          %s422 = smul.u32 8, %s32
          %s423 = ssub.s32 18, %s422
          %p424 = scmp.lt.s32.totalorder %s423, 8
          %s425 = scalar_select %p424, %s423, 8
          %s426 = smul.u32 128, %s425
          %s428 = ssub.s32 1024, %s426
          %429 = vsyncadd %s418, %s428
          %p430 = scmp.ne.s32.totalorder 0, %s426
          %s431 = smul.addr %s422, 128
          %s432 = scalar_lea.hbm %s1, %s431
          %s433 = smul.u32 8, %s425
          %s434 = sshll.u32 %s421, 4
          %s435 = int_to_ptr.vmem [resolvable:$true] %s434
          %s436 = sshll.u32 %s433, 4
          %440 = dma.hbm_to_vmem [thread:$0]  (%p430), %s432, %s436, %s435, %s418, 128, 128, 8
        $region56: #{tpu_custom_call.1} parent=47 // pred_fallthru
          _
      $region48: #{tpu_custom_call.1} parent=5 // pred_fallthru
        _
      %p441 = scmp.le.s32.totalorder 1, %s32
      %p442 = scmp.lt.s32.totalorder %s32, 4
      %p443 = pnand %p441, %p442
      %p444 = pneg %p443
      // Predicated region
      $region57: #{tpu_custom_call.1} parent=5 // pred_check
        _
      $region58: #{tpu_custom_call.1} parent=5 // pred_check_branch
        %446 = sbr.rel (%p443) target = $region60
      $region59: #{tpu_custom_call.1} parent=5 // pred_region
        %s447 = ssub.s32 %s32, 1
        %s448 = sand.u32 %s45, 1
        %s449 = scalar_lea.sflag [#allocation3], %s448
        %s450 = sand.u32 %s45, 1
        %s451 = smul.addr %s450, 64
        %s452 = scalar_lea.vmem [#allocation2], %s451
        // Predicated region
        $region61: #{tpu_custom_call.1} parent=59 // pred_check
          %p453 = pneg %p58
        $region62: #{tpu_custom_call.1} parent=59 // pred_check_branch
          %455 = sbr.rel (%p453) target = $region64
        $region63: #{tpu_custom_call.1} parent=59 // pred_region
          %456 = dma.done %s449, 1024
        $region64: #{tpu_custom_call.1} parent=59 // pred_fallthru
          _
        %s457 = sand.u32 %s37, 1
        %s458 = scalar_lea.sflag [#allocation6], %s457
        %s459 = sand.u32 %s71, 1
        %s460 = smul.addr %s459, 64
        %s461 = scalar_lea.vmem [#allocation5], %s460
        // Predicated region
        $region65: #{tpu_custom_call.1} parent=59 // pred_check
          %p462 = pneg %p84
        $region66: #{tpu_custom_call.1} parent=59 // pred_check_branch
          %464 = sbr.rel (%p462) target = $region68
        $region67: #{tpu_custom_call.1} parent=59 // pred_region
          %465 = dma.done %s458, 1024
        $region68: #{tpu_custom_call.1} parent=59 // pred_fallthru
          _
        // Predicated region
        $region69: #{tpu_custom_call.1} parent=59 // pred_check
          %p466 = pneg %p105
        $region70: #{tpu_custom_call.1} parent=59 // pred_check_branch
          %468 = sbr.rel (%p466) target = $region72
        $region71: #{tpu_custom_call.1} parent=59 // pred_region
          %469 = dma.done [#allocation6], 2048
        $region72: #{tpu_custom_call.1} parent=59 // pred_fallthru
          _
        // Predicated region
        $region73: #{tpu_custom_call.1} parent=59 // pred_check
          %p470 = pneg %p147
        $region74: #{tpu_custom_call.1} parent=59 // pred_check_branch
          %472 = sbr.rel (%p470) target = $region76
        $region75: #{tpu_custom_call.1} parent=59 // pred_region
          %473 = dma.done [#allocation9], 2048
        $region76: #{tpu_custom_call.1} parent=59 // pred_fallthru
          _
        // Predicated region
        $region77: #{tpu_custom_call.1} parent=59 // pred_check
          %p474 = pneg %p189
        $region78: #{tpu_custom_call.1} parent=59 // pred_check_branch
          %476 = sbr.rel (%p474) target = $region80
        $region79: #{tpu_custom_call.1} parent=59 // pred_region
          %477 = dma.done [#allocation9], 2048
        $region80: #{tpu_custom_call.1} parent=59 // pred_fallthru
          _
        // Predicated region
        $region81: #{tpu_custom_call.1} parent=59 // pred_check
          %p478 = pneg %p231
        $region82: #{tpu_custom_call.1} parent=59 // pred_check_branch
          %480 = sbr.rel (%p478) target = $region84
        $region83: #{tpu_custom_call.1} parent=59 // pred_region
          %481 = dma.done [#allocation12], 2048
        $region84: #{tpu_custom_call.1} parent=59 // pred_fallthru
          _
        %s482 = sand.u32 %s45, 1
        %s483 = scalar_lea.sflag [#allocation3], %s482
        %s484 = sand.u32 %s45, 1
        %s485 = smul.addr %s484, 64
        %s486 = scalar_lea.vmem [#allocation2], %s485
        %p487 = pneg %p58
        %p488 = pneg %p55
        %s489 = sand.u32 %s37, 1
        %s490 = scalar_lea.sflag [#allocation6], %s489
        %s491 = sand.u32 %s71, 1
        %s492 = smul.addr %s491, 64
        %s493 = scalar_lea.vmem [#allocation5], %s492
        %p494 = pneg %p84
        %p495 = pneg %p81
        %p496 = pneg %p105
        %p497 = pneg %p102
        %p498 = pneg %p126
        %p499 = pneg %p123
        %p500 = pneg %p147
        %p501 = pneg %p144
        %p502 = pneg %p168
        %p503 = pneg %p165
        %p504 = pneg %p189
        %p505 = pneg %p186
        %p506 = pneg %p210
        %p507 = pneg %p207
        %p508 = pneg %p231
        %p509 = pneg %p228
        %p510 = pneg %p252
        %p511 = pneg %p249
        %p512 = pneg %p278
        %p513 = pneg %p275
        %s514 = sand.u32 %s265, 1
        %s515 = scalar_lea.sflag [#allocation4], %s514
        %s516 = sand.u32 %s265, 1
        %s517 = smul.addr %s516, 64
        %s518 = scalar_lea.vmem [#allocation13], %s517
        %p519 = pneg %p304
        %p520 = pneg %p301
        %s521 = sand.u32 %s291, 1
        %s522 = scalar_lea.sflag [#allocation15], %s521
        %s523 = sand.u32 %s291, 1
        %s524 = smul.addr %s523, 64
        %s525 = scalar_lea.vmem [#allocation14], %s524
        %s526 = smul.u32 8, %s37
        %s527 = ssub.s32 18, %s526
        %p528 = scmp.lt.s32.totalorder %s527, 8
        %s529 = scalar_select %p528, %s527, 8
        %s530 = smul.u32 128, %s529
        %s531 = smul.u32 8, %s37
        %s532 = ssub.s32 18, %s531
        %p533 = scmp.lt.s32.totalorder %s532, 8
        %s534 = scalar_select %p533, %s532, 8
        %s535 = smul.u32 128, %s534
        %s536 = smul.u32 8, %s37
        %s537 = ssub.s32 18, %s536
        %p538 = scmp.lt.s32.totalorder %s537, 8
        %s539 = scalar_select %p538, %s537, 8
        %s540 = smul.u32 128, %s539
        %s541 = smul.u32 8, %s37
        %s542 = ssub.s32 18, %s541
        %p543 = scmp.lt.s32.totalorder %s542, 8
        %s544 = scalar_select %p543, %s542, 8
        %s545 = smul.u32 128, %s544
        %v547 = vld [vmem:[%s452] sm:$0xff]
        %v548 = vld [vmem:[%s452 + $0x8] sm:$0xff]
        %v549 = vld [vmem:[%s452 + $0x10] sm:$0xff]
        %v550 = vld [vmem:[%s452 + $0x18] sm:$0xff]
        %v551 = vld [vmem:[%s452 + $0x20] sm:$0xff]
        %v552 = vld [vmem:[%s452 + $0x28] sm:$0xff]
        %v553 = vld [vmem:[%s452 + $0x30] sm:$0xff]
        %v554 = vld [vmem:[%s452 + $0x38] sm:$0xff]
        %v555 = vpack.c.bf16 %v548, %v547
        %v556 = vpack.c.bf16 %v550, %v549
        %v557 = vpack.c.bf16 %v552, %v551
        %v558 = vpack.c.bf16 %v554, %v553
        %v559 = vld [vmem:[#allocation7] sm:$0xff]
        %v560 = vld [vmem:[#allocation7 + $0x8] sm:$0xff]
        %v561 = vld [vmem:[#allocation7 + $0x10] sm:$0xff]
        %v562 = vld [vmem:[#allocation7 + $0x18] sm:$0xff]
        %v563 = vld [vmem:[#allocation7 + $0x20] sm:$0xff]
        %v564 = vld [vmem:[#allocation7 + $0x28] sm:$0xff]
        %v565 = vld [vmem:[#allocation7 + $0x30] sm:$0xff]
        %v566 = vld [vmem:[#allocation7 + $0x38] sm:$0xff]
        %v567 = vld [vmem:[#allocation7 + $0x40] sm:$0xff]
        %v568 = vld [vmem:[#allocation7 + $0x48] sm:$0xff]
        %v569 = vld [vmem:[#allocation7 + $0x50] sm:$0xff]
        %v570 = vld [vmem:[#allocation7 + $0x58] sm:$0xff]
        %v571 = vld [vmem:[#allocation7 + $0x60] sm:$0xff]
        %v572 = vld [vmem:[#allocation7 + $0x68] sm:$0xff]
        %v573 = vld [vmem:[#allocation7 + $0x70] sm:$0xff]
        %v574 = vld [vmem:[#allocation7 + $0x78] sm:$0xff]
        %v575 = vld [vmem:[%s3] sm:$0x3]
        %v577 = vlaneseq
        %v578 = vshrl.u32 %v577, 7
        %v579 = vsub.s32 0, %v578
        %v580 = vrot.slane %v575, %v579
        %v581 = vlaneseq
        %v582 = vshrl.u32 %v581, 7
        %v583 = vsub.s32 1, %v582
        %v584 = vrot.slane %v575, %v583
        %v603 = vunpack.c.l.b16 %v559
        %v604 = vunpack.c.h.b16 %v559
        %v605 = vunpack.c.l.b16 %v560
        %v606 = vunpack.c.h.b16 %v560
        %v607 = vunpack.c.l.b16 %v561
        %v608 = vunpack.c.h.b16 %v561
        %v609 = vunpack.c.l.b16 %v562
        %v610 = vunpack.c.h.b16 %v562
        %v611 = vunpack.c.l.b16 %v563
        %v612 = vunpack.c.h.b16 %v563
        %v613 = vunpack.c.l.b16 %v564
        %v614 = vunpack.c.h.b16 %v564
        %v615 = vunpack.c.l.b16 %v565
        %v616 = vunpack.c.h.b16 %v565
        %v617 = vunpack.c.l.b16 %v566
        %v618 = vunpack.c.h.b16 %v566
        %v619 = vunpack.c.l.b16 %v567
        %v620 = vunpack.c.h.b16 %v567
        %v621 = vunpack.c.l.b16 %v568
        %v622 = vunpack.c.h.b16 %v568
        %v623 = vunpack.c.l.b16 %v569
        %v624 = vunpack.c.h.b16 %v569
        %v625 = vunpack.c.l.b16 %v570
        %v626 = vunpack.c.h.b16 %v570
        %v627 = vunpack.c.l.b16 %v571
        %v628 = vunpack.c.h.b16 %v571
        %v629 = vunpack.c.l.b16 %v572
        %v630 = vunpack.c.h.b16 %v572
        %v631 = vunpack.c.l.b16 %v573
        %v632 = vunpack.c.h.b16 %v573
        %v633 = vunpack.c.l.b16 %v574
        %v634 = vunpack.c.h.b16 %v574
        %v635 = vpack.c.b16 %v605, %v603
        %v636 = vpack.c.b16 %v606, %v604
        %v637 = vpack.c.b16 %v609, %v607
        %v638 = vpack.c.b16 %v610, %v608
        %v639 = vpack.c.b16 %v613, %v611
        %v640 = vpack.c.b16 %v614, %v612
        %v641 = vpack.c.b16 %v617, %v615
        %v642 = vpack.c.b16 %v618, %v616
        %v643 = vpack.c.b16 %v621, %v619
        %v644 = vpack.c.b16 %v622, %v620
        %v645 = vpack.c.b16 %v625, %v623
        %v646 = vpack.c.b16 %v626, %v624
        %v647 = vpack.c.b16 %v629, %v627
        %v648 = vpack.c.b16 %v630, %v628
        %v649 = vpack.c.b16 %v633, %v631
        %v650 = vpack.c.b16 %v634, %v632
        %667 = vmatprep.subr.bf16.mxu0 %v636
        %668 = vmatpush1.bf16.msra.mxu0 %v635
        %669 = vmatprep.subr.bf16.mxu0 %v638
        %670 = vmatpush1.bf16.msra.mxu0 %v637
        %671 = vmatprep.subr.bf16.mxu0 %v640
        %672 = vmatpush1.bf16.msra.mxu0 %v639
        %673 = vmatprep.subr.bf16.mxu0 %v642
        %674 = vmatpush1.bf16.msra.mxu0 %v641
        %675 = vmatprep.subr.bf16.mxu0 %v644
        %676 = vmatpush1.bf16.msra.mxu0 %v643
        %677 = vmatprep.subr.bf16.mxu0 %v646
        %678 = vmatpush1.bf16.msra.mxu0 %v645
        %679 = vmatprep.subr.bf16.mxu0 %v648
        %680 = vmatpush1.bf16.msra.mxu0 %v647
        %681 = vmatprep.subr.bf16.mxu0 %v650
        %682 = vmatpush1.bf16.msra.mxu0 %v649
        %683 = vmatprep.subr.bf16.mxu0 0
        %684 = vmatpush1.bf16.msra.mxu0 0
        %685 = vmatprep.subr.bf16.mxu0 0
        %686 = vmatpush1.bf16.msra.mxu0 0
        %687 = vmatprep.subr.bf16.mxu0 0
        %688 = vmatpush1.bf16.msra.mxu0 0
        %689 = vmatprep.subr.bf16.mxu0 0
        %690 = vmatpush1.bf16.msra.mxu0 0
        %691 = vmatprep.subr.bf16.mxu0 0
        %692 = vmatpush1.bf16.msra.mxu0 0
        %693 = vmatprep.subr.bf16.mxu0 0
        %694 = vmatpush1.bf16.msra.mxu0 0
        %695 = vmatprep.subr.bf16.mxu0 0
        %696 = vmatpush1.bf16.msra.mxu0 0
        %697 = vmatprep.subr.bf16.mxu0 0
        %698 = vmatpush1.bf16.msra.mxu0 0
        %699 = vmatprep.mubr.bf16.mxu0 0
        %700 = vmatmul.mubr.bf16.gmra.mrb[0].mxu0 %v555
        %v701 = vpop.f32.mrb[0].mxu0
        %v702 = vadd.f32 %v580, %v701
        %v703 = vpop.f32.mrb[0].mxu0
        %v704 = vadd.f32 %v584, %v703
        %v705 = vpop.f32.mrb[0].mxu0
        %v706 = vadd.f32 %v580, %v705
        %v707 = vpop.f32.mrb[0].mxu0
        %v708 = vadd.f32 %v584, %v707
        %709 = vmatprep.mubr.bf16.mxu0 0
        %710 = vmatmul.mubr.bf16.gmra.mrb[0].mxu0 %v556
        %v711 = vpop.f32.mrb[0].mxu0
        %v712 = vadd.f32 %v580, %v711
        %v713 = vpop.f32.mrb[0].mxu0
        %v714 = vadd.f32 %v584, %v713
        %v715 = vpop.f32.mrb[0].mxu0
        %v716 = vadd.f32 %v580, %v715
        %v717 = vpop.f32.mrb[0].mxu0
        %v718 = vadd.f32 %v584, %v717
        %719 = vmatprep.mubr.bf16.mxu0 0
        %720 = vmatmul.mubr.bf16.gmra.mrb[0].mxu0 %v557
        %v721 = vpop.f32.mrb[0].mxu0
        %v722 = vadd.f32 %v580, %v721
        %v723 = vpop.f32.mrb[0].mxu0
        %v724 = vadd.f32 %v584, %v723
        %v725 = vpop.f32.mrb[0].mxu0
        %v726 = vadd.f32 %v580, %v725
        %v727 = vpop.f32.mrb[0].mxu0
        %v728 = vadd.f32 %v584, %v727
        %729 = vmatprep.mubr.bf16.mxu0 0
        %730 = vmatmul.mubr.bf16.gmra.mrb[0].mxu0 %v558
        %v731 = vpop.f32.mrb[0].mxu0
        %v732 = vadd.f32 %v580, %v731
        %v733 = vpop.f32.mrb[0].mxu0
        %v734 = vadd.f32 %v584, %v733
        %v735 = vpop.f32.mrb[0].mxu0
        %v736 = vadd.f32 %v580, %v735
        %v737 = vpop.f32.mrb[0].mxu0
        %v738 = vadd.f32 %v584, %v737
        %739 = vdwg.mxu0
        %v740 = vmul.f32 %v702, 0.5
        %v741 = vmul.f32 %v704, 0.5
        %v742 = vmul.f32 %v706, 0.5
        %v743 = vmul.f32 %v708, 0.5
        %v744 = vmul.f32 %v712, 0.5
        %v745 = vmul.f32 %v714, 0.5
        %v746 = vmul.f32 %v716, 0.5
        %v747 = vmul.f32 %v718, 0.5
        %v748 = vmul.f32 %v722, 0.5
        %v749 = vmul.f32 %v724, 0.5
        %v750 = vmul.f32 %v726, 0.5
        %v751 = vmul.f32 %v728, 0.5
        %v752 = vmul.f32 %v732, 0.5
        %v753 = vmul.f32 %v734, 0.5
        %v754 = vmul.f32 %v736, 0.5
        %v755 = vmul.f32 %v738, 0.5
        %v756 = vmul.f32 %v702, 0.044715
        %v757 = vmul.f32 %v704, 0.044715
        %v758 = vmul.f32 %v706, 0.044715
        %v759 = vmul.f32 %v708, 0.044715
        %v760 = vmul.f32 %v712, 0.044715
        %v761 = vmul.f32 %v714, 0.044715
        %v762 = vmul.f32 %v716, 0.044715
        %v763 = vmul.f32 %v718, 0.044715
        %v764 = vmul.f32 %v722, 0.044715
        %v765 = vmul.f32 %v724, 0.044715
        %v766 = vmul.f32 %v726, 0.044715
        %v767 = vmul.f32 %v728, 0.044715
        %v768 = vmul.f32 %v732, 0.044715
        %v769 = vmul.f32 %v734, 0.044715
        %v770 = vmul.f32 %v736, 0.044715
        %v771 = vmul.f32 %v738, 0.044715
        %v772 = vmul.f32 %v756, %v702
        %v773 = vmul.f32 %v757, %v704
        %v774 = vmul.f32 %v758, %v706
        %v775 = vmul.f32 %v759, %v708
        %v776 = vmul.f32 %v760, %v712
        %v777 = vmul.f32 %v761, %v714
        %v778 = vmul.f32 %v762, %v716
        %v779 = vmul.f32 %v763, %v718
        %v780 = vmul.f32 %v764, %v722
        %v781 = vmul.f32 %v765, %v724
        %v782 = vmul.f32 %v766, %v726
        %v783 = vmul.f32 %v767, %v728
        %v784 = vmul.f32 %v768, %v732
        %v785 = vmul.f32 %v769, %v734
        %v786 = vmul.f32 %v770, %v736
        %v787 = vmul.f32 %v771, %v738
        %v788 = vmul.f32 %v772, %v702
        %v789 = vmul.f32 %v773, %v704
        %v790 = vmul.f32 %v774, %v706
        %v791 = vmul.f32 %v775, %v708
        %v792 = vmul.f32 %v776, %v712
        %v793 = vmul.f32 %v777, %v714
        %v794 = vmul.f32 %v778, %v716
        %v795 = vmul.f32 %v779, %v718
        %v796 = vmul.f32 %v780, %v722
        %v797 = vmul.f32 %v781, %v724
        %v798 = vmul.f32 %v782, %v726
        %v799 = vmul.f32 %v783, %v728
        %v800 = vmul.f32 %v784, %v732
        %v801 = vmul.f32 %v785, %v734
        %v802 = vmul.f32 %v786, %v736
        %v803 = vmul.f32 %v787, %v738
        %v804 = vadd.f32 %v702, %v788
        %v805 = vadd.f32 %v704, %v789
        %v806 = vadd.f32 %v706, %v790
        %v807 = vadd.f32 %v708, %v791
        %v808 = vadd.f32 %v712, %v792
        %v809 = vadd.f32 %v714, %v793
        %v810 = vadd.f32 %v716, %v794
        %v811 = vadd.f32 %v718, %v795
        %v812 = vadd.f32 %v722, %v796
        %v813 = vadd.f32 %v724, %v797
        %v814 = vadd.f32 %v726, %v798
        %v815 = vadd.f32 %v728, %v799
        %v816 = vadd.f32 %v732, %v800
        %v817 = vadd.f32 %v734, %v801
        %v818 = vadd.f32 %v736, %v802
        %v819 = vadd.f32 %v738, %v803
        %v820 = vmul.f32 %v804, 0.7978846
        %v821 = vmul.f32 %v805, 0.7978846
        %v822 = vmul.f32 %v806, 0.7978846
        %v823 = vmul.f32 %v807, 0.7978846
        %v824 = vmul.f32 %v808, 0.7978846
        %v825 = vmul.f32 %v809, 0.7978846
        %v826 = vmul.f32 %v810, 0.7978846
        %v827 = vmul.f32 %v811, 0.7978846
        %v828 = vmul.f32 %v812, 0.7978846
        %v829 = vmul.f32 %v813, 0.7978846
        %v830 = vmul.f32 %v814, 0.7978846
        %v831 = vmul.f32 %v815, 0.7978846
        %v832 = vmul.f32 %v816, 0.7978846
        %v833 = vmul.f32 %v817, 0.7978846
        %v834 = vmul.f32 %v818, 0.7978846
        %v835 = vmul.f32 %v819, 0.7978846
        %v836 = vtanh.pop %v820
        %v837 = vtanh.pop %v821
        %v838 = vtanh.pop %v822
        %v839 = vtanh.pop %v823
        %v840 = vtanh.pop %v824
        %v841 = vtanh.pop %v825
        %v842 = vtanh.pop %v826
        %v843 = vtanh.pop %v827
        %v844 = vtanh.pop %v828
        %v845 = vtanh.pop %v829
        %v846 = vtanh.pop %v830
        %v847 = vtanh.pop %v831
        %v848 = vtanh.pop %v832
        %v849 = vtanh.pop %v833
        %v850 = vtanh.pop %v834
        %v851 = vtanh.pop %v835
        %v852 = vadd.f32 %v836, 1.0
        %v853 = vadd.f32 %v837, 1.0
        %v854 = vadd.f32 %v838, 1.0
        %v855 = vadd.f32 %v839, 1.0
        %v856 = vadd.f32 %v840, 1.0
        %v857 = vadd.f32 %v841, 1.0
        %v858 = vadd.f32 %v842, 1.0
        %v859 = vadd.f32 %v843, 1.0
        %v860 = vadd.f32 %v844, 1.0
        %v861 = vadd.f32 %v845, 1.0
        %v862 = vadd.f32 %v846, 1.0
        %v863 = vadd.f32 %v847, 1.0
        %v864 = vadd.f32 %v848, 1.0
        %v865 = vadd.f32 %v849, 1.0
        %v866 = vadd.f32 %v850, 1.0
        %v867 = vadd.f32 %v851, 1.0
        %v868 = vmul.f32 %v740, %v852
        %v869 = vmul.f32 %v741, %v853
        %v870 = vmul.f32 %v742, %v854
        %v871 = vmul.f32 %v743, %v855
        %v872 = vmul.f32 %v744, %v856
        %v873 = vmul.f32 %v745, %v857
        %v874 = vmul.f32 %v746, %v858
        %v875 = vmul.f32 %v747, %v859
        %v876 = vmul.f32 %v748, %v860
        %v877 = vmul.f32 %v749, %v861
        %v878 = vmul.f32 %v750, %v862
        %v879 = vmul.f32 %v751, %v863
        %v880 = vmul.f32 %v752, %v864
        %v881 = vmul.f32 %v753, %v865
        %v882 = vmul.f32 %v754, %v866
        %v883 = vmul.f32 %v755, %v867
        %v884 = vpack.c.bf16 %v870, %v868
        %v885 = vpack.c.bf16 %v871, %v869
        %v886 = vpack.c.bf16 %v874, %v872
        %v887 = vpack.c.bf16 %v875, %v873
        %v888 = vpack.c.bf16 %v878, %v876
        %v889 = vpack.c.bf16 %v879, %v877
        %v890 = vpack.c.bf16 %v882, %v880
        %v891 = vpack.c.bf16 %v883, %v881
        %v892 = vld [vmem:[#allocation8] sm:$0xf]
        %v893 = vld [vmem:[#allocation8 + $0x4] sm:$0xf]
        %v894 = vld [vmem:[#allocation8 + $0x8] sm:$0xf]
        %v895 = vld [vmem:[#allocation8 + $0xc] sm:$0xf]
        %v896 = vld [vmem:[#allocation8 + $0x10] sm:$0xf]
        %v897 = vld [vmem:[#allocation8 + $0x14] sm:$0xf]
        %v898 = vld [vmem:[#allocation8 + $0x18] sm:$0xf]
        %v899 = vld [vmem:[#allocation8 + $0x1c] sm:$0xf]
        %v900 = vld [vmem:[#allocation8 + $0x20] sm:$0xf]
        %v901 = vld [vmem:[#allocation8 + $0x24] sm:$0xf]
        %v902 = vld [vmem:[#allocation8 + $0x28] sm:$0xf]
        %v903 = vld [vmem:[#allocation8 + $0x2c] sm:$0xf]
        %v904 = vld [vmem:[#allocation8 + $0x30] sm:$0xf]
        %v905 = vld [vmem:[#allocation8 + $0x34] sm:$0xf]
        %v906 = vld [vmem:[#allocation8 + $0x38] sm:$0xf]
        %v907 = vld [vmem:[#allocation8 + $0x3c] sm:$0xf]
        %v908 = vld [vmem:[#allocation8 + $0x40] sm:$0xf]
        %v909 = vld [vmem:[#allocation8 + $0x44] sm:$0xf]
        %v910 = vld [vmem:[#allocation8 + $0x48] sm:$0xf]
        %v911 = vld [vmem:[#allocation8 + $0x4c] sm:$0xf]
        %v912 = vld [vmem:[#allocation8 + $0x50] sm:$0xf]
        %v913 = vld [vmem:[#allocation8 + $0x54] sm:$0xf]
        %v914 = vld [vmem:[#allocation8 + $0x58] sm:$0xf]
        %v915 = vld [vmem:[#allocation8 + $0x5c] sm:$0xf]
        %v916 = vld [vmem:[#allocation8 + $0x60] sm:$0xf]
        %v917 = vld [vmem:[#allocation8 + $0x64] sm:$0xf]
        %v918 = vld [vmem:[#allocation8 + $0x68] sm:$0xf]
        %v919 = vld [vmem:[#allocation8 + $0x6c] sm:$0xf]
        %v920 = vld [vmem:[#allocation8 + $0x70] sm:$0xf]
        %v921 = vld [vmem:[#allocation8 + $0x74] sm:$0xf]
        %v922 = vld [vmem:[#allocation8 + $0x78] sm:$0xf]
        %v923 = vld [vmem:[#allocation8 + $0x7c] sm:$0xf]
        %v924 = vld [vmem:[%s5] sm:$0x1]
        %v926 = vlaneseq
        %v927 = vshrl.u32 %v926, 7
        %v928 = vsub.s32 0, %v927
        %v929 = vrot.slane %v924, %v928
        %v963 = vunpack.c.l.b16 %v892
        %v964 = vunpack.c.l.b16 %v893
        %v965 = vunpack.c.l.b16 %v894
        %v966 = vunpack.c.l.b16 %v895
        %v967 = vunpack.c.l.b16 %v896
        %v968 = vunpack.c.l.b16 %v897
        %v969 = vunpack.c.l.b16 %v898
        %v970 = vunpack.c.l.b16 %v899
        %v971 = vunpack.c.l.b16 %v900
        %v972 = vunpack.c.l.b16 %v901
        %v973 = vunpack.c.l.b16 %v902
        %v974 = vunpack.c.l.b16 %v903
        %v975 = vunpack.c.l.b16 %v904
        %v976 = vunpack.c.l.b16 %v905
        %v977 = vunpack.c.l.b16 %v906
        %v978 = vunpack.c.l.b16 %v907
        %v979 = vunpack.c.l.b16 %v908
        %v980 = vunpack.c.l.b16 %v909
        %v981 = vunpack.c.l.b16 %v910
        %v982 = vunpack.c.l.b16 %v911
        %v983 = vunpack.c.l.b16 %v912
        %v984 = vunpack.c.l.b16 %v913
        %v985 = vunpack.c.l.b16 %v914
        %v986 = vunpack.c.l.b16 %v915
        %v987 = vunpack.c.l.b16 %v916
        %v988 = vunpack.c.l.b16 %v917
        %v989 = vunpack.c.l.b16 %v918
        %v990 = vunpack.c.l.b16 %v919
        %v991 = vunpack.c.l.b16 %v920
        %v992 = vunpack.c.l.b16 %v921
        %v993 = vunpack.c.l.b16 %v922
        %v994 = vunpack.c.l.b16 %v923
        %v995 = vpack.c.b16 %v964, %v963
        %v996 = vpack.c.b16 %v966, %v965
        %v997 = vpack.c.b16 %v968, %v967
        %v998 = vpack.c.b16 %v970, %v969
        %v999 = vpack.c.b16 %v972, %v971
        %v1000 = vpack.c.b16 %v974, %v973
        %v1001 = vpack.c.b16 %v976, %v975
        %v1002 = vpack.c.b16 %v978, %v977
        %v1003 = vpack.c.b16 %v980, %v979
        %v1004 = vpack.c.b16 %v982, %v981
        %v1005 = vpack.c.b16 %v984, %v983
        %v1006 = vpack.c.b16 %v986, %v985
        %v1007 = vpack.c.b16 %v988, %v987
        %v1008 = vpack.c.b16 %v990, %v989
        %v1009 = vpack.c.b16 %v992, %v991
        %v1010 = vpack.c.b16 %v994, %v993
        %1027 = vmatprep.subr.bf16.mxu0 0
        %1028 = vmatpush1.bf16.msra.mxu0 %v995
        %1029 = vmatprep.subr.bf16.mxu0 0
        %1030 = vmatpush1.bf16.msra.mxu0 %v996
        %1031 = vmatprep.subr.bf16.mxu0 0
        %1032 = vmatpush1.bf16.msra.mxu0 %v997
        %1033 = vmatprep.subr.bf16.mxu0 0
        %1034 = vmatpush1.bf16.msra.mxu0 %v998
        %1035 = vmatprep.subr.bf16.mxu0 0
        %1036 = vmatpush1.bf16.msra.mxu0 %v999
        %1037 = vmatprep.subr.bf16.mxu0 0
        %1038 = vmatpush1.bf16.msra.mxu0 %v1000
        %1039 = vmatprep.subr.bf16.mxu0 0
        %1040 = vmatpush1.bf16.msra.mxu0 %v1001
        %1041 = vmatprep.subr.bf16.mxu0 0
        %1042 = vmatpush1.bf16.msra.mxu0 %v1002
        %1043 = vmatprep.subr.bf16.mxu0 0
        %1044 = vmatpush1.bf16.msra.mxu0 %v1003
        %1045 = vmatprep.subr.bf16.mxu0 0
        %1046 = vmatpush1.bf16.msra.mxu0 %v1004
        %1047 = vmatprep.subr.bf16.mxu0 0
        %1048 = vmatpush1.bf16.msra.mxu0 %v1005
        %1049 = vmatprep.subr.bf16.mxu0 0
        %1050 = vmatpush1.bf16.msra.mxu0 %v1006
        %1051 = vmatprep.subr.bf16.mxu0 0
        %1052 = vmatpush1.bf16.msra.mxu0 %v1007
        %1053 = vmatprep.subr.bf16.mxu0 0
        %1054 = vmatpush1.bf16.msra.mxu0 %v1008
        %1055 = vmatprep.subr.bf16.mxu0 0
        %1056 = vmatpush1.bf16.msra.mxu0 %v1009
        %1057 = vmatprep.subr.bf16.mxu0 0
        %1058 = vmatpush1.bf16.msra.mxu0 %v1010
        %1059 = vmatprep.mubr.bf16.mxu0 %v885
        %1060 = vmatmul.mubr.bf16.gmra.mrb[0].mxu0 %v884
        %v1061 = vpop.f32.mrb[0].mxu0
        %v1062 = vadd.f32 %v929, %v1061
        %v1063 = vpop.f32.mrb[0].mxu0
        %v1064 = vpop.f32.mrb[0].mxu0
        %v1065 = vadd.f32 %v929, %v1064
        %v1066 = vpop.f32.mrb[0].mxu0
        %1067 = vmatprep.mubr.bf16.mxu0 %v887
        %1068 = vmatmul.mubr.bf16.gmra.mrb[0].mxu0 %v886
        %v1069 = vpop.f32.mrb[0].mxu0
        %v1070 = vadd.f32 %v929, %v1069
        %v1071 = vpop.f32.mrb[0].mxu0
        %v1072 = vpop.f32.mrb[0].mxu0
        %v1073 = vadd.f32 %v929, %v1072
        %v1074 = vpop.f32.mrb[0].mxu0
        %1075 = vmatprep.mubr.bf16.mxu0 %v889
        %1076 = vmatmul.mubr.bf16.gmra.mrb[0].mxu0 %v888
        %v1077 = vpop.f32.mrb[0].mxu0
        %v1078 = vadd.f32 %v929, %v1077
        %v1079 = vpop.f32.mrb[0].mxu0
        %v1080 = vpop.f32.mrb[0].mxu0
        %v1081 = vadd.f32 %v929, %v1080
        %v1082 = vpop.f32.mrb[0].mxu0
        %1083 = vmatprep.mubr.bf16.mxu0 %v891
        %1084 = vmatmul.mubr.bf16.gmra.mrb[0].mxu0 %v890
        %v1085 = vpop.f32.mrb[0].mxu0
        %v1086 = vadd.f32 %v929, %v1085
        %v1087 = vpop.f32.mrb[0].mxu0
        %v1088 = vpop.f32.mrb[0].mxu0
        %v1089 = vadd.f32 %v929, %v1088
        %v1090 = vpop.f32.mrb[0].mxu0
        %1091 = vdwg.mxu0
        %1092 = vst [vmem:[%s518] sm:$0xff] %v1062
        %1093 = vst [vmem:[%s518 + $0x8] sm:$0xff] %v1065
        %1094 = vst [vmem:[%s518 + $0x10] sm:$0xff] %v1070
        %1095 = vst [vmem:[%s518 + $0x18] sm:$0xff] %v1073
        %1096 = vst [vmem:[%s518 + $0x20] sm:$0xff] %v1078
        %1097 = vst [vmem:[%s518 + $0x28] sm:$0xff] %v1081
        %1098 = vst [vmem:[%s518 + $0x30] sm:$0xff] %v1086
        %1099 = vst [vmem:[%s518 + $0x38] sm:$0xff] %v1089
        %v1100 = vld [vmem:[%s461] sm:$0xff]
        %v1101 = vld [vmem:[%s461 + $0x8] sm:$0xff]
        %v1102 = vld [vmem:[%s461 + $0x10] sm:$0xff]
        %v1103 = vld [vmem:[%s461 + $0x18] sm:$0xff]
        %v1104 = vld [vmem:[%s461 + $0x20] sm:$0xff]
        %v1105 = vld [vmem:[%s461 + $0x28] sm:$0xff]
        %v1106 = vld [vmem:[%s461 + $0x30] sm:$0xff]
        %v1107 = vld [vmem:[%s461 + $0x38] sm:$0xff]
        %v1108 = vpack.c.bf16 %v1101, %v1100
        %v1109 = vpack.c.bf16 %v1103, %v1102
        %v1110 = vpack.c.bf16 %v1105, %v1104
        %v1111 = vpack.c.bf16 %v1107, %v1106
        %v1112 = vld [vmem:[#allocation10] sm:$0xff]
        %v1113 = vld [vmem:[#allocation10 + $0x8] sm:$0xff]
        %v1114 = vld [vmem:[#allocation10 + $0x10] sm:$0xff]
        %v1115 = vld [vmem:[#allocation10 + $0x18] sm:$0xff]
        %v1116 = vld [vmem:[#allocation10 + $0x20] sm:$0xff]
        %v1117 = vld [vmem:[#allocation10 + $0x28] sm:$0xff]
        %v1118 = vld [vmem:[#allocation10 + $0x30] sm:$0xff]
        %v1119 = vld [vmem:[#allocation10 + $0x38] sm:$0xff]
        %v1120 = vld [vmem:[#allocation10 + $0x40] sm:$0xff]
        %v1121 = vld [vmem:[#allocation10 + $0x48] sm:$0xff]
        %v1122 = vld [vmem:[#allocation10 + $0x50] sm:$0xff]
        %v1123 = vld [vmem:[#allocation10 + $0x58] sm:$0xff]
        %v1124 = vld [vmem:[#allocation10 + $0x60] sm:$0xff]
        %v1125 = vld [vmem:[#allocation10 + $0x68] sm:$0xff]
        %v1126 = vld [vmem:[#allocation10 + $0x70] sm:$0xff]
        %v1127 = vld [vmem:[#allocation10 + $0x78] sm:$0xff]
        %v1128 = vld [vmem:[%s7] sm:$0x3]
        %v1130 = vlaneseq
        %v1131 = vshrl.u32 %v1130, 7
        %v1132 = vsub.s32 0, %v1131
        %v1133 = vrot.slane %v1128, %v1132
        %v1134 = vlaneseq
        %v1135 = vshrl.u32 %v1134, 7
        %v1136 = vsub.s32 1, %v1135
        %v1137 = vrot.slane %v1128, %v1136
        %v1156 = vunpack.c.l.b16 %v1112
        %v1157 = vunpack.c.h.b16 %v1112
        %v1158 = vunpack.c.l.b16 %v1113
        %v1159 = vunpack.c.h.b16 %v1113
        %v1160 = vunpack.c.l.b16 %v1114
        %v1161 = vunpack.c.h.b16 %v1114
        %v1162 = vunpack.c.l.b16 %v1115
        %v1163 = vunpack.c.h.b16 %v1115
        %v1164 = vunpack.c.l.b16 %v1116
        %v1165 = vunpack.c.h.b16 %v1116
        %v1166 = vunpack.c.l.b16 %v1117
        %v1167 = vunpack.c.h.b16 %v1117
        %v1168 = vunpack.c.l.b16 %v1118
        %v1169 = vunpack.c.h.b16 %v1118
        %v1170 = vunpack.c.l.b16 %v1119
        %v1171 = vunpack.c.h.b16 %v1119
        %v1172 = vunpack.c.l.b16 %v1120
        %v1173 = vunpack.c.h.b16 %v1120
        %v1174 = vunpack.c.l.b16 %v1121
        %v1175 = vunpack.c.h.b16 %v1121
        %v1176 = vunpack.c.l.b16 %v1122
        %v1177 = vunpack.c.h.b16 %v1122
        %v1178 = vunpack.c.l.b16 %v1123
        %v1179 = vunpack.c.h.b16 %v1123
        %v1180 = vunpack.c.l.b16 %v1124
        %v1181 = vunpack.c.h.b16 %v1124
        %v1182 = vunpack.c.l.b16 %v1125
        %v1183 = vunpack.c.h.b16 %v1125
        %v1184 = vunpack.c.l.b16 %v1126
        %v1185 = vunpack.c.h.b16 %v1126
        %v1186 = vunpack.c.l.b16 %v1127
        %v1187 = vunpack.c.h.b16 %v1127
        %v1188 = vpack.c.b16 %v1158, %v1156
        %v1189 = vpack.c.b16 %v1159, %v1157
        %v1190 = vpack.c.b16 %v1162, %v1160
        %v1191 = vpack.c.b16 %v1163, %v1161
        %v1192 = vpack.c.b16 %v1166, %v1164
        %v1193 = vpack.c.b16 %v1167, %v1165
        %v1194 = vpack.c.b16 %v1170, %v1168
        %v1195 = vpack.c.b16 %v1171, %v1169
        %v1196 = vpack.c.b16 %v1174, %v1172
        %v1197 = vpack.c.b16 %v1175, %v1173
        %v1198 = vpack.c.b16 %v1178, %v1176
        %v1199 = vpack.c.b16 %v1179, %v1177
        %v1200 = vpack.c.b16 %v1182, %v1180
        %v1201 = vpack.c.b16 %v1183, %v1181
        %v1202 = vpack.c.b16 %v1186, %v1184
        %v1203 = vpack.c.b16 %v1187, %v1185
        %1220 = vmatprep.subr.bf16.mxu0 %v1189
        %1221 = vmatpush1.bf16.msra.mxu0 %v1188
        %1222 = vmatprep.subr.bf16.mxu0 %v1191
        %1223 = vmatpush1.bf16.msra.mxu0 %v1190
        %1224 = vmatprep.subr.bf16.mxu0 %v1193
        %1225 = vmatpush1.bf16.msra.mxu0 %v1192
        %1226 = vmatprep.subr.bf16.mxu0 %v1195
        %1227 = vmatpush1.bf16.msra.mxu0 %v1194
        %1228 = vmatprep.subr.bf16.mxu0 %v1197
        %1229 = vmatpush1.bf16.msra.mxu0 %v1196
        %1230 = vmatprep.subr.bf16.mxu0 %v1199
        %1231 = vmatpush1.bf16.msra.mxu0 %v1198
        %1232 = vmatprep.subr.bf16.mxu0 %v1201
        %1233 = vmatpush1.bf16.msra.mxu0 %v1200
        %1234 = vmatprep.subr.bf16.mxu0 %v1203
        %1235 = vmatpush1.bf16.msra.mxu0 %v1202
        %1236 = vmatprep.subr.bf16.mxu0 0
        %1237 = vmatpush1.bf16.msra.mxu0 0
        %1238 = vmatprep.subr.bf16.mxu0 0
        %1239 = vmatpush1.bf16.msra.mxu0 0
        %1240 = vmatprep.subr.bf16.mxu0 0
        %1241 = vmatpush1.bf16.msra.mxu0 0
        %1242 = vmatprep.subr.bf16.mxu0 0
        %1243 = vmatpush1.bf16.msra.mxu0 0
        %1244 = vmatprep.subr.bf16.mxu0 0
        %1245 = vmatpush1.bf16.msra.mxu0 0
        %1246 = vmatprep.subr.bf16.mxu0 0
        %1247 = vmatpush1.bf16.msra.mxu0 0
        %1248 = vmatprep.subr.bf16.mxu0 0
        %1249 = vmatpush1.bf16.msra.mxu0 0
        %1250 = vmatprep.subr.bf16.mxu0 0
        %1251 = vmatpush1.bf16.msra.mxu0 0
        %1252 = vmatprep.mubr.bf16.mxu0 0
        %1253 = vmatmul.mubr.bf16.gmra.mrb[0].mxu0 %v1108
        %v1254 = vpop.f32.mrb[0].mxu0
        %v1255 = vadd.f32 %v1133, %v1254
        %v1256 = vpop.f32.mrb[0].mxu0
        %v1257 = vadd.f32 %v1137, %v1256
        %v1258 = vpop.f32.mrb[0].mxu0
        %v1259 = vadd.f32 %v1133, %v1258
        %v1260 = vpop.f32.mrb[0].mxu0
        %v1261 = vadd.f32 %v1137, %v1260
        %1262 = vmatprep.mubr.bf16.mxu0 0
        %1263 = vmatmul.mubr.bf16.gmra.mrb[0].mxu0 %v1109
        %v1264 = vpop.f32.mrb[0].mxu0
        %v1265 = vadd.f32 %v1133, %v1264
        %v1266 = vpop.f32.mrb[0].mxu0
        %v1267 = vadd.f32 %v1137, %v1266
        %v1268 = vpop.f32.mrb[0].mxu0
        %v1269 = vadd.f32 %v1133, %v1268
        %v1270 = vpop.f32.mrb[0].mxu0
        %v1271 = vadd.f32 %v1137, %v1270
        %1272 = vmatprep.mubr.bf16.mxu0 0
        %1273 = vmatmul.mubr.bf16.gmra.mrb[0].mxu0 %v1110
        %v1274 = vpop.f32.mrb[0].mxu0
        %v1275 = vadd.f32 %v1133, %v1274
        %v1276 = vpop.f32.mrb[0].mxu0
        %v1277 = vadd.f32 %v1137, %v1276
        %v1278 = vpop.f32.mrb[0].mxu0
        %v1279 = vadd.f32 %v1133, %v1278
        %v1280 = vpop.f32.mrb[0].mxu0
        %v1281 = vadd.f32 %v1137, %v1280
        %1282 = vmatprep.mubr.bf16.mxu0 0
        %1283 = vmatmul.mubr.bf16.gmra.mrb[0].mxu0 %v1111
        %v1284 = vpop.f32.mrb[0].mxu0
        %v1285 = vadd.f32 %v1133, %v1284
        %v1286 = vpop.f32.mrb[0].mxu0
        %v1287 = vadd.f32 %v1137, %v1286
        %v1288 = vpop.f32.mrb[0].mxu0
        %v1289 = vadd.f32 %v1133, %v1288
        %v1290 = vpop.f32.mrb[0].mxu0
        %v1291 = vadd.f32 %v1137, %v1290
        %1292 = vdwg.mxu0
        %v1293 = vmul.f32 %v1255, 0.5
        %v1294 = vmul.f32 %v1257, 0.5
        %v1295 = vmul.f32 %v1259, 0.5
        %v1296 = vmul.f32 %v1261, 0.5
        %v1297 = vmul.f32 %v1265, 0.5
        %v1298 = vmul.f32 %v1267, 0.5
        %v1299 = vmul.f32 %v1269, 0.5
        %v1300 = vmul.f32 %v1271, 0.5
        %v1301 = vmul.f32 %v1275, 0.5
        %v1302 = vmul.f32 %v1277, 0.5
        %v1303 = vmul.f32 %v1279, 0.5
        %v1304 = vmul.f32 %v1281, 0.5
        %v1305 = vmul.f32 %v1285, 0.5
        %v1306 = vmul.f32 %v1287, 0.5
        %v1307 = vmul.f32 %v1289, 0.5
        %v1308 = vmul.f32 %v1291, 0.5
        %v1309 = vmul.f32 %v1255, 0.044715
        %v1310 = vmul.f32 %v1257, 0.044715
        %v1311 = vmul.f32 %v1259, 0.044715
        %v1312 = vmul.f32 %v1261, 0.044715
        %v1313 = vmul.f32 %v1265, 0.044715
        %v1314 = vmul.f32 %v1267, 0.044715
        %v1315 = vmul.f32 %v1269, 0.044715
        %v1316 = vmul.f32 %v1271, 0.044715
        %v1317 = vmul.f32 %v1275, 0.044715
        %v1318 = vmul.f32 %v1277, 0.044715
        %v1319 = vmul.f32 %v1279, 0.044715
        %v1320 = vmul.f32 %v1281, 0.044715
        %v1321 = vmul.f32 %v1285, 0.044715
        %v1322 = vmul.f32 %v1287, 0.044715
        %v1323 = vmul.f32 %v1289, 0.044715
        %v1324 = vmul.f32 %v1291, 0.044715
        %v1325 = vmul.f32 %v1309, %v1255
        %v1326 = vmul.f32 %v1310, %v1257
        %v1327 = vmul.f32 %v1311, %v1259
        %v1328 = vmul.f32 %v1312, %v1261
        %v1329 = vmul.f32 %v1313, %v1265
        %v1330 = vmul.f32 %v1314, %v1267
        %v1331 = vmul.f32 %v1315, %v1269
        %v1332 = vmul.f32 %v1316, %v1271
        %v1333 = vmul.f32 %v1317, %v1275
        %v1334 = vmul.f32 %v1318, %v1277
        %v1335 = vmul.f32 %v1319, %v1279
        %v1336 = vmul.f32 %v1320, %v1281
        %v1337 = vmul.f32 %v1321, %v1285
        %v1338 = vmul.f32 %v1322, %v1287
        %v1339 = vmul.f32 %v1323, %v1289
        %v1340 = vmul.f32 %v1324, %v1291
        %v1341 = vmul.f32 %v1325, %v1255
        %v1342 = vmul.f32 %v1326, %v1257
        %v1343 = vmul.f32 %v1327, %v1259
        %v1344 = vmul.f32 %v1328, %v1261
        %v1345 = vmul.f32 %v1329, %v1265
        %v1346 = vmul.f32 %v1330, %v1267
        %v1347 = vmul.f32 %v1331, %v1269
        %v1348 = vmul.f32 %v1332, %v1271
        %v1349 = vmul.f32 %v1333, %v1275
        %v1350 = vmul.f32 %v1334, %v1277
        %v1351 = vmul.f32 %v1335, %v1279
        %v1352 = vmul.f32 %v1336, %v1281
        %v1353 = vmul.f32 %v1337, %v1285
        %v1354 = vmul.f32 %v1338, %v1287
        %v1355 = vmul.f32 %v1339, %v1289
        %v1356 = vmul.f32 %v1340, %v1291
        %v1357 = vadd.f32 %v1255, %v1341
        %v1358 = vadd.f32 %v1257, %v1342
        %v1359 = vadd.f32 %v1259, %v1343
        %v1360 = vadd.f32 %v1261, %v1344
        %v1361 = vadd.f32 %v1265, %v1345
        %v1362 = vadd.f32 %v1267, %v1346
        %v1363 = vadd.f32 %v1269, %v1347
        %v1364 = vadd.f32 %v1271, %v1348
        %v1365 = vadd.f32 %v1275, %v1349
        %v1366 = vadd.f32 %v1277, %v1350
        %v1367 = vadd.f32 %v1279, %v1351
        %v1368 = vadd.f32 %v1281, %v1352
        %v1369 = vadd.f32 %v1285, %v1353
        %v1370 = vadd.f32 %v1287, %v1354
        %v1371 = vadd.f32 %v1289, %v1355
        %v1372 = vadd.f32 %v1291, %v1356
        %v1373 = vmul.f32 %v1357, 0.7978846
        %v1374 = vmul.f32 %v1358, 0.7978846
        %v1375 = vmul.f32 %v1359, 0.7978846
        %v1376 = vmul.f32 %v1360, 0.7978846
        %v1377 = vmul.f32 %v1361, 0.7978846
        %v1378 = vmul.f32 %v1362, 0.7978846
        %v1379 = vmul.f32 %v1363, 0.7978846
        %v1380 = vmul.f32 %v1364, 0.7978846
        %v1381 = vmul.f32 %v1365, 0.7978846
        %v1382 = vmul.f32 %v1366, 0.7978846
        %v1383 = vmul.f32 %v1367, 0.7978846
        %v1384 = vmul.f32 %v1368, 0.7978846
        %v1385 = vmul.f32 %v1369, 0.7978846
        %v1386 = vmul.f32 %v1370, 0.7978846
        %v1387 = vmul.f32 %v1371, 0.7978846
        %v1388 = vmul.f32 %v1372, 0.7978846
        %v1389 = vtanh.pop %v1373
        %v1390 = vtanh.pop %v1374
        %v1391 = vtanh.pop %v1375
        %v1392 = vtanh.pop %v1376
        %v1393 = vtanh.pop %v1377
        %v1394 = vtanh.pop %v1378
        %v1395 = vtanh.pop %v1379
        %v1396 = vtanh.pop %v1380
        %v1397 = vtanh.pop %v1381
        %v1398 = vtanh.pop %v1382
        %v1399 = vtanh.pop %v1383
        %v1400 = vtanh.pop %v1384
        %v1401 = vtanh.pop %v1385
        %v1402 = vtanh.pop %v1386
        %v1403 = vtanh.pop %v1387
        %v1404 = vtanh.pop %v1388
        %v1405 = vadd.f32 %v1389, 1.0
        %v1406 = vadd.f32 %v1390, 1.0
        %v1407 = vadd.f32 %v1391, 1.0
        %v1408 = vadd.f32 %v1392, 1.0
        %v1409 = vadd.f32 %v1393, 1.0
        %v1410 = vadd.f32 %v1394, 1.0
        %v1411 = vadd.f32 %v1395, 1.0
        %v1412 = vadd.f32 %v1396, 1.0
        %v1413 = vadd.f32 %v1397, 1.0
        %v1414 = vadd.f32 %v1398, 1.0
        %v1415 = vadd.f32 %v1399, 1.0
        %v1416 = vadd.f32 %v1400, 1.0
        %v1417 = vadd.f32 %v1401, 1.0
        %v1418 = vadd.f32 %v1402, 1.0
        %v1419 = vadd.f32 %v1403, 1.0
        %v1420 = vadd.f32 %v1404, 1.0
        %v1421 = vmul.f32 %v1293, %v1405
        %v1422 = vmul.f32 %v1294, %v1406
        %v1423 = vmul.f32 %v1295, %v1407
        %v1424 = vmul.f32 %v1296, %v1408
        %v1425 = vmul.f32 %v1297, %v1409
        %v1426 = vmul.f32 %v1298, %v1410
        %v1427 = vmul.f32 %v1299, %v1411
        %v1428 = vmul.f32 %v1300, %v1412
        %v1429 = vmul.f32 %v1301, %v1413
        %v1430 = vmul.f32 %v1302, %v1414
        %v1431 = vmul.f32 %v1303, %v1415
        %v1432 = vmul.f32 %v1304, %v1416
        %v1433 = vmul.f32 %v1305, %v1417
        %v1434 = vmul.f32 %v1306, %v1418
        %v1435 = vmul.f32 %v1307, %v1419
        %v1436 = vmul.f32 %v1308, %v1420
        %v1437 = vpack.c.bf16 %v1423, %v1421
        %v1438 = vpack.c.bf16 %v1424, %v1422
        %v1439 = vpack.c.bf16 %v1427, %v1425
        %v1440 = vpack.c.bf16 %v1428, %v1426
        %v1441 = vpack.c.bf16 %v1431, %v1429
        %v1442 = vpack.c.bf16 %v1432, %v1430
        %v1443 = vpack.c.bf16 %v1435, %v1433
        %v1444 = vpack.c.bf16 %v1436, %v1434
        %v1445 = vld [vmem:[#allocation11] sm:$0xf]
        %v1446 = vld [vmem:[#allocation11 + $0x4] sm:$0xf]
        %v1447 = vld [vmem:[#allocation11 + $0x8] sm:$0xf]
        %v1448 = vld [vmem:[#allocation11 + $0xc] sm:$0xf]
        %v1449 = vld [vmem:[#allocation11 + $0x10] sm:$0xf]
        %v1450 = vld [vmem:[#allocation11 + $0x14] sm:$0xf]
        %v1451 = vld [vmem:[#allocation11 + $0x18] sm:$0xf]
        %v1452 = vld [vmem:[#allocation11 + $0x1c] sm:$0xf]
        %v1453 = vld [vmem:[#allocation11 + $0x20] sm:$0xf]
        %v1454 = vld [vmem:[#allocation11 + $0x24] sm:$0xf]
        %v1455 = vld [vmem:[#allocation11 + $0x28] sm:$0xf]
        %v1456 = vld [vmem:[#allocation11 + $0x2c] sm:$0xf]
        %v1457 = vld [vmem:[#allocation11 + $0x30] sm:$0xf]
        %v1458 = vld [vmem:[#allocation11 + $0x34] sm:$0xf]
        %v1459 = vld [vmem:[#allocation11 + $0x38] sm:$0xf]
        %v1460 = vld [vmem:[#allocation11 + $0x3c] sm:$0xf]
        %v1461 = vld [vmem:[#allocation11 + $0x40] sm:$0xf]
        %v1462 = vld [vmem:[#allocation11 + $0x44] sm:$0xf]
        %v1463 = vld [vmem:[#allocation11 + $0x48] sm:$0xf]
        %v1464 = vld [vmem:[#allocation11 + $0x4c] sm:$0xf]
        %v1465 = vld [vmem:[#allocation11 + $0x50] sm:$0xf]
        %v1466 = vld [vmem:[#allocation11 + $0x54] sm:$0xf]
        %v1467 = vld [vmem:[#allocation11 + $0x58] sm:$0xf]
        %v1468 = vld [vmem:[#allocation11 + $0x5c] sm:$0xf]
        %v1469 = vld [vmem:[#allocation11 + $0x60] sm:$0xf]
        %v1470 = vld [vmem:[#allocation11 + $0x64] sm:$0xf]
        %v1471 = vld [vmem:[#allocation11 + $0x68] sm:$0xf]
        %v1472 = vld [vmem:[#allocation11 + $0x6c] sm:$0xf]
        %v1473 = vld [vmem:[#allocation11 + $0x70] sm:$0xf]
        %v1474 = vld [vmem:[#allocation11 + $0x74] sm:$0xf]
        %v1475 = vld [vmem:[#allocation11 + $0x78] sm:$0xf]
        %v1476 = vld [vmem:[#allocation11 + $0x7c] sm:$0xf]
        %v1477 = vld [vmem:[%s9] sm:$0x1]
        %v1479 = vlaneseq
        %v1480 = vshrl.u32 %v1479, 7
        %v1481 = vsub.s32 0, %v1480
        %v1482 = vrot.slane %v1477, %v1481
        %v1516 = vunpack.c.l.b16 %v1445
        %v1517 = vunpack.c.l.b16 %v1446
        %v1518 = vunpack.c.l.b16 %v1447
        %v1519 = vunpack.c.l.b16 %v1448
        %v1520 = vunpack.c.l.b16 %v1449
        %v1521 = vunpack.c.l.b16 %v1450
        %v1522 = vunpack.c.l.b16 %v1451
        %v1523 = vunpack.c.l.b16 %v1452
        %v1524 = vunpack.c.l.b16 %v1453
        %v1525 = vunpack.c.l.b16 %v1454
        %v1526 = vunpack.c.l.b16 %v1455
        %v1527 = vunpack.c.l.b16 %v1456
        %v1528 = vunpack.c.l.b16 %v1457
        %v1529 = vunpack.c.l.b16 %v1458
        %v1530 = vunpack.c.l.b16 %v1459
        %v1531 = vunpack.c.l.b16 %v1460
        %v1532 = vunpack.c.l.b16 %v1461
        %v1533 = vunpack.c.l.b16 %v1462
        %v1534 = vunpack.c.l.b16 %v1463
        %v1535 = vunpack.c.l.b16 %v1464
        %v1536 = vunpack.c.l.b16 %v1465
        %v1537 = vunpack.c.l.b16 %v1466
        %v1538 = vunpack.c.l.b16 %v1467
        %v1539 = vunpack.c.l.b16 %v1468
        %v1540 = vunpack.c.l.b16 %v1469
        %v1541 = vunpack.c.l.b16 %v1470
        %v1542 = vunpack.c.l.b16 %v1471
        %v1543 = vunpack.c.l.b16 %v1472
        %v1544 = vunpack.c.l.b16 %v1473
        %v1545 = vunpack.c.l.b16 %v1474
        %v1546 = vunpack.c.l.b16 %v1475
        %v1547 = vunpack.c.l.b16 %v1476
        %v1548 = vpack.c.b16 %v1517, %v1516
        %v1549 = vpack.c.b16 %v1519, %v1518
        %v1550 = vpack.c.b16 %v1521, %v1520
        %v1551 = vpack.c.b16 %v1523, %v1522
        %v1552 = vpack.c.b16 %v1525, %v1524
        %v1553 = vpack.c.b16 %v1527, %v1526
        %v1554 = vpack.c.b16 %v1529, %v1528
        %v1555 = vpack.c.b16 %v1531, %v1530
        %v1556 = vpack.c.b16 %v1533, %v1532
        %v1557 = vpack.c.b16 %v1535, %v1534
        %v1558 = vpack.c.b16 %v1537, %v1536
        %v1559 = vpack.c.b16 %v1539, %v1538
        %v1560 = vpack.c.b16 %v1541, %v1540
        %v1561 = vpack.c.b16 %v1543, %v1542
        %v1562 = vpack.c.b16 %v1545, %v1544
        %v1563 = vpack.c.b16 %v1547, %v1546
        %1580 = vmatprep.subr.bf16.mxu0 0
        %1581 = vmatpush1.bf16.msra.mxu0 %v1548
        %1582 = vmatprep.subr.bf16.mxu0 0
        %1583 = vmatpush1.bf16.msra.mxu0 %v1549
        %1584 = vmatprep.subr.bf16.mxu0 0
        %1585 = vmatpush1.bf16.msra.mxu0 %v1550
        %1586 = vmatprep.subr.bf16.mxu0 0
        %1587 = vmatpush1.bf16.msra.mxu0 %v1551
        %1588 = vmatprep.subr.bf16.mxu0 0
        %1589 = vmatpush1.bf16.msra.mxu0 %v1552
        %1590 = vmatprep.subr.bf16.mxu0 0
        %1591 = vmatpush1.bf16.msra.mxu0 %v1553
        %1592 = vmatprep.subr.bf16.mxu0 0
        %1593 = vmatpush1.bf16.msra.mxu0 %v1554
        %1594 = vmatprep.subr.bf16.mxu0 0
        %1595 = vmatpush1.bf16.msra.mxu0 %v1555
        %1596 = vmatprep.subr.bf16.mxu0 0
        %1597 = vmatpush1.bf16.msra.mxu0 %v1556
        %1598 = vmatprep.subr.bf16.mxu0 0
        %1599 = vmatpush1.bf16.msra.mxu0 %v1557
        %1600 = vmatprep.subr.bf16.mxu0 0
        %1601 = vmatpush1.bf16.msra.mxu0 %v1558
        %1602 = vmatprep.subr.bf16.mxu0 0
        %1603 = vmatpush1.bf16.msra.mxu0 %v1559
        %1604 = vmatprep.subr.bf16.mxu0 0
        %1605 = vmatpush1.bf16.msra.mxu0 %v1560
        %1606 = vmatprep.subr.bf16.mxu0 0
        %1607 = vmatpush1.bf16.msra.mxu0 %v1561
        %1608 = vmatprep.subr.bf16.mxu0 0
        %1609 = vmatpush1.bf16.msra.mxu0 %v1562
        %1610 = vmatprep.subr.bf16.mxu0 0
        %1611 = vmatpush1.bf16.msra.mxu0 %v1563
        %1612 = vmatprep.mubr.bf16.mxu0 %v1438
        %1613 = vmatmul.mubr.bf16.gmra.mrb[0].mxu0 %v1437
        %v1614 = vpop.f32.mrb[0].mxu0
        %v1615 = vadd.f32 %v1482, %v1614
        %v1616 = vpop.f32.mrb[0].mxu0
        %v1617 = vpop.f32.mrb[0].mxu0
        %v1618 = vadd.f32 %v1482, %v1617
        %v1619 = vpop.f32.mrb[0].mxu0
        %1620 = vmatprep.mubr.bf16.mxu0 %v1440
        %1621 = vmatmul.mubr.bf16.gmra.mrb[0].mxu0 %v1439
        %v1622 = vpop.f32.mrb[0].mxu0
        %v1623 = vadd.f32 %v1482, %v1622
        %v1624 = vpop.f32.mrb[0].mxu0
        %v1625 = vpop.f32.mrb[0].mxu0
        %v1626 = vadd.f32 %v1482, %v1625
        %v1627 = vpop.f32.mrb[0].mxu0
        %1628 = vmatprep.mubr.bf16.mxu0 %v1442
        %1629 = vmatmul.mubr.bf16.gmra.mrb[0].mxu0 %v1441
        %v1630 = vpop.f32.mrb[0].mxu0
        %v1631 = vadd.f32 %v1482, %v1630
        %v1632 = vpop.f32.mrb[0].mxu0
        %v1633 = vpop.f32.mrb[0].mxu0
        %v1634 = vadd.f32 %v1482, %v1633
        %v1635 = vpop.f32.mrb[0].mxu0
        %1636 = vmatprep.mubr.bf16.mxu0 %v1444
        %1637 = vmatmul.mubr.bf16.gmra.mrb[0].mxu0 %v1443
        %v1638 = vpop.f32.mrb[0].mxu0
        %v1639 = vadd.f32 %v1482, %v1638
        %v1640 = vpop.f32.mrb[0].mxu0
        %v1641 = vpop.f32.mrb[0].mxu0
        %v1642 = vadd.f32 %v1482, %v1641
        %v1643 = vpop.f32.mrb[0].mxu0
        %1644 = vdwg.mxu0
        %1645 = vst [vmem:[%s525] sm:$0xff] %v1615
        %1646 = vst [vmem:[%s525 + $0x8] sm:$0xff] %v1618
        %1647 = vst [vmem:[%s525 + $0x10] sm:$0xff] %v1623
        %1648 = vst [vmem:[%s525 + $0x18] sm:$0xff] %v1626
        %1649 = vst [vmem:[%s525 + $0x20] sm:$0xff] %v1631
        %1650 = vst [vmem:[%s525 + $0x28] sm:$0xff] %v1634
        %1651 = vst [vmem:[%s525 + $0x30] sm:$0xff] %v1639
        %1652 = vst [vmem:[%s525 + $0x38] sm:$0xff] %v1642
        %s1653 = sand.u32 %s265, 1
        %s1654 = scalar_lea.sflag [#allocation4], %s1653
        %s1655 = sand.u32 %s265, 1
        %s1656 = smul.addr %s1655, 64
        %s1657 = scalar_lea.vmem [#allocation13], %s1656
        %s1658 = sand.u32 %s291, 1
        %s1659 = scalar_lea.sflag [#allocation15], %s1658
        %s1660 = sand.u32 %s291, 1
        %s1661 = smul.addr %s1660, 64
        %s1662 = scalar_lea.vmem [#allocation14], %s1661
        // Predicated region
        $region85: #{tpu_custom_call.1} parent=59 // pred_check
          %p1663 = pneg %p275
        $region86: #{tpu_custom_call.1} parent=59 // pred_check_branch
          %1665 = sbr.rel (%p1663) target = $region88
        $region87: #{tpu_custom_call.1} parent=59 // pred_region
          %s1666 = smul.u32 8, %s37
          %s1667 = ssub.s32 18, %s1666
          %p1668 = scmp.lt.s32.totalorder %s1667, 8
          %s1669 = scalar_select %p1668, %s1667, 8
          %s1670 = smul.u32 128, %s1669
          %s1672 = ssub.s32 1024, %s1670
          %1673 = vsyncadd %s1654, %s1672
          %p1674 = scmp.ne.s32.totalorder 0, %s1670
          %s1675 = smul.addr %s1666, 128
          %s1676 = scalar_lea.hbm %s10, %s1675
          %s1677 = smul.u32 8, %s1669
          %s1678 = sshll.u32 %s1657, 4
          %s1679 = int_to_ptr.vmem [resolvable:$true] %s1678
          %s1680 = sshll.u32 %s1677, 4
          %1684 = dma.vmem_to_hbm [thread:$0]  (%p1674), %s1679, %s1680, %s1676, %s1654, 128, 128, 8
        $region88: #{tpu_custom_call.1} parent=59 // pred_fallthru
          _
        // Predicated region
        $region89: #{tpu_custom_call.1} parent=59 // pred_check
          %p1685 = pneg %p301
        $region90: #{tpu_custom_call.1} parent=59 // pred_check_branch
          %1687 = sbr.rel (%p1685) target = $region92
        $region91: #{tpu_custom_call.1} parent=59 // pred_region
          %s1688 = smul.u32 8, %s37
          %s1689 = ssub.s32 18, %s1688
          %p1690 = scmp.lt.s32.totalorder %s1689, 8
          %s1691 = scalar_select %p1690, %s1689, 8
          %s1692 = smul.u32 128, %s1691
          %s1694 = ssub.s32 1024, %s1692
          %1695 = vsyncadd %s1659, %s1694
          %p1696 = scmp.ne.s32.totalorder 0, %s1692
          %s1697 = smul.addr %s1688, 128
          %s1698 = scalar_lea.hbm %s11, %s1697
          %s1699 = smul.u32 8, %s1691
          %s1700 = sshll.u32 %s1662, 4
          %s1701 = int_to_ptr.vmem [resolvable:$true] %s1700
          %s1702 = sshll.u32 %s1699, 4
          %1706 = dma.vmem_to_hbm [thread:$0]  (%p1696), %s1701, %s1702, %s1698, %s1659, 128, 128, 8
        $region92: #{tpu_custom_call.1} parent=59 // pred_fallthru
          _
      $region60: #{tpu_custom_call.1} parent=5 // pred_fallthru
        _
      %p1707 = scmp.le.s32.totalorder 2, %s32
      // Predicated region
      $region93: #{tpu_custom_call.1} parent=5 // pred_check
        %p1708 = pneg %p1707
      $region94: #{tpu_custom_call.1} parent=5 // pred_check_branch
        %1710 = sbr.rel (%p1708) target = $region96
      $region95: #{tpu_custom_call.1} parent=5 // pred_region
        %s1711 = ssub.s32 %s32, 2
        // Predicated region
        $region97: #{tpu_custom_call.1} parent=95 // pred_check
          %p1712 = pneg %p281
        $region98: #{tpu_custom_call.1} parent=95 // pred_check_branch
          %1714 = sbr.rel (%p1712) target = $region100
        $region99: #{tpu_custom_call.1} parent=95 // pred_region
          %s1715 = sand.u32 %s266, 1
          %s1716 = scalar_lea.sflag [#allocation4], %s1715
          %s1717 = sand.u32 %s266, 1
          %s1718 = smul.addr %s1717, 64
          %s1719 = scalar_lea.vmem [#allocation13], %s1718
          %1720 = dma.done %s1716, 1024
        $region100: #{tpu_custom_call.1} parent=95 // pred_fallthru
          _
        // Predicated region
        $region101: #{tpu_custom_call.1} parent=95 // pred_check
          %p1721 = pneg %p307
        $region102: #{tpu_custom_call.1} parent=95 // pred_check_branch
          %1723 = sbr.rel (%p1721) target = $region104
        $region103: #{tpu_custom_call.1} parent=95 // pred_region
          %s1724 = sand.u32 %s292, 1
          %s1725 = scalar_lea.sflag [#allocation15], %s1724
          %s1726 = sand.u32 %s292, 1
          %s1727 = smul.addr %s1726, 64
          %s1728 = scalar_lea.vmem [#allocation14], %s1727
          %1729 = dma.done %s1725, 1024
        $region104: #{tpu_custom_call.1} parent=95 // pred_fallthru
          _
      $region96: #{tpu_custom_call.1} parent=5 // pred_fallthru
        _
    $region6: #{tpu_custom_call.1} parent=1 // loop_footer
      %s36 = sadd.s32 1, %s32
    $region7: #{tpu_custom_call.1} parent=1 // loop_footer_branch
      %31 = sbr.rel target = $region3
    $region8: #{tpu_custom_call.1} parent=1 // loop_exit
      _
    %1730 = vsyncpa [#allocation3], 1
    %s1731 = scalar_lea.sflag [#allocation3], 1
    %1732 = vsyncpa %s1731, 1
    %1733 = vsyncpa [#allocation6], 1
    %s1734 = scalar_lea.sflag [#allocation6], 1
    %1735 = vsyncpa %s1734, 1
    %1736 = vsyncpa [#allocation9], 1
    %1737 = vsyncpa [#allocation12], 1
    %1738 = vsyncpa [#allocation4], 1
    %s1739 = scalar_lea.sflag [#allocation4], 1
    %1740 = vsyncpa %s1739, 1
    %1741 = vsyncpa [#allocation15], 1
    %s1742 = scalar_lea.sflag [#allocation15], 1
    %1743 = vsyncpa %s1742, 1

</llo_original>
